<compile_context>
chip_gen: v7x
topology: tpu7x:2x2x1
jax: 0.10.0
libtpu: 0.0.40
codegen_flags: <defaults>
</compile_context>

<pallas_src>
import jax
import jax.numpy as jnp
from jax import lax
from jax.experimental import pallas as pl
from jax.experimental.pallas import tpu as pltpu


def _bilstm_ias_kernel(
    emb_ref,       # (Bb, T, E)   bf16   embedded inputs (batch-major)
    len_ref,       # (Bb, 1, 1)   i32    sequence lengths
    wih_f_ref,     # (E, 4H)      bf16   forward input weights
    whh_f_ref,     # (H, 4H)      bf16   forward recurrent weights
    b_f_ref,       # (1, 4H)      f32    b_ih + b_hh (forward)
    wih_b_ref,     # (E, 4H)      bf16
    whh_b_ref,     # (H, 4H)      bf16
    b_b_ref,       # (1, 4H)      f32    (backward)
    wslot_ref,     # (2H, Sp)     bf16   slot head [fwd half ; bwd half]
    bslot_ref,     # (1, Sp)      f32
    wint_ref,      # (2H, Ip)     bf16   intent head [fwd half ; bwd half]
    bint_ref,      # (1, Ip)      f32
    slots_ref,     # (Bb, T, Sp)  f32    out
    intent_ref,    # (Bb, 1, Ip)  f32    out
    outf_ref,      # (Bb, T, H)   f32    scratch: masked forward outputs
    outb_ref,      # (Bb, T, H)   f32    scratch: masked backward outputs
):
    Bb, T, E = emb_ref.shape
    H = whh_f_ref.shape[0]
    BT = Bb * T
    f32 = jnp.float32
    cdt = whh_f_ref.dtype              # MXU operand dtype (bf16)

    lens = len_ref[...].reshape(Bb, 1)  # (Bb, 1) int32

    # ---- hoisted invariants: loaded once, stay in vregs across the loop -----
    whh_f = whh_f_ref[...]
    whh_b = whh_b_ref[...]

    # ---- batched input projections (+ bias), OFF the recurrent critical path
    x2 = emb_ref[...].reshape(BT, E)                           # bf16
    xg_f = (jnp.dot(x2, wih_f_ref[...], preferred_element_type=f32)
            + b_f_ref[...]).reshape(Bb, T, 4 * H)
    xg_b = (jnp.dot(x2, wih_b_ref[...], preferred_element_type=f32)
            + b_b_ref[...]).reshape(Bb, T, 4 * H)

    def lstm_step(xg_t, h, c, whh):
        # one MXU push per step; full-width sigmoid/tanh on the EUP, then
        # 32-lane gate extraction (PyTorch gate order: i, f, g, o).
        gates = xg_t + jnp.dot(h.astype(cdt), whh, preferred_element_type=f32)
        sg = jax.nn.sigmoid(gates)
        tg = jnp.tanh(gates)
        i = sg[:, 0 * H:1 * H]
        f = sg[:, 1 * H:2 * H]
        g = tg[:, 2 * H:3 * H]
        o = sg[:, 3 * H:4 * H]
        c_new = f * c + i * g
        h_new = o * jnp.tanh(c_new)
        return h_new, c_new

    z = jnp.zeros((Bb, H), f32)
    hf, cf = z, z
    hb, cb = z, z

    # ---- fused, fully-unrolled time loop: fwd consumes t, bwd consumes T-1-t
    for s in range(T):
        t_f = s
        t_b = T - 1 - s

        # forward direction at time t_f
        hf_new, cf_new = lstm_step(xg_f[:, t_f, :], hf, cf, whh_f)
        vf = lens > t_f                                        # (Bb, 1) bool
        hf = jnp.where(vf, hf_new, hf)
        cf = jnp.where(vf, cf_new, cf)
        outf_ref[:, t_f:t_f + 1, :] = jnp.where(vf, hf_new, 0.0)[:, None, :]

        # backward direction at time t_b (independent chain -> overlaps)
        hb_new, cb_new = lstm_step(xg_b[:, t_b, :], hb, cb, whh_b)
        vb = lens > t_b
        hb = jnp.where(vb, hb_new, hb)
        cb = jnp.where(vb, cb_new, cb)
        outb_ref[:, t_b:t_b + 1, :] = jnp.where(vb, hb_new, 0.0)[:, None, :]

    # ---- slot head: ONE batched, lane-dense (BT, 2H) @ (2H, Sp) matmul ------
    outf = outf_ref[...].reshape(BT, H)
    outb = outb_ref[...].reshape(BT, H)
    out_cat = jnp.concatenate([outf, outb], axis=-1).astype(cdt)   # (BT, 2H)
    slots = (jnp.dot(out_cat, wslot_ref[...], preferred_element_type=f32)
             + bslot_ref[...])
    slots_ref[...] = slots.reshape(Bb, T, slots.shape[-1])

    # ---- intent head: cat(last_hidden[-2], last_hidden[-1]) @ W_int ---------
    h_cat = jnp.concatenate([hf, hb], axis=-1).astype(cdt)         # (Bb, 2H)
    intent = (jnp.dot(h_cat, wint_ref[...], preferred_element_type=f32)
              + bint_ref[...])
    intent_ref[...] = intent.reshape(Bb, 1, intent.shape[-1])


def bimodel_ias_forward(params, utterance, seq_lengths, *,
                        b_block=1, mxu_dtype=jnp.bfloat16):
    """Pallas-backed forward pass. Returns (slots (B,S,T), intent (B,I))."""
    B, T = utterance.shape
    E = params["embedding"].shape[1]
    H = params["whh_f"].shape[0]
    S = params["wslot_f"].shape[1]
    I = params["wint_f"].shape[1]
    S_pad = pl.cdiv(S, 128) * 128
    I_pad = pl.cdiv(I, 128) * 128

    assert B % b_block == 0
    GB = B // b_block

    # Embedding lookup (gather) is glue; the hot path lives in the kernel.
    emb = jnp.take(params["embedding"], utterance, axis=0).astype(mxu_dtype)
    lens3 = seq_lengths.astype(jnp.int32).reshape(B, 1, 1)

    def pad_lanes(w, n):
        return jnp.pad(w, ((0, 0), (0, n - w.shape[1])))

    # MXU operands in bf16 (f32 accumulation); biases stay f32.
    wih_f = params["wih_f"].astype(mxu_dtype)
    whh_f = params["whh_f"].astype(mxu_dtype)
    wih_b = params["wih_b"].astype(mxu_dtype)
    whh_b = params["whh_b"].astype(mxu_dtype)
    b_f = params["b_f"].astype(jnp.float32)
    b_b = params["b_b"].astype(jnp.float32)
    # Head weights: stack forward / backward halves along the contraction dim
    # (== nn.Linear(2H, out) layout), then lane-pad to a multiple of 128 so the
    # head is a single dense matmul with unmasked vst output stores.
    wslot = pad_lanes(
        jnp.concatenate([params["wslot_f"], params["wslot_b"]], axis=0),
        S_pad).astype(mxu_dtype)                                 # (2H, S_pad)
    bslot = pad_lanes(params["bslot"], S_pad).astype(jnp.float32)
    wint = pad_lanes(
        jnp.concatenate([params["wint_f"], params["wint_b"]], axis=0),
        I_pad).astype(mxu_dtype)                                 # (2H, I_pad)
    bint = pad_lanes(params["bint"], I_pad).astype(jnp.float32)

    def full(shape):
        return pl.BlockSpec(shape, lambda b, _n=len(shape): (0,) * _n)

    def batched(shape):
        return pl.BlockSpec(shape, lambda b, _n=len(shape): (b,) + (0,) * (_n - 1))

    slots_pad, intent_pad = pl.pallas_call(
        _bilstm_ias_kernel,
        grid=(GB,),
        out_shape=(jax.ShapeDtypeStruct((B, T, S_pad), jnp.float32),
                   jax.ShapeDtypeStruct((B, 1, I_pad), jnp.float32)),
        in_specs=[
            batched((b_block, T, E)),        # embedded inputs
            batched((b_block, 1, 1)),        # sequence lengths
            full((E, 4 * H)), full((H, 4 * H)), full((1, 4 * H)),   # forward
            full((E, 4 * H)), full((H, 4 * H)), full((1, 4 * H)),   # backward
            full((2 * H, S_pad)), full((1, S_pad)),                 # slot head
            full((2 * H, I_pad)), full((1, I_pad)),                 # intent head
        ],
        out_specs=(batched((b_block, T, S_pad)),
                   batched((b_block, 1, I_pad))),
        scratch_shapes=[
            pltpu.VMEM((b_block, T, H), jnp.float32),   # forward outputs
            pltpu.VMEM((b_block, T, H), jnp.float32),   # backward outputs
        ],
        # batch grid is embarrassingly parallel -> v7x's 2 TCs split it;
        # on v5e / v6e it runs as a short sequential loop.
        compiler_params=pltpu.CompilerParams(
            dimension_semantics=("parallel",)),
    )(emb, lens3,
      wih_f, whh_f, b_f, wih_b, whh_b, b_b,
      wslot, bslot, wint, bint)

    slots = jnp.transpose(slots_pad[:, :, :S], (0, 2, 1))   # (B, out_slot, T)
    intent = intent_pad[:, 0, :I]                            # (B, out_int)
    return slots, intent


def reference_forward(params, utterance, seq_lengths):
    """Pure-JAX float32 reference mirroring the PyTorch module semantics."""
    emb = jnp.take(params["embedding"], utterance, axis=0)  # (B, T, E)
    B, T, _ = emb.shape
    H = params["whh_f"].shape[0]
    lens = seq_lengths.astype(jnp.int32)

    def cell(x_t, h, c, wih, whh, b):
        gates = x_t @ wih + h @ whh + b
        i = jax.nn.sigmoid(gates[:, :H])
        f = jax.nn.sigmoid(gates[:, H:2 * H])
        g = jnp.tanh(gates[:, 2 * H:3 * H])
        o = jax.nn.sigmoid(gates[:, 3 * H:])
        c_new = f * c + i * g
        return o * jnp.tanh(c_new), c_new

    def make_step(wih, whh, b):
        def step(carry, t):
            h, c = carry
            x_t = emb[:, t, :]
            h_new, c_new = cell(x_t, h, c, wih, whh, b)
            valid = (t < lens)[:, None]
            h = jnp.where(valid, h_new, h)
            c = jnp.where(valid, c_new, c)
            out = jnp.where(valid, h_new, 0.0)
            return (h, c), out
        return step

    z = jnp.zeros((B, H), jnp.float32)
    (hf, _), outs_f = lax.scan(
        make_step(params["wih_f"], params["whh_f"], params["b_f"]),
        (z, z), jnp.arange(T))
    (hb, _), outs_b_rev = lax.scan(
        make_step(params["wih_b"], params["whh_b"], params["b_b"]),
        (z, z), jnp.arange(T - 1, -1, -1))
    outs_b = outs_b_rev[::-1]                      # back to time order (T,B,H)

    slots = (outs_f @ params["wslot_f"] + outs_b @ params["wslot_b"]
             + params["bslot"])                    # (T, B, S)
    slots = jnp.transpose(slots, (1, 2, 0))        # (B, S, T)
    intent = hf @ params["wint_f"] + hb @ params["wint_b"] + params["bint"]
    return slots, intent


if __name__ == "__main__":
    vocab_len, emb_size, hid_size = 50, 32, 32
    out_slot, out_int = 12, 6
    B, T = 2, 8
    pad_index = 0

    key = jax.random.PRNGKey(0)
    keys = jax.random.split(key, 16)

    def u(k, shape, scale):
        return jax.random.uniform(k, shape, jnp.float32, -scale, scale)

    kH = 1.0 / float(jnp.sqrt(hid_size))
    kL = 1.0 / float(jnp.sqrt(2 * hid_size))

    emb_table = 0.5 * jax.random.normal(keys[0], (vocab_len, emb_size),
                                        jnp.float32)
    emb_table = emb_table.at[pad_index].set(0.0)  # padding_idx row = 0

    params = dict(
        embedding=emb_table,
        wih_f=u(keys[1], (emb_size, 4 * hid_size), kH),
        whh_f=u(keys[2], (hid_size, 4 * hid_size), kH),
        b_f=u(keys[3], (1, 4 * hid_size), kH) + u(keys[4], (1, 4 * hid_size), kH),
        wih_b=u(keys[5], (emb_size, 4 * hid_size), kH),
        whh_b=u(keys[6], (hid_size, 4 * hid_size), kH),
        b_b=u(keys[7], (1, 4 * hid_size), kH) + u(keys[8], (1, 4 * hid_size), kH),
        wslot_f=u(keys[9], (hid_size, out_slot), kL),
        wslot_b=u(keys[10], (hid_size, out_slot), kL),
        bslot=u(keys[11], (1, out_slot), kL),
        wint_f=u(keys[12], (hid_size, out_int), kL),
        wint_b=u(keys[13], (hid_size, out_int), kL),
        bint=u(keys[14], (1, out_int), kL),
    )

    utterance = jax.random.randint(keys[15], (B, T), 1, vocab_len)
    seq_lengths = jnp.array([T, 5], dtype=jnp.int32)  # max length == T
    pos = jnp.arange(T)[None, :]
    utterance = jnp.where(pos < seq_lengths[:, None], utterance, pad_index)

    slots, intent = bimodel_ias_forward(params, utterance, seq_lengths)
    slots, intent = jax.block_until_ready((slots, intent))

    slots_ref, intent_ref = reference_forward(params, utterance, seq_lengths)
    assert slots.shape == (B, out_slot, T)
    assert intent.shape == (B, out_int)
    # Tolerance accounts for bf16 MXU operands (f32 accumulate) in the kernel
    # vs the pure-float32 reference; observed differences are ~1e-3.
    assert jnp.allclose(slots, slots_ref, atol=2e-2, rtol=2e-2)
    assert jnp.allclose(intent, intent_ref, atol=2e-2, rtol=2e-2)

    print("KERNEL_OK")
</pallas_src>

<mosaic_0001>
module attributes {stable_mosaic.version = 11 : i64} {
  func.func @_bilstm_ias_kernel(%arg0: i32, %arg1: memref<1x8x32xbf16, #tpu.memory_space<vmem>>, %arg2: memref<1x1x1xi32, #tpu.memory_space<vmem>>, %arg3: memref<32x128xbf16, #tpu.memory_space<vmem>>, %arg4: memref<32x128xbf16, #tpu.memory_space<vmem>>, %arg5: memref<1x128xf32, #tpu.memory_space<vmem>>, %arg6: memref<32x128xbf16, #tpu.memory_space<vmem>>, %arg7: memref<32x128xbf16, #tpu.memory_space<vmem>>, %arg8: memref<1x128xf32, #tpu.memory_space<vmem>>, %arg9: memref<64x128xbf16, #tpu.memory_space<vmem>>, %arg10: memref<1x128xf32, #tpu.memory_space<vmem>>, %arg11: memref<64x128xbf16, #tpu.memory_space<vmem>>, %arg12: memref<1x128xf32, #tpu.memory_space<vmem>>, %arg13: memref<1x8x128xf32, #tpu.memory_space<vmem>>, %arg14: memref<1x1x128xf32, #tpu.memory_space<vmem>>, %arg15: memref<1x8x32xf32, #tpu.memory_space<vmem>>, %arg16: memref<1x8x32xf32, #tpu.memory_space<vmem>>) attributes {dimension_semantics = [#tpu.dimension_semantics<parallel>], iteration_bounds = array<i64: 2>, scalar_prefetch = 0 : i64, scratch_operands = 2 : i64, tpu.core_type = #tpu.core_type<tc>, window_params = [{transform_indices = @transform_0, window_bounds = array<i64: 1, 8, 32>}, {transform_indices = @transform_1, window_bounds = array<i64: 1, 1, 1>}, {pipeline_mode = #tpu.pipeline_mode<synchronous>, transform_indices = @transform_2, window_bounds = array<i64: 32, 128>}, {pipeline_mode = #tpu.pipeline_mode<synchronous>, transform_indices = @transform_3, window_bounds = array<i64: 32, 128>}, {pipeline_mode = #tpu.pipeline_mode<synchronous>, transform_indices = @transform_4, window_bounds = array<i64: 1, 128>}, {pipeline_mode = #tpu.pipeline_mode<synchronous>, transform_indices = @transform_5, window_bounds = array<i64: 32, 128>}, {pipeline_mode = #tpu.pipeline_mode<synchronous>, transform_indices = @transform_6, window_bounds = array<i64: 32, 128>}, {pipeline_mode = #tpu.pipeline_mode<synchronous>, transform_indices = @transform_7, window_bounds = array<i64: 1, 128>}, {pipeline_mode = #tpu.pipeline_mode<synchronous>, transform_indices = @transform_8, window_bounds = array<i64: 64, 128>}, {pipeline_mode = #tpu.pipeline_mode<synchronous>, transform_indices = @transform_9, window_bounds = array<i64: 1, 128>}, {pipeline_mode = #tpu.pipeline_mode<synchronous>, transform_indices = @transform_10, window_bounds = array<i64: 64, 128>}, {pipeline_mode = #tpu.pipeline_mode<synchronous>, transform_indices = @transform_11, window_bounds = array<i64: 1, 128>}, {transform_indices = @transform_12, window_bounds = array<i64: 1, 8, 128>}, {transform_indices = @transform_13, window_bounds = array<i64: 1, 1, 128>}]} {
    %c0 = arith.constant 0 : index
    %c0_0 = arith.constant 0 : index
    %c0_1 = arith.constant 0 : index
    %0 = vector.load %arg2[%c0, %c0_0, %c0_1] : memref<1x1x1xi32, #tpu.memory_space<vmem>>, vector<1x1x1xi32>
    %1 = vector.shape_cast %0 : vector<1x1x1xi32> to vector<1x1xi32>
    %c0_2 = arith.constant 0 : index
    %c0_3 = arith.constant 0 : index
    %2 = vector.load %arg4[%c0_2, %c0_3] : memref<32x128xbf16, #tpu.memory_space<vmem>>, vector<32x128xbf16>
    %c0_4 = arith.constant 0 : index
    %c0_5 = arith.constant 0 : index
    %3 = vector.load %arg7[%c0_4, %c0_5] : memref<32x128xbf16, #tpu.memory_space<vmem>>, vector<32x128xbf16>
    %c0_6 = arith.constant 0 : index
    %c0_7 = arith.constant 0 : index
    %c0_8 = arith.constant 0 : index
    %4 = vector.load %arg1[%c0_6, %c0_7, %c0_8] : memref<1x8x32xbf16, #tpu.memory_space<vmem>>, vector<1x8x32xbf16>
    %5 = vector.shape_cast %4 : vector<1x8x32xbf16> to vector<8x32xbf16>
    %c0_9 = arith.constant 0 : index
    %c0_10 = arith.constant 0 : index
    %6 = vector.load %arg3[%c0_9, %c0_10] : memref<32x128xbf16, #tpu.memory_space<vmem>>, vector<32x128xbf16>
    %cst = arith.constant dense<0.000000e+00> : vector<8x128xf32>
    %7 = tpu.matmul %5, %6, %cst {dimension_numbers = #tpu.dot_dimension_numbers<[1], [0], [0], [1], [0, 0, 1, 1], [], []>} : vector<8x32xbf16>, vector<32x128xbf16>, vector<8x128xf32> -> vector<8x128xf32>
    %c0_11 = arith.constant 0 : index
    %c0_12 = arith.constant 0 : index
    %8 = vector.load %arg5[%c0_11, %c0_12] : memref<1x128xf32, #tpu.memory_space<vmem>>, vector<1x128xf32>
    %9 = vector.broadcast %8 : vector<1x128xf32> to vector<8x128xf32>
    %10 = arith.addf %7, %9 : vector<8x128xf32>
    %11 = vector.shape_cast %10 : vector<8x128xf32> to vector<1x8x128xf32>
    %c0_13 = arith.constant 0 : index
    %c0_14 = arith.constant 0 : index
    %12 = vector.load %arg6[%c0_13, %c0_14] : memref<32x128xbf16, #tpu.memory_space<vmem>>, vector<32x128xbf16>
    %cst_15 = arith.constant dense<0.000000e+00> : vector<8x128xf32>
    %13 = tpu.matmul %5, %12, %cst_15 {dimension_numbers = #tpu.dot_dimension_numbers<[1], [0], [0], [1], [0, 0, 1, 1], [], []>} : vector<8x32xbf16>, vector<32x128xbf16>, vector<8x128xf32> -> vector<8x128xf32>
    %c0_16 = arith.constant 0 : index
    %c0_17 = arith.constant 0 : index
    %14 = vector.load %arg8[%c0_16, %c0_17] : memref<1x128xf32, #tpu.memory_space<vmem>>, vector<1x128xf32>
    %15 = vector.broadcast %14 : vector<1x128xf32> to vector<8x128xf32>
    %16 = arith.addf %13, %15 : vector<8x128xf32>
    %17 = vector.shape_cast %16 : vector<8x128xf32> to vector<1x8x128xf32>
    %cst_18 = arith.constant 0.000000e+00 : f32
    %18 = vector.broadcast %cst_18 : f32 to vector<1x32xf32>
    %19 = vector.extract_strided_slice %11 {offsets = [0, 0, 0], sizes = [1, 1, 128], strides = [1, 1, 1]} : vector<1x8x128xf32> to vector<1x1x128xf32>
    %20 = vector.shape_cast %19 : vector<1x1x128xf32> to vector<1x128xf32>
    %21 = arith.truncf %18 : vector<1x32xf32> to vector<1x32xbf16>
    %cst_19 = arith.constant dense<0.000000e+00> : vector<1x128xf32>
    %22 = tpu.matmul %21, %2, %cst_19 {dimension_numbers = #tpu.dot_dimension_numbers<[1], [0], [0], [1], [0, 0, 1, 1], [], []>} : vector<1x32xbf16>, vector<32x128xbf16>, vector<1x128xf32> -> vector<1x128xf32>
    %23 = arith.addf %20, %22 : vector<1x128xf32>
    %24 = arith.negf %23 : vector<1x128xf32>
    %25 = math.exp %24 : vector<1x128xf32>
    %cst_20 = arith.constant 1.000000e+00 : f32
    %26 = vector.broadcast %cst_20 : f32 to vector<1x128xf32>
    %27 = arith.addf %26, %25 : vector<1x128xf32>
    %28 = arith.divf %26, %27 : vector<1x128xf32>
    %29 = math.tanh %23 : vector<1x128xf32>
    %30 = vector.extract_strided_slice %28 {offsets = [0, 0], sizes = [1, 32], strides = [1, 1]} : vector<1x128xf32> to vector<1x32xf32>
    %31 = vector.extract_strided_slice %28 {offsets = [0, 32], sizes = [1, 32], strides = [1, 1]} : vector<1x128xf32> to vector<1x32xf32>
    %32 = vector.extract_strided_slice %29 {offsets = [0, 64], sizes = [1, 32], strides = [1, 1]} : vector<1x128xf32> to vector<1x32xf32>
    %33 = vector.extract_strided_slice %28 {offsets = [0, 96], sizes = [1, 32], strides = [1, 1]} : vector<1x128xf32> to vector<1x32xf32>
    %34 = arith.mulf %31, %18 : vector<1x32xf32>
    %35 = arith.mulf %30, %32 : vector<1x32xf32>
    %36 = arith.addf %34, %35 : vector<1x32xf32>
    %37 = math.tanh %36 : vector<1x32xf32>
    %38 = arith.mulf %33, %37 : vector<1x32xf32>
    %c0_i32 = arith.constant 0 : i32
    %39 = vector.broadcast %c0_i32 : i32 to vector<1x1xi32>
    %40 = arith.cmpi sgt, %1, %39 : vector<1x1xi32>
    %41 = vector.shape_cast %40 : vector<1x1xi1> to vector<1x1xi1>
    %42 = vector.broadcast %41 : vector<1x1xi1> to vector<1x32xi1>
    %43 = arith.select %42, %38, %18 : vector<1x32xi1>, vector<1x32xf32>
    %44 = vector.shape_cast %40 : vector<1x1xi1> to vector<1x1xi1>
    %45 = vector.broadcast %44 : vector<1x1xi1> to vector<1x32xi1>
    %46 = arith.select %45, %36, %18 : vector<1x32xi1>, vector<1x32xf32>
    %cst_21 = arith.constant 0.000000e+00 : f32
    %47 = vector.shape_cast %40 : vector<1x1xi1> to vector<1x1xi1>
    %48 = vector.broadcast %47 : vector<1x1xi1> to vector<1x32xi1>
    %49 = vector.broadcast %cst_21 : f32 to vector<1x32xf32>
    %50 = arith.select %48, %38, %49 : vector<1x32xi1>, vector<1x32xf32>
    %51 = vector.shape_cast %50 : vector<1x32xf32> to vector<1x1x32xf32>
    %c0_22 = arith.constant 0 : index
    %c0_23 = arith.constant 0 : index
    %c0_24 = arith.constant 0 : index
    %52 = vector.load %arg15[%c0_22, %c0_23, %c0_24] : memref<1x8x32xf32, #tpu.memory_space<vmem>>, vector<1x1x32xf32>
    tpu.vector_store %arg15[%c0_22, %c0_23, %c0_24], %51 {strides = array<i32>} : memref<1x8x32xf32, #tpu.memory_space<vmem>>, vector<1x1x32xf32>,
    %53 = vector.extract_strided_slice %17 {offsets = [0, 7, 0], sizes = [1, 1, 128], strides = [1, 1, 1]} : vector<1x8x128xf32> to vector<1x1x128xf32>
    %54 = vector.shape_cast %53 : vector<1x1x128xf32> to vector<1x128xf32>
    %55 = arith.truncf %18 : vector<1x32xf32> to vector<1x32xbf16>
    %cst_25 = arith.constant dense<0.000000e+00> : vector<1x128xf32>
    %56 = tpu.matmul %55, %3, %cst_25 {dimension_numbers = #tpu.dot_dimension_numbers<[1], [0], [0], [1], [0, 0, 1, 1], [], []>} : vector<1x32xbf16>, vector<32x128xbf16>, vector<1x128xf32> -> vector<1x128xf32>
    %57 = arith.addf %54, %56 : vector<1x128xf32>
    %58 = arith.negf %57 : vector<1x128xf32>
    %59 = math.exp %58 : vector<1x128xf32>
    %cst_26 = arith.constant 1.000000e+00 : f32
    %60 = vector.broadcast %cst_26 : f32 to vector<1x128xf32>
    %61 = arith.addf %60, %59 : vector<1x128xf32>
    %62 = arith.divf %60, %61 : vector<1x128xf32>
    %63 = math.tanh %57 : vector<1x128xf32>
    %64 = vector.extract_strided_slice %62 {offsets = [0, 0], sizes = [1, 32], strides = [1, 1]} : vector<1x128xf32> to vector<1x32xf32>
    %65 = vector.extract_strided_slice %62 {offsets = [0, 32], sizes = [1, 32], strides = [1, 1]} : vector<1x128xf32> to vector<1x32xf32>
    %66 = vector.extract_strided_slice %63 {offsets = [0, 64], sizes = [1, 32], strides = [1, 1]} : vector<1x128xf32> to vector<1x32xf32>
    %67 = vector.extract_strided_slice %62 {offsets = [0, 96], sizes = [1, 32], strides = [1, 1]} : vector<1x128xf32> to vector<1x32xf32>
    %68 = arith.mulf %65, %18 : vector<1x32xf32>
    %69 = arith.mulf %64, %66 : vector<1x32xf32>
    %70 = arith.addf %68, %69 : vector<1x32xf32>
    %71 = math.tanh %70 : vector<1x32xf32>
    %72 = arith.mulf %67, %71 : vector<1x32xf32>
    %c7_i32 = arith.constant 7 : i32
    %73 = vector.broadcast %c7_i32 : i32 to vector<1x1xi32>
    %74 = arith.cmpi sgt, %1, %73 : vector<1x1xi32>
    %75 = vector.shape_cast %74 : vector<1x1xi1> to vector<1x1xi1>
    %76 = vector.broadcast %75 : vector<1x1xi1> to vector<1x32xi1>
    %77 = arith.select %76, %72, %18 : vector<1x32xi1>, vector<1x32xf32>
    %78 = vector.shape_cast %74 : vector<1x1xi1> to vector<1x1xi1>
    %79 = vector.broadcast %78 : vector<1x1xi1> to vector<1x32xi1>
    %80 = arith.select %79, %70, %18 : vector<1x32xi1>, vector<1x32xf32>
    %cst_27 = arith.constant 0.000000e+00 : f32
    %81 = vector.shape_cast %74 : vector<1x1xi1> to vector<1x1xi1>
    %82 = vector.broadcast %81 : vector<1x1xi1> to vector<1x32xi1>
    %83 = vector.broadcast %cst_27 : f32 to vector<1x32xf32>
    %84 = arith.select %82, %72, %83 : vector<1x32xi1>, vector<1x32xf32>
    %85 = vector.shape_cast %84 : vector<1x32xf32> to vector<1x1x32xf32>
    %c0_28 = arith.constant 0 : index
    %c7 = arith.constant 7 : index
    %c0_29 = arith.constant 0 : index
    %86 = vector.load %arg16[%c0_28, %c7, %c0_29] : memref<1x8x32xf32, #tpu.memory_space<vmem>>, vector<1x1x32xf32>
    tpu.vector_store %arg16[%c0_28, %c7, %c0_29], %85 {strides = array<i32>} : memref<1x8x32xf32, #tpu.memory_space<vmem>>, vector<1x1x32xf32>,
    %87 = vector.extract_strided_slice %11 {offsets = [0, 1, 0], sizes = [1, 1, 128], strides = [1, 1, 1]} : vector<1x8x128xf32> to vector<1x1x128xf32>
    %88 = vector.shape_cast %87 : vector<1x1x128xf32> to vector<1x128xf32>
    %89 = arith.truncf %43 : vector<1x32xf32> to vector<1x32xbf16>
    %cst_30 = arith.constant dense<0.000000e+00> : vector<1x128xf32>
    %90 = tpu.matmul %89, %2, %cst_30 {dimension_numbers = #tpu.dot_dimension_numbers<[1], [0], [0], [1], [0, 0, 1, 1], [], []>} : vector<1x32xbf16>, vector<32x128xbf16>, vector<1x128xf32> -> vector<1x128xf32>
    %91 = arith.addf %88, %90 : vector<1x128xf32>
    %92 = arith.negf %91 : vector<1x128xf32>
    %93 = math.exp %92 : vector<1x128xf32>
    %cst_31 = arith.constant 1.000000e+00 : f32
    %94 = vector.broadcast %cst_31 : f32 to vector<1x128xf32>
    %95 = arith.addf %94, %93 : vector<1x128xf32>
    %96 = arith.divf %94, %95 : vector<1x128xf32>
    %97 = math.tanh %91 : vector<1x128xf32>
    %98 = vector.extract_strided_slice %96 {offsets = [0, 0], sizes = [1, 32], strides = [1, 1]} : vector<1x128xf32> to vector<1x32xf32>
    %99 = vector.extract_strided_slice %96 {offsets = [0, 32], sizes = [1, 32], strides = [1, 1]} : vector<1x128xf32> to vector<1x32xf32>
    %100 = vector.extract_strided_slice %97 {offsets = [0, 64], sizes = [1, 32], strides = [1, 1]} : vector<1x128xf32> to vector<1x32xf32>
    %101 = vector.extract_strided_slice %96 {offsets = [0, 96], sizes = [1, 32], strides = [1, 1]} : vector<1x128xf32> to vector<1x32xf32>
    %102 = arith.mulf %99, %46 : vector<1x32xf32>
    %103 = arith.mulf %98, %100 : vector<1x32xf32>
    %104 = arith.addf %102, %103 : vector<1x32xf32>
    %105 = math.tanh %104 : vector<1x32xf32>
    %106 = arith.mulf %101, %105 : vector<1x32xf32>
    %c1_i32 = arith.constant 1 : i32
    %107 = vector.broadcast %c1_i32 : i32 to vector<1x1xi32>
    %108 = arith.cmpi sgt, %1, %107 : vector<1x1xi32>
    %109 = vector.shape_cast %108 : vector<1x1xi1> to vector<1x1xi1>
    %110 = vector.broadcast %109 : vector<1x1xi1> to vector<1x32xi1>
    %111 = arith.select %110, %106, %43 : vector<1x32xi1>, vector<1x32xf32>
    %112 = vector.shape_cast %108 : vector<1x1xi1> to vector<1x1xi1>
    %113 = vector.broadcast %112 : vector<1x1xi1> to vector<1x32xi1>
    %114 = arith.select %113, %104, %46 : vector<1x32xi1>, vector<1x32xf32>
    %cst_32 = arith.constant 0.000000e+00 : f32
    %115 = vector.shape_cast %108 : vector<1x1xi1> to vector<1x1xi1>
    %116 = vector.broadcast %115 : vector<1x1xi1> to vector<1x32xi1>
    %117 = vector.broadcast %cst_32 : f32 to vector<1x32xf32>
    %118 = arith.select %116, %106, %117 : vector<1x32xi1>, vector<1x32xf32>
    %119 = vector.shape_cast %118 : vector<1x32xf32> to vector<1x1x32xf32>
    %c0_33 = arith.constant 0 : index
    %c1 = arith.constant 1 : index
    %c0_34 = arith.constant 0 : index
    %120 = vector.load %arg15[%c0_33, %c1, %c0_34] : memref<1x8x32xf32, #tpu.memory_space<vmem>>, vector<1x1x32xf32>
    tpu.vector_store %arg15[%c0_33, %c1, %c0_34], %119 {strides = array<i32>} : memref<1x8x32xf32, #tpu.memory_space<vmem>>, vector<1x1x32xf32>,
    %121 = vector.extract_strided_slice %17 {offsets = [0, 6, 0], sizes = [1, 1, 128], strides = [1, 1, 1]} : vector<1x8x128xf32> to vector<1x1x128xf32>
    %122 = vector.shape_cast %121 : vector<1x1x128xf32> to vector<1x128xf32>
    %123 = arith.truncf %77 : vector<1x32xf32> to vector<1x32xbf16>
    %cst_35 = arith.constant dense<0.000000e+00> : vector<1x128xf32>
    %124 = tpu.matmul %123, %3, %cst_35 {dimension_numbers = #tpu.dot_dimension_numbers<[1], [0], [0], [1], [0, 0, 1, 1], [], []>} : vector<1x32xbf16>, vector<32x128xbf16>, vector<1x128xf32> -> vector<1x128xf32>
    %125 = arith.addf %122, %124 : vector<1x128xf32>
    %126 = arith.negf %125 : vector<1x128xf32>
    %127 = math.exp %126 : vector<1x128xf32>
    %cst_36 = arith.constant 1.000000e+00 : f32
    %128 = vector.broadcast %cst_36 : f32 to vector<1x128xf32>
    %129 = arith.addf %128, %127 : vector<1x128xf32>
    %130 = arith.divf %128, %129 : vector<1x128xf32>
    %131 = math.tanh %125 : vector<1x128xf32>
    %132 = vector.extract_strided_slice %130 {offsets = [0, 0], sizes = [1, 32], strides = [1, 1]} : vector<1x128xf32> to vector<1x32xf32>
    %133 = vector.extract_strided_slice %130 {offsets = [0, 32], sizes = [1, 32], strides = [1, 1]} : vector<1x128xf32> to vector<1x32xf32>
    %134 = vector.extract_strided_slice %131 {offsets = [0, 64], sizes = [1, 32], strides = [1, 1]} : vector<1x128xf32> to vector<1x32xf32>
    %135 = vector.extract_strided_slice %130 {offsets = [0, 96], sizes = [1, 32], strides = [1, 1]} : vector<1x128xf32> to vector<1x32xf32>
    %136 = arith.mulf %133, %80 : vector<1x32xf32>
    %137 = arith.mulf %132, %134 : vector<1x32xf32>
    %138 = arith.addf %136, %137 : vector<1x32xf32>
    %139 = math.tanh %138 : vector<1x32xf32>
    %140 = arith.mulf %135, %139 : vector<1x32xf32>
    %c6_i32 = arith.constant 6 : i32
    %141 = vector.broadcast %c6_i32 : i32 to vector<1x1xi32>
    %142 = arith.cmpi sgt, %1, %141 : vector<1x1xi32>
    %143 = vector.shape_cast %142 : vector<1x1xi1> to vector<1x1xi1>
    %144 = vector.broadcast %143 : vector<1x1xi1> to vector<1x32xi1>
    %145 = arith.select %144, %140, %77 : vector<1x32xi1>, vector<1x32xf32>
    %146 = vector.shape_cast %142 : vector<1x1xi1> to vector<1x1xi1>
    %147 = vector.broadcast %146 : vector<1x1xi1> to vector<1x32xi1>
    %148 = arith.select %147, %138, %80 : vector<1x32xi1>, vector<1x32xf32>
    %cst_37 = arith.constant 0.000000e+00 : f32
    %149 = vector.shape_cast %142 : vector<1x1xi1> to vector<1x1xi1>
    %150 = vector.broadcast %149 : vector<1x1xi1> to vector<1x32xi1>
    %151 = vector.broadcast %cst_37 : f32 to vector<1x32xf32>
    %152 = arith.select %150, %140, %151 : vector<1x32xi1>, vector<1x32xf32>
    %153 = vector.shape_cast %152 : vector<1x32xf32> to vector<1x1x32xf32>
    %c0_38 = arith.constant 0 : index
    %c6 = arith.constant 6 : index
    %c0_39 = arith.constant 0 : index
    %154 = vector.load %arg16[%c0_38, %c6, %c0_39] : memref<1x8x32xf32, #tpu.memory_space<vmem>>, vector<1x1x32xf32>
    tpu.vector_store %arg16[%c0_38, %c6, %c0_39], %153 {strides = array<i32>} : memref<1x8x32xf32, #tpu.memory_space<vmem>>, vector<1x1x32xf32>,
    %155 = vector.extract_strided_slice %11 {offsets = [0, 2, 0], sizes = [1, 1, 128], strides = [1, 1, 1]} : vector<1x8x128xf32> to vector<1x1x128xf32>
    %156 = vector.shape_cast %155 : vector<1x1x128xf32> to vector<1x128xf32>
    %157 = arith.truncf %111 : vector<1x32xf32> to vector<1x32xbf16>
    %cst_40 = arith.constant dense<0.000000e+00> : vector<1x128xf32>
    %158 = tpu.matmul %157, %2, %cst_40 {dimension_numbers = #tpu.dot_dimension_numbers<[1], [0], [0], [1], [0, 0, 1, 1], [], []>} : vector<1x32xbf16>, vector<32x128xbf16>, vector<1x128xf32> -> vector<1x128xf32>
    %159 = arith.addf %156, %158 : vector<1x128xf32>
    %160 = arith.negf %159 : vector<1x128xf32>
    %161 = math.exp %160 : vector<1x128xf32>
    %cst_41 = arith.constant 1.000000e+00 : f32
    %162 = vector.broadcast %cst_41 : f32 to vector<1x128xf32>
    %163 = arith.addf %162, %161 : vector<1x128xf32>
    %164 = arith.divf %162, %163 : vector<1x128xf32>
    %165 = math.tanh %159 : vector<1x128xf32>
    %166 = vector.extract_strided_slice %164 {offsets = [0, 0], sizes = [1, 32], strides = [1, 1]} : vector<1x128xf32> to vector<1x32xf32>
    %167 = vector.extract_strided_slice %164 {offsets = [0, 32], sizes = [1, 32], strides = [1, 1]} : vector<1x128xf32> to vector<1x32xf32>
    %168 = vector.extract_strided_slice %165 {offsets = [0, 64], sizes = [1, 32], strides = [1, 1]} : vector<1x128xf32> to vector<1x32xf32>
    %169 = vector.extract_strided_slice %164 {offsets = [0, 96], sizes = [1, 32], strides = [1, 1]} : vector<1x128xf32> to vector<1x32xf32>
    %170 = arith.mulf %167, %114 : vector<1x32xf32>
    %171 = arith.mulf %166, %168 : vector<1x32xf32>
    %172 = arith.addf %170, %171 : vector<1x32xf32>
    %173 = math.tanh %172 : vector<1x32xf32>
    %174 = arith.mulf %169, %173 : vector<1x32xf32>
    %c2_i32 = arith.constant 2 : i32
    %175 = vector.broadcast %c2_i32 : i32 to vector<1x1xi32>
    %176 = arith.cmpi sgt, %1, %175 : vector<1x1xi32>
    %177 = vector.shape_cast %176 : vector<1x1xi1> to vector<1x1xi1>
    %178 = vector.broadcast %177 : vector<1x1xi1> to vector<1x32xi1>
    %179 = arith.select %178, %174, %111 : vector<1x32xi1>, vector<1x32xf32>
    %180 = vector.shape_cast %176 : vector<1x1xi1> to vector<1x1xi1>
    %181 = vector.broadcast %180 : vector<1x1xi1> to vector<1x32xi1>
    %182 = arith.select %181, %172, %114 : vector<1x32xi1>, vector<1x32xf32>
    %cst_42 = arith.constant 0.000000e+00 : f32
    %183 = vector.shape_cast %176 : vector<1x1xi1> to vector<1x1xi1>
    %184 = vector.broadcast %183 : vector<1x1xi1> to vector<1x32xi1>
    %185 = vector.broadcast %cst_42 : f32 to vector<1x32xf32>
    %186 = arith.select %184, %174, %185 : vector<1x32xi1>, vector<1x32xf32>
    %187 = vector.shape_cast %186 : vector<1x32xf32> to vector<1x1x32xf32>
    %c0_43 = arith.constant 0 : index
    %c2 = arith.constant 2 : index
    %c0_44 = arith.constant 0 : index
    %188 = vector.load %arg15[%c0_43, %c2, %c0_44] : memref<1x8x32xf32, #tpu.memory_space<vmem>>, vector<1x1x32xf32>
    tpu.vector_store %arg15[%c0_43, %c2, %c0_44], %187 {strides = array<i32>} : memref<1x8x32xf32, #tpu.memory_space<vmem>>, vector<1x1x32xf32>,
    %189 = vector.extract_strided_slice %17 {offsets = [0, 5, 0], sizes = [1, 1, 128], strides = [1, 1, 1]} : vector<1x8x128xf32> to vector<1x1x128xf32>
    %190 = vector.shape_cast %189 : vector<1x1x128xf32> to vector<1x128xf32>
    %191 = arith.truncf %145 : vector<1x32xf32> to vector<1x32xbf16>
    %cst_45 = arith.constant dense<0.000000e+00> : vector<1x128xf32>
    %192 = tpu.matmul %191, %3, %cst_45 {dimension_numbers = #tpu.dot_dimension_numbers<[1], [0], [0], [1], [0, 0, 1, 1], [], []>} : vector<1x32xbf16>, vector<32x128xbf16>, vector<1x128xf32> -> vector<1x128xf32>
    %193 = arith.addf %190, %192 : vector<1x128xf32>
    %194 = arith.negf %193 : vector<1x128xf32>
    %195 = math.exp %194 : vector<1x128xf32>
    %cst_46 = arith.constant 1.000000e+00 : f32
    %196 = vector.broadcast %cst_46 : f32 to vector<1x128xf32>
    %197 = arith.addf %196, %195 : vector<1x128xf32>
    %198 = arith.divf %196, %197 : vector<1x128xf32>
    %199 = math.tanh %193 : vector<1x128xf32>
    %200 = vector.extract_strided_slice %198 {offsets = [0, 0], sizes = [1, 32], strides = [1, 1]} : vector<1x128xf32> to vector<1x32xf32>
    %201 = vector.extract_strided_slice %198 {offsets = [0, 32], sizes = [1, 32], strides = [1, 1]} : vector<1x128xf32> to vector<1x32xf32>
    %202 = vector.extract_strided_slice %199 {offsets = [0, 64], sizes = [1, 32], strides = [1, 1]} : vector<1x128xf32> to vector<1x32xf32>
    %203 = vector.extract_strided_slice %198 {offsets = [0, 96], sizes = [1, 32], strides = [1, 1]} : vector<1x128xf32> to vector<1x32xf32>
    %204 = arith.mulf %201, %148 : vector<1x32xf32>
    %205 = arith.mulf %200, %202 : vector<1x32xf32>
    %206 = arith.addf %204, %205 : vector<1x32xf32>
    %207 = math.tanh %206 : vector<1x32xf32>
    %208 = arith.mulf %203, %207 : vector<1x32xf32>
    %c5_i32 = arith.constant 5 : i32
    %209 = vector.broadcast %c5_i32 : i32 to vector<1x1xi32>
    %210 = arith.cmpi sgt, %1, %209 : vector<1x1xi32>
    %211 = vector.shape_cast %210 : vector<1x1xi1> to vector<1x1xi1>
    %212 = vector.broadcast %211 : vector<1x1xi1> to vector<1x32xi1>
    %213 = arith.select %212, %208, %145 : vector<1x32xi1>, vector<1x32xf32>
    %214 = vector.shape_cast %210 : vector<1x1xi1> to vector<1x1xi1>
    %215 = vector.broadcast %214 : vector<1x1xi1> to vector<1x32xi1>
    %216 = arith.select %215, %206, %148 : vector<1x32xi1>, vector<1x32xf32>
    %cst_47 = arith.constant 0.000000e+00 : f32
    %217 = vector.shape_cast %210 : vector<1x1xi1> to vector<1x1xi1>
    %218 = vector.broadcast %217 : vector<1x1xi1> to vector<1x32xi1>
    %219 = vector.broadcast %cst_47 : f32 to vector<1x32xf32>
    %220 = arith.select %218, %208, %219 : vector<1x32xi1>, vector<1x32xf32>
    %221 = vector.shape_cast %220 : vector<1x32xf32> to vector<1x1x32xf32>
    %c0_48 = arith.constant 0 : index
    %c5 = arith.constant 5 : index
    %c0_49 = arith.constant 0 : index
    %222 = vector.load %arg16[%c0_48, %c5, %c0_49] : memref<1x8x32xf32, #tpu.memory_space<vmem>>, vector<1x1x32xf32>
    tpu.vector_store %arg16[%c0_48, %c5, %c0_49], %221 {strides = array<i32>} : memref<1x8x32xf32, #tpu.memory_space<vmem>>, vector<1x1x32xf32>,
    %223 = vector.extract_strided_slice %11 {offsets = [0, 3, 0], sizes = [1, 1, 128], strides = [1, 1, 1]} : vector<1x8x128xf32> to vector<1x1x128xf32>
    %224 = vector.shape_cast %223 : vector<1x1x128xf32> to vector<1x128xf32>
    %225 = arith.truncf %179 : vector<1x32xf32> to vector<1x32xbf16>
    %cst_50 = arith.constant dense<0.000000e+00> : vector<1x128xf32>
    %226 = tpu.matmul %225, %2, %cst_50 {dimension_numbers = #tpu.dot_dimension_numbers<[1], [0], [0], [1], [0, 0, 1, 1], [], []>} : vector<1x32xbf16>, vector<32x128xbf16>, vector<1x128xf32> -> vector<1x128xf32>
    %227 = arith.addf %224, %226 : vector<1x128xf32>
    %228 = arith.negf %227 : vector<1x128xf32>
    %229 = math.exp %228 : vector<1x128xf32>
    %cst_51 = arith.constant 1.000000e+00 : f32
    %230 = vector.broadcast %cst_51 : f32 to vector<1x128xf32>
    %231 = arith.addf %230, %229 : vector<1x128xf32>
    %232 = arith.divf %230, %231 : vector<1x128xf32>
    %233 = math.tanh %227 : vector<1x128xf32>
    %234 = vector.extract_strided_slice %232 {offsets = [0, 0], sizes = [1, 32], strides = [1, 1]} : vector<1x128xf32> to vector<1x32xf32>
    %235 = vector.extract_strided_slice %232 {offsets = [0, 32], sizes = [1, 32], strides = [1, 1]} : vector<1x128xf32> to vector<1x32xf32>
    %236 = vector.extract_strided_slice %233 {offsets = [0, 64], sizes = [1, 32], strides = [1, 1]} : vector<1x128xf32> to vector<1x32xf32>
    %237 = vector.extract_strided_slice %232 {offsets = [0, 96], sizes = [1, 32], strides = [1, 1]} : vector<1x128xf32> to vector<1x32xf32>
    %238 = arith.mulf %235, %182 : vector<1x32xf32>
    %239 = arith.mulf %234, %236 : vector<1x32xf32>
    %240 = arith.addf %238, %239 : vector<1x32xf32>
    %241 = math.tanh %240 : vector<1x32xf32>
    %242 = arith.mulf %237, %241 : vector<1x32xf32>
    %c3_i32 = arith.constant 3 : i32
    %243 = vector.broadcast %c3_i32 : i32 to vector<1x1xi32>
    %244 = arith.cmpi sgt, %1, %243 : vector<1x1xi32>
    %245 = vector.shape_cast %244 : vector<1x1xi1> to vector<1x1xi1>
    %246 = vector.broadcast %245 : vector<1x1xi1> to vector<1x32xi1>
    %247 = arith.select %246, %242, %179 : vector<1x32xi1>, vector<1x32xf32>
    %248 = vector.shape_cast %244 : vector<1x1xi1> to vector<1x1xi1>
    %249 = vector.broadcast %248 : vector<1x1xi1> to vector<1x32xi1>
    %250 = arith.select %249, %240, %182 : vector<1x32xi1>, vector<1x32xf32>
    %cst_52 = arith.constant 0.000000e+00 : f32
    %251 = vector.shape_cast %244 : vector<1x1xi1> to vector<1x1xi1>
    %252 = vector.broadcast %251 : vector<1x1xi1> to vector<1x32xi1>
    %253 = vector.broadcast %cst_52 : f32 to vector<1x32xf32>
    %254 = arith.select %252, %242, %253 : vector<1x32xi1>, vector<1x32xf32>
    %255 = vector.shape_cast %254 : vector<1x32xf32> to vector<1x1x32xf32>
    %c0_53 = arith.constant 0 : index
    %c3 = arith.constant 3 : index
    %c0_54 = arith.constant 0 : index
    %256 = vector.load %arg15[%c0_53, %c3, %c0_54] : memref<1x8x32xf32, #tpu.memory_space<vmem>>, vector<1x1x32xf32>
    tpu.vector_store %arg15[%c0_53, %c3, %c0_54], %255 {strides = array<i32>} : memref<1x8x32xf32, #tpu.memory_space<vmem>>, vector<1x1x32xf32>,
    %257 = vector.extract_strided_slice %17 {offsets = [0, 4, 0], sizes = [1, 1, 128], strides = [1, 1, 1]} : vector<1x8x128xf32> to vector<1x1x128xf32>
    %258 = vector.shape_cast %257 : vector<1x1x128xf32> to vector<1x128xf32>
    %259 = arith.truncf %213 : vector<1x32xf32> to vector<1x32xbf16>
    %cst_55 = arith.constant dense<0.000000e+00> : vector<1x128xf32>
    %260 = tpu.matmul %259, %3, %cst_55 {dimension_numbers = #tpu.dot_dimension_numbers<[1], [0], [0], [1], [0, 0, 1, 1], [], []>} : vector<1x32xbf16>, vector<32x128xbf16>, vector<1x128xf32> -> vector<1x128xf32>
    %261 = arith.addf %258, %260 : vector<1x128xf32>
    %262 = arith.negf %261 : vector<1x128xf32>
    %263 = math.exp %262 : vector<1x128xf32>
    %cst_56 = arith.constant 1.000000e+00 : f32
    %264 = vector.broadcast %cst_56 : f32 to vector<1x128xf32>
    %265 = arith.addf %264, %263 : vector<1x128xf32>
    %266 = arith.divf %264, %265 : vector<1x128xf32>
    %267 = math.tanh %261 : vector<1x128xf32>
    %268 = vector.extract_strided_slice %266 {offsets = [0, 0], sizes = [1, 32], strides = [1, 1]} : vector<1x128xf32> to vector<1x32xf32>
    %269 = vector.extract_strided_slice %266 {offsets = [0, 32], sizes = [1, 32], strides = [1, 1]} : vector<1x128xf32> to vector<1x32xf32>
    %270 = vector.extract_strided_slice %267 {offsets = [0, 64], sizes = [1, 32], strides = [1, 1]} : vector<1x128xf32> to vector<1x32xf32>
    %271 = vector.extract_strided_slice %266 {offsets = [0, 96], sizes = [1, 32], strides = [1, 1]} : vector<1x128xf32> to vector<1x32xf32>
    %272 = arith.mulf %269, %216 : vector<1x32xf32>
    %273 = arith.mulf %268, %270 : vector<1x32xf32>
    %274 = arith.addf %272, %273 : vector<1x32xf32>
    %275 = math.tanh %274 : vector<1x32xf32>
    %276 = arith.mulf %271, %275 : vector<1x32xf32>
    %c4_i32 = arith.constant 4 : i32
    %277 = vector.broadcast %c4_i32 : i32 to vector<1x1xi32>
    %278 = arith.cmpi sgt, %1, %277 : vector<1x1xi32>
    %279 = vector.shape_cast %278 : vector<1x1xi1> to vector<1x1xi1>
    %280 = vector.broadcast %279 : vector<1x1xi1> to vector<1x32xi1>
    %281 = arith.select %280, %276, %213 : vector<1x32xi1>, vector<1x32xf32>
    %282 = vector.shape_cast %278 : vector<1x1xi1> to vector<1x1xi1>
    %283 = vector.broadcast %282 : vector<1x1xi1> to vector<1x32xi1>
    %284 = arith.select %283, %274, %216 : vector<1x32xi1>, vector<1x32xf32>
    %cst_57 = arith.constant 0.000000e+00 : f32
    %285 = vector.shape_cast %278 : vector<1x1xi1> to vector<1x1xi1>
    %286 = vector.broadcast %285 : vector<1x1xi1> to vector<1x32xi1>
    %287 = vector.broadcast %cst_57 : f32 to vector<1x32xf32>
    %288 = arith.select %286, %276, %287 : vector<1x32xi1>, vector<1x32xf32>
    %289 = vector.shape_cast %288 : vector<1x32xf32> to vector<1x1x32xf32>
    %c0_58 = arith.constant 0 : index
    %c4 = arith.constant 4 : index
    %c0_59 = arith.constant 0 : index
    %290 = vector.load %arg16[%c0_58, %c4, %c0_59] : memref<1x8x32xf32, #tpu.memory_space<vmem>>, vector<1x1x32xf32>
    tpu.vector_store %arg16[%c0_58, %c4, %c0_59], %289 {strides = array<i32>} : memref<1x8x32xf32, #tpu.memory_space<vmem>>, vector<1x1x32xf32>,
    %291 = vector.extract_strided_slice %11 {offsets = [0, 4, 0], sizes = [1, 1, 128], strides = [1, 1, 1]} : vector<1x8x128xf32> to vector<1x1x128xf32>
    %292 = vector.shape_cast %291 : vector<1x1x128xf32> to vector<1x128xf32>
    %293 = arith.truncf %247 : vector<1x32xf32> to vector<1x32xbf16>
    %cst_60 = arith.constant dense<0.000000e+00> : vector<1x128xf32>
    %294 = tpu.matmul %293, %2, %cst_60 {dimension_numbers = #tpu.dot_dimension_numbers<[1], [0], [0], [1], [0, 0, 1, 1], [], []>} : vector<1x32xbf16>, vector<32x128xbf16>, vector<1x128xf32> -> vector<1x128xf32>
    %295 = arith.addf %292, %294 : vector<1x128xf32>
    %296 = arith.negf %295 : vector<1x128xf32>
    %297 = math.exp %296 : vector<1x128xf32>
    %cst_61 = arith.constant 1.000000e+00 : f32
    %298 = vector.broadcast %cst_61 : f32 to vector<1x128xf32>
    %299 = arith.addf %298, %297 : vector<1x128xf32>
    %300 = arith.divf %298, %299 : vector<1x128xf32>
    %301 = math.tanh %295 : vector<1x128xf32>
    %302 = vector.extract_strided_slice %300 {offsets = [0, 0], sizes = [1, 32], strides = [1, 1]} : vector<1x128xf32> to vector<1x32xf32>
    %303 = vector.extract_strided_slice %300 {offsets = [0, 32], sizes = [1, 32], strides = [1, 1]} : vector<1x128xf32> to vector<1x32xf32>
    %304 = vector.extract_strided_slice %301 {offsets = [0, 64], sizes = [1, 32], strides = [1, 1]} : vector<1x128xf32> to vector<1x32xf32>
    %305 = vector.extract_strided_slice %300 {offsets = [0, 96], sizes = [1, 32], strides = [1, 1]} : vector<1x128xf32> to vector<1x32xf32>
    %306 = arith.mulf %303, %250 : vector<1x32xf32>
    %307 = arith.mulf %302, %304 : vector<1x32xf32>
    %308 = arith.addf %306, %307 : vector<1x32xf32>
    %309 = math.tanh %308 : vector<1x32xf32>
    %310 = arith.mulf %305, %309 : vector<1x32xf32>
    %c4_i32_62 = arith.constant 4 : i32
    %311 = vector.broadcast %c4_i32_62 : i32 to vector<1x1xi32>
    %312 = arith.cmpi sgt, %1, %311 : vector<1x1xi32>
    %313 = vector.shape_cast %312 : vector<1x1xi1> to vector<1x1xi1>
    %314 = vector.broadcast %313 : vector<1x1xi1> to vector<1x32xi1>
    %315 = arith.select %314, %310, %247 : vector<1x32xi1>, vector<1x32xf32>
    %316 = vector.shape_cast %312 : vector<1x1xi1> to vector<1x1xi1>
    %317 = vector.broadcast %316 : vector<1x1xi1> to vector<1x32xi1>
    %318 = arith.select %317, %308, %250 : vector<1x32xi1>, vector<1x32xf32>
    %cst_63 = arith.constant 0.000000e+00 : f32
    %319 = vector.shape_cast %312 : vector<1x1xi1> to vector<1x1xi1>
    %320 = vector.broadcast %319 : vector<1x1xi1> to vector<1x32xi1>
    %321 = vector.broadcast %cst_63 : f32 to vector<1x32xf32>
    %322 = arith.select %320, %310, %321 : vector<1x32xi1>, vector<1x32xf32>
    %323 = vector.shape_cast %322 : vector<1x32xf32> to vector<1x1x32xf32>
    %c0_64 = arith.constant 0 : index
    %c4_65 = arith.constant 4 : index
    %c0_66 = arith.constant 0 : index
    %324 = vector.load %arg15[%c0_64, %c4_65, %c0_66] : memref<1x8x32xf32, #tpu.memory_space<vmem>>, vector<1x1x32xf32>
    tpu.vector_store %arg15[%c0_64, %c4_65, %c0_66], %323 {strides = array<i32>} : memref<1x8x32xf32, #tpu.memory_space<vmem>>, vector<1x1x32xf32>,
    %325 = vector.extract_strided_slice %17 {offsets = [0, 3, 0], sizes = [1, 1, 128], strides = [1, 1, 1]} : vector<1x8x128xf32> to vector<1x1x128xf32>
    %326 = vector.shape_cast %325 : vector<1x1x128xf32> to vector<1x128xf32>
    %327 = arith.truncf %281 : vector<1x32xf32> to vector<1x32xbf16>
    %cst_67 = arith.constant dense<0.000000e+00> : vector<1x128xf32>
    %328 = tpu.matmul %327, %3, %cst_67 {dimension_numbers = #tpu.dot_dimension_numbers<[1], [0], [0], [1], [0, 0, 1, 1], [], []>} : vector<1x32xbf16>, vector<32x128xbf16>, vector<1x128xf32> -> vector<1x128xf32>
    %329 = arith.addf %326, %328 : vector<1x128xf32>
    %330 = arith.negf %329 : vector<1x128xf32>
    %331 = math.exp %330 : vector<1x128xf32>
    %cst_68 = arith.constant 1.000000e+00 : f32
    %332 = vector.broadcast %cst_68 : f32 to vector<1x128xf32>
    %333 = arith.addf %332, %331 : vector<1x128xf32>
    %334 = arith.divf %332, %333 : vector<1x128xf32>
    %335 = math.tanh %329 : vector<1x128xf32>
    %336 = vector.extract_strided_slice %334 {offsets = [0, 0], sizes = [1, 32], strides = [1, 1]} : vector<1x128xf32> to vector<1x32xf32>
    %337 = vector.extract_strided_slice %334 {offsets = [0, 32], sizes = [1, 32], strides = [1, 1]} : vector<1x128xf32> to vector<1x32xf32>
    %338 = vector.extract_strided_slice %335 {offsets = [0, 64], sizes = [1, 32], strides = [1, 1]} : vector<1x128xf32> to vector<1x32xf32>
    %339 = vector.extract_strided_slice %334 {offsets = [0, 96], sizes = [1, 32], strides = [1, 1]} : vector<1x128xf32> to vector<1x32xf32>
    %340 = arith.mulf %337, %284 : vector<1x32xf32>
    %341 = arith.mulf %336, %338 : vector<1x32xf32>
    %342 = arith.addf %340, %341 : vector<1x32xf32>
    %343 = math.tanh %342 : vector<1x32xf32>
    %344 = arith.mulf %339, %343 : vector<1x32xf32>
    %c3_i32_69 = arith.constant 3 : i32
    %345 = vector.broadcast %c3_i32_69 : i32 to vector<1x1xi32>
    %346 = arith.cmpi sgt, %1, %345 : vector<1x1xi32>
    %347 = vector.shape_cast %346 : vector<1x1xi1> to vector<1x1xi1>
    %348 = vector.broadcast %347 : vector<1x1xi1> to vector<1x32xi1>
    %349 = arith.select %348, %344, %281 : vector<1x32xi1>, vector<1x32xf32>
    %350 = vector.shape_cast %346 : vector<1x1xi1> to vector<1x1xi1>
    %351 = vector.broadcast %350 : vector<1x1xi1> to vector<1x32xi1>
    %352 = arith.select %351, %342, %284 : vector<1x32xi1>, vector<1x32xf32>
    %cst_70 = arith.constant 0.000000e+00 : f32
    %353 = vector.shape_cast %346 : vector<1x1xi1> to vector<1x1xi1>
    %354 = vector.broadcast %353 : vector<1x1xi1> to vector<1x32xi1>
    %355 = vector.broadcast %cst_70 : f32 to vector<1x32xf32>
    %356 = arith.select %354, %344, %355 : vector<1x32xi1>, vector<1x32xf32>
    %357 = vector.shape_cast %356 : vector<1x32xf32> to vector<1x1x32xf32>
    %c0_71 = arith.constant 0 : index
    %c3_72 = arith.constant 3 : index
    %c0_73 = arith.constant 0 : index
    %358 = vector.load %arg16[%c0_71, %c3_72, %c0_73] : memref<1x8x32xf32, #tpu.memory_space<vmem>>, vector<1x1x32xf32>
    tpu.vector_store %arg16[%c0_71, %c3_72, %c0_73], %357 {strides = array<i32>} : memref<1x8x32xf32, #tpu.memory_space<vmem>>, vector<1x1x32xf32>,
    %359 = vector.extract_strided_slice %11 {offsets = [0, 5, 0], sizes = [1, 1, 128], strides = [1, 1, 1]} : vector<1x8x128xf32> to vector<1x1x128xf32>
    %360 = vector.shape_cast %359 : vector<1x1x128xf32> to vector<1x128xf32>
    %361 = arith.truncf %315 : vector<1x32xf32> to vector<1x32xbf16>
    %cst_74 = arith.constant dense<0.000000e+00> : vector<1x128xf32>
    %362 = tpu.matmul %361, %2, %cst_74 {dimension_numbers = #tpu.dot_dimension_numbers<[1], [0], [0], [1], [0, 0, 1, 1], [], []>} : vector<1x32xbf16>, vector<32x128xbf16>, vector<1x128xf32> -> vector<1x128xf32>
    %363 = arith.addf %360, %362 : vector<1x128xf32>
    %364 = arith.negf %363 : vector<1x128xf32>
    %365 = math.exp %364 : vector<1x128xf32>
    %cst_75 = arith.constant 1.000000e+00 : f32
    %366 = vector.broadcast %cst_75 : f32 to vector<1x128xf32>
    %367 = arith.addf %366, %365 : vector<1x128xf32>
    %368 = arith.divf %366, %367 : vector<1x128xf32>
    %369 = math.tanh %363 : vector<1x128xf32>
    %370 = vector.extract_strided_slice %368 {offsets = [0, 0], sizes = [1, 32], strides = [1, 1]} : vector<1x128xf32> to vector<1x32xf32>
    %371 = vector.extract_strided_slice %368 {offsets = [0, 32], sizes = [1, 32], strides = [1, 1]} : vector<1x128xf32> to vector<1x32xf32>
    %372 = vector.extract_strided_slice %369 {offsets = [0, 64], sizes = [1, 32], strides = [1, 1]} : vector<1x128xf32> to vector<1x32xf32>
    %373 = vector.extract_strided_slice %368 {offsets = [0, 96], sizes = [1, 32], strides = [1, 1]} : vector<1x128xf32> to vector<1x32xf32>
    %374 = arith.mulf %371, %318 : vector<1x32xf32>
    %375 = arith.mulf %370, %372 : vector<1x32xf32>
    %376 = arith.addf %374, %375 : vector<1x32xf32>
    %377 = math.tanh %376 : vector<1x32xf32>
    %378 = arith.mulf %373, %377 : vector<1x32xf32>
    %c5_i32_76 = arith.constant 5 : i32
    %379 = vector.broadcast %c5_i32_76 : i32 to vector<1x1xi32>
    %380 = arith.cmpi sgt, %1, %379 : vector<1x1xi32>
    %381 = vector.shape_cast %380 : vector<1x1xi1> to vector<1x1xi1>
    %382 = vector.broadcast %381 : vector<1x1xi1> to vector<1x32xi1>
    %383 = arith.select %382, %378, %315 : vector<1x32xi1>, vector<1x32xf32>
    %384 = vector.shape_cast %380 : vector<1x1xi1> to vector<1x1xi1>
    %385 = vector.broadcast %384 : vector<1x1xi1> to vector<1x32xi1>
    %386 = arith.select %385, %376, %318 : vector<1x32xi1>, vector<1x32xf32>
    %cst_77 = arith.constant 0.000000e+00 : f32
    %387 = vector.shape_cast %380 : vector<1x1xi1> to vector<1x1xi1>
    %388 = vector.broadcast %387 : vector<1x1xi1> to vector<1x32xi1>
    %389 = vector.broadcast %cst_77 : f32 to vector<1x32xf32>
    %390 = arith.select %388, %378, %389 : vector<1x32xi1>, vector<1x32xf32>
    %391 = vector.shape_cast %390 : vector<1x32xf32> to vector<1x1x32xf32>
    %c0_78 = arith.constant 0 : index
    %c5_79 = arith.constant 5 : index
    %c0_80 = arith.constant 0 : index
    %392 = vector.load %arg15[%c0_78, %c5_79, %c0_80] : memref<1x8x32xf32, #tpu.memory_space<vmem>>, vector<1x1x32xf32>
    tpu.vector_store %arg15[%c0_78, %c5_79, %c0_80], %391 {strides = array<i32>} : memref<1x8x32xf32, #tpu.memory_space<vmem>>, vector<1x1x32xf32>,
    %393 = vector.extract_strided_slice %17 {offsets = [0, 2, 0], sizes = [1, 1, 128], strides = [1, 1, 1]} : vector<1x8x128xf32> to vector<1x1x128xf32>
    %394 = vector.shape_cast %393 : vector<1x1x128xf32> to vector<1x128xf32>
    %395 = arith.truncf %349 : vector<1x32xf32> to vector<1x32xbf16>
    %cst_81 = arith.constant dense<0.000000e+00> : vector<1x128xf32>
    %396 = tpu.matmul %395, %3, %cst_81 {dimension_numbers = #tpu.dot_dimension_numbers<[1], [0], [0], [1], [0, 0, 1, 1], [], []>} : vector<1x32xbf16>, vector<32x128xbf16>, vector<1x128xf32> -> vector<1x128xf32>
    %397 = arith.addf %394, %396 : vector<1x128xf32>
    %398 = arith.negf %397 : vector<1x128xf32>
    %399 = math.exp %398 : vector<1x128xf32>
    %cst_82 = arith.constant 1.000000e+00 : f32
    %400 = vector.broadcast %cst_82 : f32 to vector<1x128xf32>
    %401 = arith.addf %400, %399 : vector<1x128xf32>
    %402 = arith.divf %400, %401 : vector<1x128xf32>
    %403 = math.tanh %397 : vector<1x128xf32>
    %404 = vector.extract_strided_slice %402 {offsets = [0, 0], sizes = [1, 32], strides = [1, 1]} : vector<1x128xf32> to vector<1x32xf32>
    %405 = vector.extract_strided_slice %402 {offsets = [0, 32], sizes = [1, 32], strides = [1, 1]} : vector<1x128xf32> to vector<1x32xf32>
    %406 = vector.extract_strided_slice %403 {offsets = [0, 64], sizes = [1, 32], strides = [1, 1]} : vector<1x128xf32> to vector<1x32xf32>
    %407 = vector.extract_strided_slice %402 {offsets = [0, 96], sizes = [1, 32], strides = [1, 1]} : vector<1x128xf32> to vector<1x32xf32>
    %408 = arith.mulf %405, %352 : vector<1x32xf32>
    %409 = arith.mulf %404, %406 : vector<1x32xf32>
    %410 = arith.addf %408, %409 : vector<1x32xf32>
    %411 = math.tanh %410 : vector<1x32xf32>
    %412 = arith.mulf %407, %411 : vector<1x32xf32>
    %c2_i32_83 = arith.constant 2 : i32
    %413 = vector.broadcast %c2_i32_83 : i32 to vector<1x1xi32>
    %414 = arith.cmpi sgt, %1, %413 : vector<1x1xi32>
    %415 = vector.shape_cast %414 : vector<1x1xi1> to vector<1x1xi1>
    %416 = vector.broadcast %415 : vector<1x1xi1> to vector<1x32xi1>
    %417 = arith.select %416, %412, %349 : vector<1x32xi1>, vector<1x32xf32>
    %418 = vector.shape_cast %414 : vector<1x1xi1> to vector<1x1xi1>
    %419 = vector.broadcast %418 : vector<1x1xi1> to vector<1x32xi1>
    %420 = arith.select %419, %410, %352 : vector<1x32xi1>, vector<1x32xf32>
    %cst_84 = arith.constant 0.000000e+00 : f32
    %421 = vector.shape_cast %414 : vector<1x1xi1> to vector<1x1xi1>
    %422 = vector.broadcast %421 : vector<1x1xi1> to vector<1x32xi1>
    %423 = vector.broadcast %cst_84 : f32 to vector<1x32xf32>
    %424 = arith.select %422, %412, %423 : vector<1x32xi1>, vector<1x32xf32>
    %425 = vector.shape_cast %424 : vector<1x32xf32> to vector<1x1x32xf32>
    %c0_85 = arith.constant 0 : index
    %c2_86 = arith.constant 2 : index
    %c0_87 = arith.constant 0 : index
    %426 = vector.load %arg16[%c0_85, %c2_86, %c0_87] : memref<1x8x32xf32, #tpu.memory_space<vmem>>, vector<1x1x32xf32>
    tpu.vector_store %arg16[%c0_85, %c2_86, %c0_87], %425 {strides = array<i32>} : memref<1x8x32xf32, #tpu.memory_space<vmem>>, vector<1x1x32xf32>,
    %427 = vector.extract_strided_slice %11 {offsets = [0, 6, 0], sizes = [1, 1, 128], strides = [1, 1, 1]} : vector<1x8x128xf32> to vector<1x1x128xf32>
    %428 = vector.shape_cast %427 : vector<1x1x128xf32> to vector<1x128xf32>
    %429 = arith.truncf %383 : vector<1x32xf32> to vector<1x32xbf16>
    %cst_88 = arith.constant dense<0.000000e+00> : vector<1x128xf32>
    %430 = tpu.matmul %429, %2, %cst_88 {dimension_numbers = #tpu.dot_dimension_numbers<[1], [0], [0], [1], [0, 0, 1, 1], [], []>} : vector<1x32xbf16>, vector<32x128xbf16>, vector<1x128xf32> -> vector<1x128xf32>
    %431 = arith.addf %428, %430 : vector<1x128xf32>
    %432 = arith.negf %431 : vector<1x128xf32>
    %433 = math.exp %432 : vector<1x128xf32>
    %cst_89 = arith.constant 1.000000e+00 : f32
    %434 = vector.broadcast %cst_89 : f32 to vector<1x128xf32>
    %435 = arith.addf %434, %433 : vector<1x128xf32>
    %436 = arith.divf %434, %435 : vector<1x128xf32>
    %437 = math.tanh %431 : vector<1x128xf32>
    %438 = vector.extract_strided_slice %436 {offsets = [0, 0], sizes = [1, 32], strides = [1, 1]} : vector<1x128xf32> to vector<1x32xf32>
    %439 = vector.extract_strided_slice %436 {offsets = [0, 32], sizes = [1, 32], strides = [1, 1]} : vector<1x128xf32> to vector<1x32xf32>
    %440 = vector.extract_strided_slice %437 {offsets = [0, 64], sizes = [1, 32], strides = [1, 1]} : vector<1x128xf32> to vector<1x32xf32>
    %441 = vector.extract_strided_slice %436 {offsets = [0, 96], sizes = [1, 32], strides = [1, 1]} : vector<1x128xf32> to vector<1x32xf32>
    %442 = arith.mulf %439, %386 : vector<1x32xf32>
    %443 = arith.mulf %438, %440 : vector<1x32xf32>
    %444 = arith.addf %442, %443 : vector<1x32xf32>
    %445 = math.tanh %444 : vector<1x32xf32>
    %446 = arith.mulf %441, %445 : vector<1x32xf32>
    %c6_i32_90 = arith.constant 6 : i32
    %447 = vector.broadcast %c6_i32_90 : i32 to vector<1x1xi32>
    %448 = arith.cmpi sgt, %1, %447 : vector<1x1xi32>
    %449 = vector.shape_cast %448 : vector<1x1xi1> to vector<1x1xi1>
    %450 = vector.broadcast %449 : vector<1x1xi1> to vector<1x32xi1>
    %451 = arith.select %450, %446, %383 : vector<1x32xi1>, vector<1x32xf32>
    %452 = vector.shape_cast %448 : vector<1x1xi1> to vector<1x1xi1>
    %453 = vector.broadcast %452 : vector<1x1xi1> to vector<1x32xi1>
    %454 = arith.select %453, %444, %386 : vector<1x32xi1>, vector<1x32xf32>
    %cst_91 = arith.constant 0.000000e+00 : f32
    %455 = vector.shape_cast %448 : vector<1x1xi1> to vector<1x1xi1>
    %456 = vector.broadcast %455 : vector<1x1xi1> to vector<1x32xi1>
    %457 = vector.broadcast %cst_91 : f32 to vector<1x32xf32>
    %458 = arith.select %456, %446, %457 : vector<1x32xi1>, vector<1x32xf32>
    %459 = vector.shape_cast %458 : vector<1x32xf32> to vector<1x1x32xf32>
    %c0_92 = arith.constant 0 : index
    %c6_93 = arith.constant 6 : index
    %c0_94 = arith.constant 0 : index
    %460 = vector.load %arg15[%c0_92, %c6_93, %c0_94] : memref<1x8x32xf32, #tpu.memory_space<vmem>>, vector<1x1x32xf32>
    tpu.vector_store %arg15[%c0_92, %c6_93, %c0_94], %459 {strides = array<i32>} : memref<1x8x32xf32, #tpu.memory_space<vmem>>, vector<1x1x32xf32>,
    %461 = vector.extract_strided_slice %17 {offsets = [0, 1, 0], sizes = [1, 1, 128], strides = [1, 1, 1]} : vector<1x8x128xf32> to vector<1x1x128xf32>
    %462 = vector.shape_cast %461 : vector<1x1x128xf32> to vector<1x128xf32>
    %463 = arith.truncf %417 : vector<1x32xf32> to vector<1x32xbf16>
    %cst_95 = arith.constant dense<0.000000e+00> : vector<1x128xf32>
    %464 = tpu.matmul %463, %3, %cst_95 {dimension_numbers = #tpu.dot_dimension_numbers<[1], [0], [0], [1], [0, 0, 1, 1], [], []>} : vector<1x32xbf16>, vector<32x128xbf16>, vector<1x128xf32> -> vector<1x128xf32>
    %465 = arith.addf %462, %464 : vector<1x128xf32>
    %466 = arith.negf %465 : vector<1x128xf32>
    %467 = math.exp %466 : vector<1x128xf32>
    %cst_96 = arith.constant 1.000000e+00 : f32
    %468 = vector.broadcast %cst_96 : f32 to vector<1x128xf32>
    %469 = arith.addf %468, %467 : vector<1x128xf32>
    %470 = arith.divf %468, %469 : vector<1x128xf32>
    %471 = math.tanh %465 : vector<1x128xf32>
    %472 = vector.extract_strided_slice %470 {offsets = [0, 0], sizes = [1, 32], strides = [1, 1]} : vector<1x128xf32> to vector<1x32xf32>
    %473 = vector.extract_strided_slice %470 {offsets = [0, 32], sizes = [1, 32], strides = [1, 1]} : vector<1x128xf32> to vector<1x32xf32>
    %474 = vector.extract_strided_slice %471 {offsets = [0, 64], sizes = [1, 32], strides = [1, 1]} : vector<1x128xf32> to vector<1x32xf32>
    %475 = vector.extract_strided_slice %470 {offsets = [0, 96], sizes = [1, 32], strides = [1, 1]} : vector<1x128xf32> to vector<1x32xf32>
    %476 = arith.mulf %473, %420 : vector<1x32xf32>
    %477 = arith.mulf %472, %474 : vector<1x32xf32>
    %478 = arith.addf %476, %477 : vector<1x32xf32>
    %479 = math.tanh %478 : vector<1x32xf32>
    %480 = arith.mulf %475, %479 : vector<1x32xf32>
    %c1_i32_97 = arith.constant 1 : i32
    %481 = vector.broadcast %c1_i32_97 : i32 to vector<1x1xi32>
    %482 = arith.cmpi sgt, %1, %481 : vector<1x1xi32>
    %483 = vector.shape_cast %482 : vector<1x1xi1> to vector<1x1xi1>
    %484 = vector.broadcast %483 : vector<1x1xi1> to vector<1x32xi1>
    %485 = arith.select %484, %480, %417 : vector<1x32xi1>, vector<1x32xf32>
    %486 = vector.shape_cast %482 : vector<1x1xi1> to vector<1x1xi1>
    %487 = vector.broadcast %486 : vector<1x1xi1> to vector<1x32xi1>
    %488 = arith.select %487, %478, %420 : vector<1x32xi1>, vector<1x32xf32>
    %cst_98 = arith.constant 0.000000e+00 : f32
    %489 = vector.shape_cast %482 : vector<1x1xi1> to vector<1x1xi1>
    %490 = vector.broadcast %489 : vector<1x1xi1> to vector<1x32xi1>
    %491 = vector.broadcast %cst_98 : f32 to vector<1x32xf32>
    %492 = arith.select %490, %480, %491 : vector<1x32xi1>, vector<1x32xf32>
    %493 = vector.shape_cast %492 : vector<1x32xf32> to vector<1x1x32xf32>
    %c0_99 = arith.constant 0 : index
    %c1_100 = arith.constant 1 : index
    %c0_101 = arith.constant 0 : index
    %494 = vector.load %arg16[%c0_99, %c1_100, %c0_101] : memref<1x8x32xf32, #tpu.memory_space<vmem>>, vector<1x1x32xf32>
    tpu.vector_store %arg16[%c0_99, %c1_100, %c0_101], %493 {strides = array<i32>} : memref<1x8x32xf32, #tpu.memory_space<vmem>>, vector<1x1x32xf32>,
    %495 = vector.extract_strided_slice %11 {offsets = [0, 7, 0], sizes = [1, 1, 128], strides = [1, 1, 1]} : vector<1x8x128xf32> to vector<1x1x128xf32>
    %496 = vector.shape_cast %495 : vector<1x1x128xf32> to vector<1x128xf32>
    %497 = arith.truncf %451 : vector<1x32xf32> to vector<1x32xbf16>
    %cst_102 = arith.constant dense<0.000000e+00> : vector<1x128xf32>
    %498 = tpu.matmul %497, %2, %cst_102 {dimension_numbers = #tpu.dot_dimension_numbers<[1], [0], [0], [1], [0, 0, 1, 1], [], []>} : vector<1x32xbf16>, vector<32x128xbf16>, vector<1x128xf32> -> vector<1x128xf32>
    %499 = arith.addf %496, %498 : vector<1x128xf32>
    %500 = arith.negf %499 : vector<1x128xf32>
    %501 = math.exp %500 : vector<1x128xf32>
    %cst_103 = arith.constant 1.000000e+00 : f32
    %502 = vector.broadcast %cst_103 : f32 to vector<1x128xf32>
    %503 = arith.addf %502, %501 : vector<1x128xf32>
    %504 = arith.divf %502, %503 : vector<1x128xf32>
    %505 = math.tanh %499 : vector<1x128xf32>
    %506 = vector.extract_strided_slice %504 {offsets = [0, 0], sizes = [1, 32], strides = [1, 1]} : vector<1x128xf32> to vector<1x32xf32>
    %507 = vector.extract_strided_slice %504 {offsets = [0, 32], sizes = [1, 32], strides = [1, 1]} : vector<1x128xf32> to vector<1x32xf32>
    %508 = vector.extract_strided_slice %505 {offsets = [0, 64], sizes = [1, 32], strides = [1, 1]} : vector<1x128xf32> to vector<1x32xf32>
    %509 = vector.extract_strided_slice %504 {offsets = [0, 96], sizes = [1, 32], strides = [1, 1]} : vector<1x128xf32> to vector<1x32xf32>
    %510 = arith.mulf %507, %454 : vector<1x32xf32>
    %511 = arith.mulf %506, %508 : vector<1x32xf32>
    %512 = arith.addf %510, %511 : vector<1x32xf32>
    %513 = math.tanh %512 : vector<1x32xf32>
    %514 = arith.mulf %509, %513 : vector<1x32xf32>
    %c7_i32_104 = arith.constant 7 : i32
    %515 = vector.broadcast %c7_i32_104 : i32 to vector<1x1xi32>
    %516 = arith.cmpi sgt, %1, %515 : vector<1x1xi32>
    %517 = vector.shape_cast %516 : vector<1x1xi1> to vector<1x1xi1>
    %518 = vector.broadcast %517 : vector<1x1xi1> to vector<1x32xi1>
    %519 = arith.select %518, %514, %451 : vector<1x32xi1>, vector<1x32xf32>
    %cst_105 = arith.constant 0.000000e+00 : f32
    %520 = vector.shape_cast %516 : vector<1x1xi1> to vector<1x1xi1>
    %521 = vector.broadcast %520 : vector<1x1xi1> to vector<1x32xi1>
    %522 = vector.broadcast %cst_105 : f32 to vector<1x32xf32>
    %523 = arith.select %521, %514, %522 : vector<1x32xi1>, vector<1x32xf32>
    %524 = vector.shape_cast %523 : vector<1x32xf32> to vector<1x1x32xf32>
    %c0_106 = arith.constant 0 : index
    %c7_107 = arith.constant 7 : index
    %c0_108 = arith.constant 0 : index
    %525 = vector.load %arg15[%c0_106, %c7_107, %c0_108] : memref<1x8x32xf32, #tpu.memory_space<vmem>>, vector<1x1x32xf32>
    tpu.vector_store %arg15[%c0_106, %c7_107, %c0_108], %524 {strides = array<i32>} : memref<1x8x32xf32, #tpu.memory_space<vmem>>, vector<1x1x32xf32>,
    %526 = vector.extract_strided_slice %17 {offsets = [0, 0, 0], sizes = [1, 1, 128], strides = [1, 1, 1]} : vector<1x8x128xf32> to vector<1x1x128xf32>
    %527 = vector.shape_cast %526 : vector<1x1x128xf32> to vector<1x128xf32>
    %528 = arith.truncf %485 : vector<1x32xf32> to vector<1x32xbf16>
    %cst_109 = arith.constant dense<0.000000e+00> : vector<1x128xf32>
    %529 = tpu.matmul %528, %3, %cst_109 {dimension_numbers = #tpu.dot_dimension_numbers<[1], [0], [0], [1], [0, 0, 1, 1], [], []>} : vector<1x32xbf16>, vector<32x128xbf16>, vector<1x128xf32> -> vector<1x128xf32>
    %530 = arith.addf %527, %529 : vector<1x128xf32>
    %531 = arith.negf %530 : vector<1x128xf32>
    %532 = math.exp %531 : vector<1x128xf32>
    %cst_110 = arith.constant 1.000000e+00 : f32
    %533 = vector.broadcast %cst_110 : f32 to vector<1x128xf32>
    %534 = arith.addf %533, %532 : vector<1x128xf32>
    %535 = arith.divf %533, %534 : vector<1x128xf32>
    %536 = math.tanh %530 : vector<1x128xf32>
    %537 = vector.extract_strided_slice %535 {offsets = [0, 0], sizes = [1, 32], strides = [1, 1]} : vector<1x128xf32> to vector<1x32xf32>
    %538 = vector.extract_strided_slice %535 {offsets = [0, 32], sizes = [1, 32], strides = [1, 1]} : vector<1x128xf32> to vector<1x32xf32>
    %539 = vector.extract_strided_slice %536 {offsets = [0, 64], sizes = [1, 32], strides = [1, 1]} : vector<1x128xf32> to vector<1x32xf32>
    %540 = vector.extract_strided_slice %535 {offsets = [0, 96], sizes = [1, 32], strides = [1, 1]} : vector<1x128xf32> to vector<1x32xf32>
    %541 = arith.mulf %538, %488 : vector<1x32xf32>
    %542 = arith.mulf %537, %539 : vector<1x32xf32>
    %543 = arith.addf %541, %542 : vector<1x32xf32>
    %544 = math.tanh %543 : vector<1x32xf32>
    %545 = arith.mulf %540, %544 : vector<1x32xf32>
    %c0_i32_111 = arith.constant 0 : i32
    %546 = vector.broadcast %c0_i32_111 : i32 to vector<1x1xi32>
    %547 = arith.cmpi sgt, %1, %546 : vector<1x1xi32>
    %548 = vector.shape_cast %547 : vector<1x1xi1> to vector<1x1xi1>
    %549 = vector.broadcast %548 : vector<1x1xi1> to vector<1x32xi1>
    %550 = arith.select %549, %545, %485 : vector<1x32xi1>, vector<1x32xf32>
    %cst_112 = arith.constant 0.000000e+00 : f32
    %551 = vector.shape_cast %547 : vector<1x1xi1> to vector<1x1xi1>
    %552 = vector.broadcast %551 : vector<1x1xi1> to vector<1x32xi1>
    %553 = vector.broadcast %cst_112 : f32 to vector<1x32xf32>
    %554 = arith.select %552, %545, %553 : vector<1x32xi1>, vector<1x32xf32>
    %555 = vector.shape_cast %554 : vector<1x32xf32> to vector<1x1x32xf32>
    %c0_113 = arith.constant 0 : index
    %c0_114 = arith.constant 0 : index
    %c0_115 = arith.constant 0 : index
    %556 = vector.load %arg16[%c0_113, %c0_114, %c0_115] : memref<1x8x32xf32, #tpu.memory_space<vmem>>, vector<1x1x32xf32>
    tpu.vector_store %arg16[%c0_113, %c0_114, %c0_115], %555 {strides = array<i32>} : memref<1x8x32xf32, #tpu.memory_space<vmem>>, vector<1x1x32xf32>,
    %c0_116 = arith.constant 0 : index
    %c0_117 = arith.constant 0 : index
    %c0_118 = arith.constant 0 : index
    %557 = vector.load %arg15[%c0_116, %c0_117, %c0_118] : memref<1x8x32xf32, #tpu.memory_space<vmem>>, vector<1x8x32xf32>
    %558 = vector.shape_cast %557 : vector<1x8x32xf32> to vector<8x32xf32>
    %c0_119 = arith.constant 0 : index
    %c0_120 = arith.constant 0 : index
    %c0_121 = arith.constant 0 : index
    %559 = vector.load %arg16[%c0_119, %c0_120, %c0_121] : memref<1x8x32xf32, #tpu.memory_space<vmem>>, vector<1x8x32xf32>
    %560 = vector.shape_cast %559 : vector<1x8x32xf32> to vector<8x32xf32>
    %561 = tpu.concatenate %558, %560 in 1 : vector<8x32xf32>, vector<8x32xf32> -> vector<8x64xf32>
    %562 = arith.truncf %561 : vector<8x64xf32> to vector<8x64xbf16>
    %c0_122 = arith.constant 0 : index
    %c0_123 = arith.constant 0 : index
    %563 = vector.load %arg9[%c0_122, %c0_123] : memref<64x128xbf16, #tpu.memory_space<vmem>>, vector<64x128xbf16>
    %cst_124 = arith.constant dense<0.000000e+00> : vector<8x128xf32>
    %564 = tpu.matmul %562, %563, %cst_124 {dimension_numbers = #tpu.dot_dimension_numbers<[1], [0], [0], [1], [0, 0, 1, 1], [], []>} : vector<8x64xbf16>, vector<64x128xbf16>, vector<8x128xf32> -> vector<8x128xf32>
    %c0_125 = arith.constant 0 : index
    %c0_126 = arith.constant 0 : index
    %565 = vector.load %arg10[%c0_125, %c0_126] : memref<1x128xf32, #tpu.memory_space<vmem>>, vector<1x128xf32>
    %566 = vector.broadcast %565 : vector<1x128xf32> to vector<8x128xf32>
    %567 = arith.addf %564, %566 : vector<8x128xf32>
    %568 = vector.shape_cast %567 : vector<8x128xf32> to vector<1x8x128xf32>
    %c0_127 = arith.constant 0 : index
    %c0_128 = arith.constant 0 : index
    %c0_129 = arith.constant 0 : index
    %569 = vector.load %arg13[%c0_127, %c0_128, %c0_129] : memref<1x8x128xf32, #tpu.memory_space<vmem>>, vector<1x8x128xf32>
    tpu.vector_store %arg13[%c0_127, %c0_128, %c0_129], %568 {strides = array<i32>} : memref<1x8x128xf32, #tpu.memory_space<vmem>>, vector<1x8x128xf32>,
    %570 = tpu.concatenate %519, %550 in 1 : vector<1x32xf32>, vector<1x32xf32> -> vector<1x64xf32>
    %571 = arith.truncf %570 : vector<1x64xf32> to vector<1x64xbf16>
    %c0_130 = arith.constant 0 : index
    %c0_131 = arith.constant 0 : index
    %572 = vector.load %arg11[%c0_130, %c0_131] : memref<64x128xbf16, #tpu.memory_space<vmem>>, vector<64x128xbf16>
    %cst_132 = arith.constant dense<0.000000e+00> : vector<1x128xf32>
    %573 = tpu.matmul %571, %572, %cst_132 {dimension_numbers = #tpu.dot_dimension_numbers<[1], [0], [0], [1], [0, 0, 1, 1], [], []>} : vector<1x64xbf16>, vector<64x128xbf16>, vector<1x128xf32> -> vector<1x128xf32>
    %c0_133 = arith.constant 0 : index
    %c0_134 = arith.constant 0 : index
    %574 = vector.load %arg12[%c0_133, %c0_134] : memref<1x128xf32, #tpu.memory_space<vmem>>, vector<1x128xf32>
    %575 = arith.addf %573, %574 : vector<1x128xf32>
    %576 = vector.shape_cast %575 : vector<1x128xf32> to vector<1x1x128xf32>
    %c0_135 = arith.constant 0 : index
    %c0_136 = arith.constant 0 : index
    %c0_137 = arith.constant 0 : index
    %577 = vector.load %arg14[%c0_135, %c0_136, %c0_137] : memref<1x1x128xf32, #tpu.memory_space<vmem>>, vector<1x1x128xf32>
    tpu.vector_store %arg14[%c0_135, %c0_136, %c0_137], %576 {strides = array<i32>} : memref<1x1x128xf32, #tpu.memory_space<vmem>>, vector<1x1x128xf32>,
    return
  }
  func.func @transform_0(%arg0: i32) -> (i32, i32, i32) {
    %c0_i32 = arith.constant 0 : i32
    %c0_i32_0 = arith.constant 0 : i32
    %c0_i32_1 = arith.constant 0 : i32
    return %arg0, %c0_i32, %c0_i32_0 : i32, i32, i32
  }
  func.func @transform_1(%arg0: i32) -> (i32, i32, i32) {
    %c0_i32 = arith.constant 0 : i32
    %c0_i32_0 = arith.constant 0 : i32
    %c0_i32_1 = arith.constant 0 : i32
    return %arg0, %c0_i32, %c0_i32_0 : i32, i32, i32
  }
  func.func @transform_2(%arg0: i32) -> (i32, i32) {
    %c0_i32 = arith.constant 0 : i32
    %c0_i32_0 = arith.constant 0 : i32
    %c0_i32_1 = arith.constant 0 : i32
    return %c0_i32, %c0_i32_0 : i32, i32
  }
  func.func @transform_3(%arg0: i32) -> (i32, i32) {
    %c0_i32 = arith.constant 0 : i32
    %c0_i32_0 = arith.constant 0 : i32
    %c0_i32_1 = arith.constant 0 : i32
    return %c0_i32, %c0_i32_0 : i32, i32
  }
  func.func @transform_4(%arg0: i32) -> (i32, i32) {
    %c0_i32 = arith.constant 0 : i32
    %c0_i32_0 = arith.constant 0 : i32
    %c0_i32_1 = arith.constant 0 : i32
    return %c0_i32, %c0_i32_0 : i32, i32
  }
  func.func @transform_5(%arg0: i32) -> (i32, i32) {
    %c0_i32 = arith.constant 0 : i32
    %c0_i32_0 = arith.constant 0 : i32
    %c0_i32_1 = arith.constant 0 : i32
    return %c0_i32, %c0_i32_0 : i32, i32
  }
  func.func @transform_6(%arg0: i32) -> (i32, i32) {
    %c0_i32 = arith.constant 0 : i32
    %c0_i32_0 = arith.constant 0 : i32
    %c0_i32_1 = arith.constant 0 : i32
    return %c0_i32, %c0_i32_0 : i32, i32
  }
  func.func @transform_7(%arg0: i32) -> (i32, i32) {
    %c0_i32 = arith.constant 0 : i32
    %c0_i32_0 = arith.constant 0 : i32
    %c0_i32_1 = arith.constant 0 : i32
    return %c0_i32, %c0_i32_0 : i32, i32
  }
  func.func @transform_8(%arg0: i32) -> (i32, i32) {
    %c0_i32 = arith.constant 0 : i32
    %c0_i32_0 = arith.constant 0 : i32
    %c0_i32_1 = arith.constant 0 : i32
    return %c0_i32, %c0_i32_0 : i32, i32
  }
  func.func @transform_9(%arg0: i32) -> (i32, i32) {
    %c0_i32 = arith.constant 0 : i32
    %c0_i32_0 = arith.constant 0 : i32
    %c0_i32_1 = arith.constant 0 : i32
    return %c0_i32, %c0_i32_0 : i32, i32
  }
  func.func @transform_10(%arg0: i32) -> (i32, i32) {
    %c0_i32 = arith.constant 0 : i32
    %c0_i32_0 = arith.constant 0 : i32
    %c0_i32_1 = arith.constant 0 : i32
    return %c0_i32, %c0_i32_0 : i32, i32
  }
  func.func @transform_11(%arg0: i32) -> (i32, i32) {
    %c0_i32 = arith.constant 0 : i32
    %c0_i32_0 = arith.constant 0 : i32
    %c0_i32_1 = arith.constant 0 : i32
    return %c0_i32, %c0_i32_0 : i32, i32
  }
  func.func @transform_12(%arg0: i32) -> (i32, i32, i32) {
    %c0_i32 = arith.constant 0 : i32
    %c0_i32_0 = arith.constant 0 : i32
    %c0_i32_1 = arith.constant 0 : i32
    return %arg0, %c0_i32, %c0_i32_0 : i32, i32, i32
  }
  func.func @transform_13(%arg0: i32) -> (i32, i32, i32) {
    %c0_i32 = arith.constant 0 : i32
    %c0_i32_0 = arith.constant 0 : i32
    %c0_i32_1 = arith.constant 0 : i32
    return %arg0, %c0_i32, %c0_i32_0 : i32, i32, i32
  }
}

</mosaic_0001>

<llo_original>
// kernel: tpu_custom_call.1
$region0: #{tpu_custom_call.1}
  #allocation0 [shape = 'u32[]', space=smem, size = 0x4, offset = 0x4, fixed_abs, tag = 'smem constant byte address 0x4 - core index']
  #allocation1 [shape = 'u32[144,128]{1,0:T(1,128)}', space=vmem, size = 0x12000, scoped, tag = 'internal scratch']
  #allocation2 [shape = 'f32[1,8,32]{2,1,0:T(8,128)}', space=vmem, size = 0x1000, scoped, tag = 'scratch operand']
  #allocation3 [shape = 'f32[1,8,32]{2,1,0:T(8,128)}', space=vmem, size = 0x1000, scoped, tag = 'scratch operand']
  %s0 = inlined_call_operand.hbm [shape: bf16[2,8,32], index: 0, kind: input, shape index: {}]
  %s1 = inlined_call_operand.vmem [shape: s32[2,1,1], index: 1, kind: input, shape index: {}]
  %s2 = inlined_call_operand.hbm [shape: bf16[32,128], index: 2, kind: input, shape index: {}]
  %s3 = inlined_call_operand.hbm [shape: bf16[32,128], index: 3, kind: input, shape index: {}]
  %s4 = inlined_call_operand.vmem [shape: f32[1,128], index: 4, kind: input, shape index: {}]
  %s5 = inlined_call_operand.hbm [shape: bf16[32,128], index: 5, kind: input, shape index: {}]
  %s6 = inlined_call_operand.hbm [shape: bf16[32,128], index: 6, kind: input, shape index: {}]
  %s7 = inlined_call_operand.vmem [shape: f32[1,128], index: 7, kind: input, shape index: {}]
  %s8 = inlined_call_operand.vmem [shape: bf16[64,128], index: 8, kind: input, shape index: {}]
  %s9 = inlined_call_operand.vmem [shape: f32[1,128], index: 9, kind: input, shape index: {}]
  %s10 = inlined_call_operand.hbm [shape: bf16[64,128], index: 10, kind: input, shape index: {}]
  %s11 = inlined_call_operand.vmem [shape: f32[1,128], index: 11, kind: input, shape index: {}]
  %s12 = inlined_call_operand.hbm [shape: f32[2,8,128], index: 12, kind: output, shape index: {0}]
  %s13 = inlined_call_operand.hbm [shape: f32[2,1,128], index: 13, kind: output, shape index: {1}]
  %14 = xla_tuple %s12, %s13
  %s15 = sld [smem:[#allocation0]]
  $region113: #{tpu_custom_call.1} parent=0
    _
  %s17 = ssub.s32 1, %s15
  %s18 = scalar_select 0, %s17, %s15
  $region1: #{tpu_custom_call.1} parent=0
    #allocation4 [shape = 'u8[4096]{0}', space=vmem, size = 0x1000, scoped, tag = 'input window, operand 0']
    #allocation5 [shape = 's32[2]{0}', space=sflag, size = 0x8, scoped, tag = 'scoped memory for tpu_custom_call.1']
    #allocation6 [shape = 's32[2]{0}', space=sflag, size = 0x8, scoped, tag = 'scoped memory for tpu_custom_call.1']
    #allocation7 [shape = 'u8[8192]{0}', space=vmem, size = 0x2000, scoped, tag = 'input window, operand 2, single buffered']
    #allocation8 [shape = 's32[1]{0}', space=sflag, size = 0x4, scoped, tag = 'scoped memory for tpu_custom_call.1']
    #allocation9 [shape = 'u8[8192]{0}', space=vmem, size = 0x2000, scoped, tag = 'input window, operand 3, single buffered']
    #allocation10 [shape = 'u8[8192]{0}', space=vmem, size = 0x2000, scoped, tag = 'input window, operand 5, single buffered']
    #allocation11 [shape = 's32[1]{0}', space=sflag, size = 0x4, scoped, tag = 'scoped memory for tpu_custom_call.1']
    #allocation12 [shape = 'u8[8192]{0}', space=vmem, size = 0x2000, scoped, tag = 'input window, operand 6, single buffered']
    #allocation13 [shape = 'u8[16384]{0}', space=vmem, size = 0x4000, scoped, tag = 'input window, operand 10, single buffered']
    #allocation14 [shape = 's32[1]{0}', space=sflag, size = 0x4, scoped, tag = 'scoped memory for tpu_custom_call.1']
    #allocation15 [shape = 'u8[8192]{0}', space=vmem, size = 0x2000, scoped, tag = 'output window, operand 0']
    #allocation16 [shape = 'u8[1024]{0}', space=vmem, size = 0x400, scoped, tag = 'output window, operand 1']
    #allocation17 [shape = 's32[2]{0}', space=sflag, size = 0x8, scoped, tag = 'scoped memory for tpu_custom_call.1']
    %19 = vsyncpa [#allocation5], 0
    %s20 = scalar_lea.sflag [#allocation5], 1
    %21 = vsyncpa %s20, 0
    %22 = vsyncpa [#allocation8], 0
    %23 = vsyncpa [#allocation11], 0
    %24 = vsyncpa [#allocation14], 0
    %25 = vsyncpa [#allocation6], 0
    %s26 = scalar_lea.sflag [#allocation6], 1
    %27 = vsyncpa %s26, 0
    %28 = vsyncpa [#allocation17], 0
    %s29 = scalar_lea.sflag [#allocation17], 1
    %30 = vsyncpa %s29, 0
    loop: start=0, step=1, limit=4
    $region2: #{tpu_custom_call.1} parent=1 // loop_pre_header
      _
    $region3: #{tpu_custom_call.1} parent=1 // loop_header
      %s32 = sphi 0, %s36
      %p33 = scmp.ge.s32.totalorder %s32, 4
      %s42 = sphi 0, %s44
      %s45 = sphi 0, %s42
      %s46 = sphi 0, %s45
      %s62 = sphi 0, %s46
      %s68 = sphi 0, %s70
      %s71 = sphi 0, %s68
      %s72 = sphi 0, %s71
      %s88 = sphi 0, %s72
      %s92 = sphi 0, %s92
      %s94 = sphi 0, %s92
      %s95 = sphi 0, %s94
      %s109 = sphi 0, %s95
      %s113 = sphi 0, %s113
      %s115 = sphi 0, %s113
      %s116 = sphi 0, %s115
      %s130 = sphi 0, %s116
      %s134 = sphi 0, %s134
      %s136 = sphi 0, %s134
      %s137 = sphi 0, %s136
      %s151 = sphi 0, %s137
      %s155 = sphi 0, %s155
      %s157 = sphi 0, %s155
      %s158 = sphi 0, %s157
      %s172 = sphi 0, %s158
      %s176 = sphi 0, %s176
      %s178 = sphi 0, %s176
      %s179 = sphi 0, %s178
      %s193 = sphi 0, %s179
      %s197 = sphi 0, %s197
      %s199 = sphi 0, %s197
      %s200 = sphi 0, %s199
      %s214 = sphi 0, %s200
      %s218 = sphi 0, %s218
      %s220 = sphi 0, %s218
      %s221 = sphi 0, %s220
      %s235 = sphi 0, %s221
      %s239 = sphi 0, %s239
      %s241 = sphi 0, %s239
      %s242 = sphi 0, %s241
      %s256 = sphi 0, %s242
      %s260 = sphi 0, %s260
      %s262 = sphi 0, %s260
      %s263 = sphi 0, %s262
      %s277 = sphi 0, %s263
      %s281 = sphi 0, %s281
      %s283 = sphi 0, %s281
      %s284 = sphi 0, %s283
      %s298 = sphi 0, %s284
      %s304 = sphi 0, %s306
      %s307 = sphi 0, %s304
      %s308 = sphi 0, %s307
      %s324 = sphi 0, %s308
      %s330 = sphi 0, %s332
      %s333 = sphi 0, %s330
      %s334 = sphi 0, %s333
      %s350 = sphi 0, %s334
    $region4: #{tpu_custom_call.1} parent=1 // loop_header_branch
      %35 = sbr.rel (%p33) target = $region8
    $region5: #{tpu_custom_call.1} parent=1 // loop_body
      %s37 = ssub.s32 %s32, 1
      %s38 = ssub.s32 %s32, 2
      %s39 = sadd.s32 %s32, 1
      %s40 = ssub.s32 %s32, %s39
      %p41 = scmp.eq.s32.totalorder %s40, 0
      %s43 = sadd.s32 %s42, 1
      %s44 = scalar_select %p41, %s42, %s43
      %p47 = pneg %p41
      %p48 = scmp.eq.s32.totalorder %s32, 1
      %p49 = por %p47, %p48
      %p50 = scmp.ne.s32.totalorder %s42, %s45
      %p51 = scmp.eq.s32.totalorder %s32, 0
      %p52 = por %p50, %p51
      %p53 = scmp.ne.s32.totalorder %s42, %s45
      %p54 = scmp.eq.s32.totalorder %s37, 1
      %p55 = por %p53, %p54
      %p56 = scmp.ne.s32.totalorder %s45, %s46
      %p57 = scmp.eq.s32.totalorder %s37, 0
      %p58 = por %p56, %p57
      %p59 = scmp.ne.s32.totalorder %s45, %s46
      %p60 = scmp.eq.s32.totalorder %s38, 1
      %p61 = por %p59, %p60
      %p63 = scmp.ne.s32.totalorder %s46, %s62
      %p64 = scmp.eq.s32.totalorder %s38, 0
      %p65 = por %p63, %p64
      %s66 = ssub.s32 %s32, %s39
      %p67 = scmp.eq.s32.totalorder %s66, 0
      %s69 = sadd.s32 %s68, 1
      %s70 = scalar_select %p67, %s68, %s69
      %p73 = pneg %p67
      %p74 = scmp.eq.s32.totalorder %s32, 1
      %p75 = por %p73, %p74
      %p76 = scmp.ne.s32.totalorder %s68, %s71
      %p77 = scmp.eq.s32.totalorder %s32, 0
      %p78 = por %p76, %p77
      %p79 = scmp.ne.s32.totalorder %s68, %s71
      %p80 = scmp.eq.s32.totalorder %s37, 1
      %p81 = por %p79, %p80
      %p82 = scmp.ne.s32.totalorder %s71, %s72
      %p83 = scmp.eq.s32.totalorder %s37, 0
      %p84 = por %p82, %p83
      %p85 = scmp.ne.s32.totalorder %s71, %s72
      %p86 = scmp.eq.s32.totalorder %s38, 1
      %p87 = por %p85, %p86
      %p89 = scmp.ne.s32.totalorder %s72, %s88
      %p90 = scmp.eq.s32.totalorder %s38, 0
      %p91 = por %p89, %p90
      %s93 = sadd.s32 %s92, 1
      %p96 = scmp.eq.s32.totalorder %s32, 1
      %p97 = scmp.ne.s32.totalorder %s92, %s94
      %p98 = scmp.eq.s32.totalorder %s32, 0
      %p99 = por %p97, %p98
      %p100 = scmp.ne.s32.totalorder %s92, %s94
      %p101 = scmp.eq.s32.totalorder %s37, 1
      %p102 = por %p100, %p101
      %p103 = scmp.ne.s32.totalorder %s94, %s95
      %p104 = scmp.eq.s32.totalorder %s37, 0
      %p105 = por %p103, %p104
      %p106 = scmp.ne.s32.totalorder %s94, %s95
      %p107 = scmp.eq.s32.totalorder %s38, 1
      %p108 = por %p106, %p107
      %p110 = scmp.ne.s32.totalorder %s95, %s109
      %p111 = scmp.eq.s32.totalorder %s38, 0
      %p112 = por %p110, %p111
      %s114 = sadd.s32 %s113, 1
      %p117 = scmp.eq.s32.totalorder %s32, 1
      %p118 = scmp.ne.s32.totalorder %s113, %s115
      %p119 = scmp.eq.s32.totalorder %s32, 0
      %p120 = por %p118, %p119
      %p121 = scmp.ne.s32.totalorder %s113, %s115
      %p122 = scmp.eq.s32.totalorder %s37, 1
      %p123 = por %p121, %p122
      %p124 = scmp.ne.s32.totalorder %s115, %s116
      %p125 = scmp.eq.s32.totalorder %s37, 0
      %p126 = por %p124, %p125
      %p127 = scmp.ne.s32.totalorder %s115, %s116
      %p128 = scmp.eq.s32.totalorder %s38, 1
      %p129 = por %p127, %p128
      %p131 = scmp.ne.s32.totalorder %s116, %s130
      %p132 = scmp.eq.s32.totalorder %s38, 0
      %p133 = por %p131, %p132
      %s135 = sadd.s32 %s134, 1
      %p138 = scmp.eq.s32.totalorder %s32, 1
      %p139 = scmp.ne.s32.totalorder %s134, %s136
      %p140 = scmp.eq.s32.totalorder %s32, 0
      %p141 = por %p139, %p140
      %p142 = scmp.ne.s32.totalorder %s134, %s136
      %p143 = scmp.eq.s32.totalorder %s37, 1
      %p144 = por %p142, %p143
      %p145 = scmp.ne.s32.totalorder %s136, %s137
      %p146 = scmp.eq.s32.totalorder %s37, 0
      %p147 = por %p145, %p146
      %p148 = scmp.ne.s32.totalorder %s136, %s137
      %p149 = scmp.eq.s32.totalorder %s38, 1
      %p150 = por %p148, %p149
      %p152 = scmp.ne.s32.totalorder %s137, %s151
      %p153 = scmp.eq.s32.totalorder %s38, 0
      %p154 = por %p152, %p153
      %s156 = sadd.s32 %s155, 1
      %p159 = scmp.eq.s32.totalorder %s32, 1
      %p160 = scmp.ne.s32.totalorder %s155, %s157
      %p161 = scmp.eq.s32.totalorder %s32, 0
      %p162 = por %p160, %p161
      %p163 = scmp.ne.s32.totalorder %s155, %s157
      %p164 = scmp.eq.s32.totalorder %s37, 1
      %p165 = por %p163, %p164
      %p166 = scmp.ne.s32.totalorder %s157, %s158
      %p167 = scmp.eq.s32.totalorder %s37, 0
      %p168 = por %p166, %p167
      %p169 = scmp.ne.s32.totalorder %s157, %s158
      %p170 = scmp.eq.s32.totalorder %s38, 1
      %p171 = por %p169, %p170
      %p173 = scmp.ne.s32.totalorder %s158, %s172
      %p174 = scmp.eq.s32.totalorder %s38, 0
      %p175 = por %p173, %p174
      %s177 = sadd.s32 %s176, 1
      %p180 = scmp.eq.s32.totalorder %s32, 1
      %p181 = scmp.ne.s32.totalorder %s176, %s178
      %p182 = scmp.eq.s32.totalorder %s32, 0
      %p183 = por %p181, %p182
      %p184 = scmp.ne.s32.totalorder %s176, %s178
      %p185 = scmp.eq.s32.totalorder %s37, 1
      %p186 = por %p184, %p185
      %p187 = scmp.ne.s32.totalorder %s178, %s179
      %p188 = scmp.eq.s32.totalorder %s37, 0
      %p189 = por %p187, %p188
      %p190 = scmp.ne.s32.totalorder %s178, %s179
      %p191 = scmp.eq.s32.totalorder %s38, 1
      %p192 = por %p190, %p191
      %p194 = scmp.ne.s32.totalorder %s179, %s193
      %p195 = scmp.eq.s32.totalorder %s38, 0
      %p196 = por %p194, %p195
      %s198 = sadd.s32 %s197, 1
      %p201 = scmp.eq.s32.totalorder %s32, 1
      %p202 = scmp.ne.s32.totalorder %s197, %s199
      %p203 = scmp.eq.s32.totalorder %s32, 0
      %p204 = por %p202, %p203
      %p205 = scmp.ne.s32.totalorder %s197, %s199
      %p206 = scmp.eq.s32.totalorder %s37, 1
      %p207 = por %p205, %p206
      %p208 = scmp.ne.s32.totalorder %s199, %s200
      %p209 = scmp.eq.s32.totalorder %s37, 0
      %p210 = por %p208, %p209
      %p211 = scmp.ne.s32.totalorder %s199, %s200
      %p212 = scmp.eq.s32.totalorder %s38, 1
      %p213 = por %p211, %p212
      %p215 = scmp.ne.s32.totalorder %s200, %s214
      %p216 = scmp.eq.s32.totalorder %s38, 0
      %p217 = por %p215, %p216
      %s219 = sadd.s32 %s218, 1
      %p222 = scmp.eq.s32.totalorder %s32, 1
      %p223 = scmp.ne.s32.totalorder %s218, %s220
      %p224 = scmp.eq.s32.totalorder %s32, 0
      %p225 = por %p223, %p224
      %p226 = scmp.ne.s32.totalorder %s218, %s220
      %p227 = scmp.eq.s32.totalorder %s37, 1
      %p228 = por %p226, %p227
      %p229 = scmp.ne.s32.totalorder %s220, %s221
      %p230 = scmp.eq.s32.totalorder %s37, 0
      %p231 = por %p229, %p230
      %p232 = scmp.ne.s32.totalorder %s220, %s221
      %p233 = scmp.eq.s32.totalorder %s38, 1
      %p234 = por %p232, %p233
      %p236 = scmp.ne.s32.totalorder %s221, %s235
      %p237 = scmp.eq.s32.totalorder %s38, 0
      %p238 = por %p236, %p237
      %s240 = sadd.s32 %s239, 1
      %p243 = scmp.eq.s32.totalorder %s32, 1
      %p244 = scmp.ne.s32.totalorder %s239, %s241
      %p245 = scmp.eq.s32.totalorder %s32, 0
      %p246 = por %p244, %p245
      %p247 = scmp.ne.s32.totalorder %s239, %s241
      %p248 = scmp.eq.s32.totalorder %s37, 1
      %p249 = por %p247, %p248
      %p250 = scmp.ne.s32.totalorder %s241, %s242
      %p251 = scmp.eq.s32.totalorder %s37, 0
      %p252 = por %p250, %p251
      %p253 = scmp.ne.s32.totalorder %s241, %s242
      %p254 = scmp.eq.s32.totalorder %s38, 1
      %p255 = por %p253, %p254
      %p257 = scmp.ne.s32.totalorder %s242, %s256
      %p258 = scmp.eq.s32.totalorder %s38, 0
      %p259 = por %p257, %p258
      %s261 = sadd.s32 %s260, 1
      %p264 = scmp.eq.s32.totalorder %s32, 1
      %p265 = scmp.ne.s32.totalorder %s260, %s262
      %p266 = scmp.eq.s32.totalorder %s32, 0
      %p267 = por %p265, %p266
      %p268 = scmp.ne.s32.totalorder %s260, %s262
      %p269 = scmp.eq.s32.totalorder %s37, 1
      %p270 = por %p268, %p269
      %p271 = scmp.ne.s32.totalorder %s262, %s263
      %p272 = scmp.eq.s32.totalorder %s37, 0
      %p273 = por %p271, %p272
      %p274 = scmp.ne.s32.totalorder %s262, %s263
      %p275 = scmp.eq.s32.totalorder %s38, 1
      %p276 = por %p274, %p275
      %p278 = scmp.ne.s32.totalorder %s263, %s277
      %p279 = scmp.eq.s32.totalorder %s38, 0
      %p280 = por %p278, %p279
      %s282 = sadd.s32 %s281, 1
      %p285 = scmp.eq.s32.totalorder %s32, 1
      %p286 = scmp.ne.s32.totalorder %s281, %s283
      %p287 = scmp.eq.s32.totalorder %s32, 0
      %p288 = por %p286, %p287
      %p289 = scmp.ne.s32.totalorder %s281, %s283
      %p290 = scmp.eq.s32.totalorder %s37, 1
      %p291 = por %p289, %p290
      %p292 = scmp.ne.s32.totalorder %s283, %s284
      %p293 = scmp.eq.s32.totalorder %s37, 0
      %p294 = por %p292, %p293
      %p295 = scmp.ne.s32.totalorder %s283, %s284
      %p296 = scmp.eq.s32.totalorder %s38, 1
      %p297 = por %p295, %p296
      %p299 = scmp.ne.s32.totalorder %s284, %s298
      %p300 = scmp.eq.s32.totalorder %s38, 0
      %p301 = por %p299, %p300
      %s302 = ssub.s32 %s32, %s39
      %p303 = scmp.eq.s32.totalorder %s302, 0
      %s305 = sadd.s32 %s304, 1
      %s306 = scalar_select %p303, %s304, %s305
      %p309 = pneg %p303
      %p310 = scmp.eq.s32.totalorder %s32, 1
      %p311 = por %p309, %p310
      %p312 = scmp.ne.s32.totalorder %s304, %s307
      %p313 = scmp.eq.s32.totalorder %s32, 0
      %p314 = por %p312, %p313
      %p315 = scmp.ne.s32.totalorder %s304, %s307
      %p316 = scmp.eq.s32.totalorder %s37, 1
      %p317 = por %p315, %p316
      %p318 = scmp.ne.s32.totalorder %s307, %s308
      %p319 = scmp.eq.s32.totalorder %s37, 0
      %p320 = por %p318, %p319
      %p321 = scmp.ne.s32.totalorder %s307, %s308
      %p322 = scmp.eq.s32.totalorder %s38, 1
      %p323 = por %p321, %p322
      %p325 = scmp.ne.s32.totalorder %s308, %s324
      %p326 = scmp.eq.s32.totalorder %s38, 0
      %p327 = por %p325, %p326
      %s328 = ssub.s32 %s32, %s39
      %p329 = scmp.eq.s32.totalorder %s328, 0
      %s331 = sadd.s32 %s330, 1
      %s332 = scalar_select %p329, %s330, %s331
      %p335 = pneg %p329
      %p336 = scmp.eq.s32.totalorder %s32, 1
      %p337 = por %p335, %p336
      %p338 = scmp.ne.s32.totalorder %s330, %s333
      %p339 = scmp.eq.s32.totalorder %s32, 0
      %p340 = por %p338, %p339
      %p341 = scmp.ne.s32.totalorder %s330, %s333
      %p342 = scmp.eq.s32.totalorder %s37, 1
      %p343 = por %p341, %p342
      %p344 = scmp.ne.s32.totalorder %s333, %s334
      %p345 = scmp.eq.s32.totalorder %s37, 0
      %p346 = por %p344, %p345
      %p347 = scmp.ne.s32.totalorder %s333, %s334
      %p348 = scmp.eq.s32.totalorder %s38, 1
      %p349 = por %p347, %p348
      %p351 = scmp.ne.s32.totalorder %s334, %s350
      %p352 = scmp.eq.s32.totalorder %s38, 0
      %p353 = por %p351, %p352
      %p354 = scmp.le.s32.totalorder 1, %s32
      %p355 = scmp.lt.s32.totalorder %s32, 3
      %p356 = pnand %p354, %p355
      %p357 = pneg %p356
      // Predicated region
      $region9: #{tpu_custom_call.1} parent=5 // pred_check
        _
      $region10: #{tpu_custom_call.1} parent=5 // pred_check_branch
        %359 = sbr.rel (%p356) target = $region12
      $region11: #{tpu_custom_call.1} parent=5 // pred_region
        %s360 = ssub.s32 %s32, 1
        // Predicated region
        $region13: #{tpu_custom_call.1} parent=11 // pred_check
          %p361 = pneg %p105
        $region14: #{tpu_custom_call.1} parent=11 // pred_check_branch
          %363 = sbr.rel (%p361) target = $region16
        $region15: #{tpu_custom_call.1} parent=11 // pred_region
          %s365 = ssub.s32 256, 256
          %366 = vsyncadd [#allocation8], %s365
          %s367 = sshll.u32 [#allocation7], 4
          %s368 = int_to_ptr.vmem [resolvable:$true] %s367
          %373 = dma.hbm_to_vmem [thread:$0]  %s2, 256, %s368, [#allocation8], 64, 64, 4
        $region16: #{tpu_custom_call.1} parent=11 // pred_fallthru
          _
        // Predicated region
        $region17: #{tpu_custom_call.1} parent=11 // pred_check
          %p374 = pneg %p126
        $region18: #{tpu_custom_call.1} parent=11 // pred_check_branch
          %376 = sbr.rel (%p374) target = $region20
        $region19: #{tpu_custom_call.1} parent=11 // pred_region
          %s378 = ssub.s32 256, 256
          %379 = vsyncadd [#allocation8], %s378
          %s380 = sshll.u32 [#allocation9], 4
          %s381 = int_to_ptr.vmem [resolvable:$true] %s380
          %386 = dma.hbm_to_vmem [thread:$0]  %s3, 256, %s381, [#allocation8], 64, 64, 4
        $region20: #{tpu_custom_call.1} parent=11 // pred_fallthru
          _
        // Predicated region
        $region21: #{tpu_custom_call.1} parent=11 // pred_check
          %p387 = pneg %p147
        $region22: #{tpu_custom_call.1} parent=11 // pred_check_branch
          %389 = sbr.rel (%p387) target = $region24
        $region23: #{tpu_custom_call.1} parent=11 // pred_region
          _
        $region24: #{tpu_custom_call.1} parent=11 // pred_fallthru
          _
        // Predicated region
        $region25: #{tpu_custom_call.1} parent=11 // pred_check
          %p390 = pneg %p168
        $region26: #{tpu_custom_call.1} parent=11 // pred_check_branch
          %392 = sbr.rel (%p390) target = $region28
        $region27: #{tpu_custom_call.1} parent=11 // pred_region
          %s394 = ssub.s32 256, 256
          %395 = vsyncadd [#allocation11], %s394
          %s396 = sshll.u32 [#allocation10], 4
          %s397 = int_to_ptr.vmem [resolvable:$true] %s396
          %402 = dma.hbm_to_vmem [thread:$0]  %s5, 256, %s397, [#allocation11], 64, 64, 4
        $region28: #{tpu_custom_call.1} parent=11 // pred_fallthru
          _
        // Predicated region
        $region29: #{tpu_custom_call.1} parent=11 // pred_check
          %p403 = pneg %p189
        $region30: #{tpu_custom_call.1} parent=11 // pred_check_branch
          %405 = sbr.rel (%p403) target = $region32
        $region31: #{tpu_custom_call.1} parent=11 // pred_region
          %s407 = ssub.s32 256, 256
          %408 = vsyncadd [#allocation11], %s407
          %s409 = sshll.u32 [#allocation12], 4
          %s410 = int_to_ptr.vmem [resolvable:$true] %s409
          %415 = dma.hbm_to_vmem [thread:$0]  %s6, 256, %s410, [#allocation11], 64, 64, 4
        $region32: #{tpu_custom_call.1} parent=11 // pred_fallthru
          _
        // Predicated region
        $region33: #{tpu_custom_call.1} parent=11 // pred_check
          %p416 = pneg %p210
        $region34: #{tpu_custom_call.1} parent=11 // pred_check_branch
          %418 = sbr.rel (%p416) target = $region36
        $region35: #{tpu_custom_call.1} parent=11 // pred_region
          _
        $region36: #{tpu_custom_call.1} parent=11 // pred_fallthru
          _
        // Predicated region
        $region37: #{tpu_custom_call.1} parent=11 // pred_check
          %p419 = pneg %p231
        $region38: #{tpu_custom_call.1} parent=11 // pred_check_branch
          %421 = sbr.rel (%p419) target = $region40
        $region39: #{tpu_custom_call.1} parent=11 // pred_region
          _
        $region40: #{tpu_custom_call.1} parent=11 // pred_fallthru
          _
        // Predicated region
        $region41: #{tpu_custom_call.1} parent=11 // pred_check
          %p422 = pneg %p252
        $region42: #{tpu_custom_call.1} parent=11 // pred_check_branch
          %424 = sbr.rel (%p422) target = $region44
        $region43: #{tpu_custom_call.1} parent=11 // pred_region
          _
        $region44: #{tpu_custom_call.1} parent=11 // pred_fallthru
          _
        // Predicated region
        $region45: #{tpu_custom_call.1} parent=11 // pred_check
          %p425 = pneg %p273
        $region46: #{tpu_custom_call.1} parent=11 // pred_check_branch
          %427 = sbr.rel (%p425) target = $region48
        $region47: #{tpu_custom_call.1} parent=11 // pred_region
          %s429 = ssub.s32 512, 512
          %430 = vsyncadd [#allocation14], %s429
          %s431 = sshll.u32 [#allocation13], 4
          %s432 = int_to_ptr.vmem [resolvable:$true] %s431
          %437 = dma.hbm_to_vmem [thread:$0]  %s10, 512, %s432, [#allocation14], 64, 64, 4
        $region48: #{tpu_custom_call.1} parent=11 // pred_fallthru
          _
        // Predicated region
        $region49: #{tpu_custom_call.1} parent=11 // pred_check
          %p438 = pneg %p294
        $region50: #{tpu_custom_call.1} parent=11 // pred_check_branch
          %440 = sbr.rel (%p438) target = $region52
        $region51: #{tpu_custom_call.1} parent=11 // pred_region
          _
        $region52: #{tpu_custom_call.1} parent=11 // pred_fallthru
          _
      $region12: #{tpu_custom_call.1} parent=5 // pred_fallthru
        _
      %p441 = scmp.lt.s32.totalorder %s32, 2
      // Predicated region
      $region53: #{tpu_custom_call.1} parent=5 // pred_check
        %p442 = pneg %p441
      $region54: #{tpu_custom_call.1} parent=5 // pred_check_branch
        %444 = sbr.rel (%p442) target = $region56
      $region55: #{tpu_custom_call.1} parent=5 // pred_region
        // Predicated region
        $region57: #{tpu_custom_call.1} parent=55 // pred_check
          %p445 = pneg %p52
        $region58: #{tpu_custom_call.1} parent=55 // pred_check_branch
          %447 = sbr.rel (%p445) target = $region60
        $region59: #{tpu_custom_call.1} parent=55 // pred_region
          %s448 = sand.u32 %s42, 1
          %s449 = scalar_lea.sflag [#allocation5], %s448
          %s450 = sand.u32 %s42, 1
          %s451 = smul.addr %s450, 4
          %s452 = scalar_lea.vmem [#allocation4], %s451
          %s454 = ssub.s32 64, 64
          %455 = vsyncadd %s449, %s454
          %s456 = smul.addr %s32, 64
          %s457 = scalar_lea.hbm %s0, %s456
          %s459 = sshll.u32 %s452, 4
          %s460 = int_to_ptr.vmem [resolvable:$true] %s459
          %462 = dma.hbm_to_vmem [thread:$0]  %s457, 64, %s460, %s449
        $region60: #{tpu_custom_call.1} parent=55 // pred_fallthru
          _
        // Predicated region
        $region61: #{tpu_custom_call.1} parent=55 // pred_check
          %p463 = pneg %p78
        $region62: #{tpu_custom_call.1} parent=55 // pred_check_branch
          %465 = sbr.rel (%p463) target = $region64
        $region63: #{tpu_custom_call.1} parent=55 // pred_region
          %p466 = scmp.lt.s32.totalorder %s32, 1
          %s467 = scalar_select %p466, %s32, 1
          %s468 = scalar_lea.vmem %s1, %s467
        $region64: #{tpu_custom_call.1} parent=55 // pred_fallthru
          _
      $region56: #{tpu_custom_call.1} parent=5 // pred_fallthru
        _
      %p469 = scmp.le.s32.totalorder 1, %s32
      %p470 = scmp.lt.s32.totalorder %s32, 3
      %p471 = pnand %p469, %p470
      %p472 = pneg %p471
      // Predicated region
      $region65: #{tpu_custom_call.1} parent=5 // pred_check
        _
      $region66: #{tpu_custom_call.1} parent=5 // pred_check_branch
        %474 = sbr.rel (%p471) target = $region68
      $region67: #{tpu_custom_call.1} parent=5 // pred_region
        %s475 = ssub.s32 %s32, 1
        %s476 = sand.u32 %s45, 1
        %s477 = scalar_lea.sflag [#allocation5], %s476
        %s478 = sand.u32 %s45, 1
        %s479 = smul.addr %s478, 4
        %s480 = scalar_lea.vmem [#allocation4], %s479
        // Predicated region
        $region69: #{tpu_custom_call.1} parent=67 // pred_check
          %p481 = pneg %p58
        $region70: #{tpu_custom_call.1} parent=67 // pred_check_branch
          %483 = sbr.rel (%p481) target = $region72
        $region71: #{tpu_custom_call.1} parent=67 // pred_region
          %484 = dma.done %s477, 64
        $region72: #{tpu_custom_call.1} parent=67 // pred_fallthru
          _
        // Predicated region
        $region73: #{tpu_custom_call.1} parent=67 // pred_check
          %p485 = pneg %p105
        $region74: #{tpu_custom_call.1} parent=67 // pred_check_branch
          %487 = sbr.rel (%p485) target = $region76
        $region75: #{tpu_custom_call.1} parent=67 // pred_region
          %488 = dma.done [#allocation8], 256
        $region76: #{tpu_custom_call.1} parent=67 // pred_fallthru
          _
        // Predicated region
        $region77: #{tpu_custom_call.1} parent=67 // pred_check
          %p489 = pneg %p126
        $region78: #{tpu_custom_call.1} parent=67 // pred_check_branch
          %491 = sbr.rel (%p489) target = $region80
        $region79: #{tpu_custom_call.1} parent=67 // pred_region
          %492 = dma.done [#allocation8], 256
        $region80: #{tpu_custom_call.1} parent=67 // pred_fallthru
          _
        // Predicated region
        $region81: #{tpu_custom_call.1} parent=67 // pred_check
          %p493 = pneg %p168
        $region82: #{tpu_custom_call.1} parent=67 // pred_check_branch
          %495 = sbr.rel (%p493) target = $region84
        $region83: #{tpu_custom_call.1} parent=67 // pred_region
          %496 = dma.done [#allocation11], 256
        $region84: #{tpu_custom_call.1} parent=67 // pred_fallthru
          _
        // Predicated region
        $region85: #{tpu_custom_call.1} parent=67 // pred_check
          %p497 = pneg %p189
        $region86: #{tpu_custom_call.1} parent=67 // pred_check_branch
          %499 = sbr.rel (%p497) target = $region88
        $region87: #{tpu_custom_call.1} parent=67 // pred_region
          %500 = dma.done [#allocation11], 256
        $region88: #{tpu_custom_call.1} parent=67 // pred_fallthru
          _
        // Predicated region
        $region89: #{tpu_custom_call.1} parent=67 // pred_check
          %p501 = pneg %p273
        $region90: #{tpu_custom_call.1} parent=67 // pred_check_branch
          %503 = sbr.rel (%p501) target = $region92
        $region91: #{tpu_custom_call.1} parent=67 // pred_region
          %504 = dma.done [#allocation14], 512
        $region92: #{tpu_custom_call.1} parent=67 // pred_fallthru
          _
        %s505 = sand.u32 %s45, 1
        %s506 = scalar_lea.sflag [#allocation5], %s505
        %s507 = sand.u32 %s45, 1
        %s508 = smul.addr %s507, 4
        %s509 = scalar_lea.vmem [#allocation4], %s508
        %p510 = pneg %p58
        %p511 = pneg %p55
        %p512 = scmp.lt.s32.totalorder %s37, 1
        %s513 = scalar_select %p512, %s37, 1
        %s514 = scalar_lea.vmem %s1, %s513
        %p515 = pneg %p84
        %p516 = pneg %p81
        %p517 = pneg %p105
        %p518 = pneg %p102
        %p519 = pneg %p126
        %p520 = pneg %p123
        %p521 = pneg %p147
        %p522 = pneg %p144
        %p523 = pneg %p168
        %p524 = pneg %p165
        %p525 = pneg %p189
        %p526 = pneg %p186
        %p527 = pneg %p210
        %p528 = pneg %p207
        %p529 = pneg %p231
        %p530 = pneg %p228
        %p531 = pneg %p252
        %p532 = pneg %p249
        %p533 = pneg %p273
        %p534 = pneg %p270
        %p535 = pneg %p294
        %p536 = pneg %p291
        %p537 = pneg %p320
        %p538 = pneg %p317
        %s539 = sand.u32 %s307, 1
        %s540 = scalar_lea.sflag [#allocation6], %s539
        %s541 = sand.u32 %s307, 1
        %s542 = smul.addr %s541, 8
        %s543 = scalar_lea.vmem [#allocation15], %s542
        %p544 = pneg %p346
        %p545 = pneg %p343
        %s546 = sand.u32 %s333, 1
        %s547 = scalar_lea.sflag [#allocation17], %s546
        %s548 = sand.u32 %s333, 1
        %s549 = scalar_lea.vmem [#allocation16], %s548
        %p550 = scmp.lt.s32.totalorder %s37, 1
        %s551 = scalar_select %p550, %s37, 1
        %s552 = scalar_lea.vmem %s1, %s551
        %v554 = vld [vmem:[%s552] sm:$0x1]
        %v555 = vld [vmem:[#allocation9] sm:$0xf]
        %v556 = vld [vmem:[#allocation9 + $0x4] sm:$0xf]
        %v557 = vld [vmem:[#allocation9 + $0x8] sm:$0xf]
        %v558 = vld [vmem:[#allocation9 + $0xc] sm:$0xf]
        %v559 = vld [vmem:[#allocation12] sm:$0xf]
        %v560 = vld [vmem:[#allocation12 + $0x4] sm:$0xf]
        %v561 = vld [vmem:[#allocation12 + $0x8] sm:$0xf]
        %v562 = vld [vmem:[#allocation12 + $0xc] sm:$0xf]
        %v563 = vld [vmem:[%s480] sm:$0xf]
        %v564 = vld [vmem:[#allocation7] sm:$0xf]
        %v565 = vld [vmem:[#allocation7 + $0x4] sm:$0xf]
        %v566 = vld [vmem:[#allocation7 + $0x8] sm:$0xf]
        %v567 = vld [vmem:[#allocation7 + $0xc] sm:$0xf]
        %v568 = vld [vmem:[%s4] sm:$0x1]
        %v570 = vlaneseq
        %v571 = vshrl.u32 %v570, 7
        %v572 = vsub.s32 0, %v571
        %v573 = vrot.slane %v568, %v572
        %v579 = vunpack.c.l.b16 %v564
        %v580 = vunpack.c.l.b16 %v565
        %v581 = vunpack.c.l.b16 %v566
        %v582 = vunpack.c.l.b16 %v567
        %v583 = vpack.c.b16 %v580, %v579
        %v584 = vpack.c.b16 %v582, %v581
        %vm587 = vcmask 261120
        %v589 = vsel %vm587, %v563, 0
        %591 = vmatprep.subr.bf16.mxu0 0
        %592 = vmatpush1.bf16.msra.mxu0 %v583
        %593 = vmatprep.subr.bf16.mxu0 0
        %594 = vmatpush1.bf16.msra.mxu0 %v584
        %595 = vmatprep.subr.bf16.mxu0 0
        %596 = vmatpush1.bf16.msra.mxu0 0
        %597 = vmatprep.subr.bf16.mxu0 0
        %598 = vmatpush1.bf16.msra.mxu0 0
        %599 = vmatprep.subr.bf16.mxu0 0
        %600 = vmatpush1.bf16.msra.mxu0 0
        %601 = vmatprep.subr.bf16.mxu0 0
        %602 = vmatpush1.bf16.msra.mxu0 0
        %603 = vmatprep.subr.bf16.mxu0 0
        %604 = vmatpush1.bf16.msra.mxu0 0
        %605 = vmatprep.subr.bf16.mxu0 0
        %606 = vmatpush1.bf16.msra.mxu0 0
        %607 = vmatprep.subr.bf16.mxu0 0
        %608 = vmatpush1.bf16.msra.mxu0 0
        %609 = vmatprep.subr.bf16.mxu0 0
        %610 = vmatpush1.bf16.msra.mxu0 0
        %611 = vmatprep.subr.bf16.mxu0 0
        %612 = vmatpush1.bf16.msra.mxu0 0
        %613 = vmatprep.subr.bf16.mxu0 0
        %614 = vmatpush1.bf16.msra.mxu0 0
        %615 = vmatprep.subr.bf16.mxu0 0
        %616 = vmatpush1.bf16.msra.mxu0 0
        %617 = vmatprep.subr.bf16.mxu0 0
        %618 = vmatpush1.bf16.msra.mxu0 0
        %619 = vmatprep.subr.bf16.mxu0 0
        %620 = vmatpush1.bf16.msra.mxu0 0
        %621 = vmatprep.subr.bf16.mxu0 0
        %622 = vmatpush1.bf16.msra.mxu0 0
        %623 = vmatprep.mubr.bf16.mxu0 0
        %624 = vmatmul.mubr.bf16.gmra.mrb[0].mxu0 %v589
        %v625 = vpop.f32.mrb[0].mxu0
        %v626 = vadd.f32 %v573, %v625
        %v627 = vpop.f32.mrb[0].mxu0
        %v628 = vpop.f32.mrb[0].mxu0
        %v629 = vpop.f32.mrb[0].mxu0
        %630 = vdwg.mxu0
        %v631 = vld [vmem:[#allocation10] sm:$0xf]
        %v632 = vld [vmem:[#allocation10 + $0x4] sm:$0xf]
        %v633 = vld [vmem:[#allocation10 + $0x8] sm:$0xf]
        %v634 = vld [vmem:[#allocation10 + $0xc] sm:$0xf]
        %v635 = vld [vmem:[%s7] sm:$0x1]
        %v637 = vlaneseq
        %v638 = vshrl.u32 %v637, 7
        %v639 = vsub.s32 0, %v638
        %v640 = vrot.slane %v635, %v639
        %v646 = vunpack.c.l.b16 %v631
        %v647 = vunpack.c.l.b16 %v632
        %v648 = vunpack.c.l.b16 %v633
        %v649 = vunpack.c.l.b16 %v634
        %v650 = vpack.c.b16 %v647, %v646
        %v651 = vpack.c.b16 %v649, %v648
        %654 = vmatprep.subr.bf16.mxu0 0
        %655 = vmatpush1.bf16.msra.mxu0 %v650
        %656 = vmatprep.subr.bf16.mxu0 0
        %657 = vmatpush1.bf16.msra.mxu0 %v651
        %658 = vmatprep.subr.bf16.mxu0 0
        %659 = vmatpush1.bf16.msra.mxu0 0
        %660 = vmatprep.subr.bf16.mxu0 0
        %661 = vmatpush1.bf16.msra.mxu0 0
        %662 = vmatprep.subr.bf16.mxu0 0
        %663 = vmatpush1.bf16.msra.mxu0 0
        %664 = vmatprep.subr.bf16.mxu0 0
        %665 = vmatpush1.bf16.msra.mxu0 0
        %666 = vmatprep.subr.bf16.mxu0 0
        %667 = vmatpush1.bf16.msra.mxu0 0
        %668 = vmatprep.subr.bf16.mxu0 0
        %669 = vmatpush1.bf16.msra.mxu0 0
        %670 = vmatprep.subr.bf16.mxu0 0
        %671 = vmatpush1.bf16.msra.mxu0 0
        %672 = vmatprep.subr.bf16.mxu0 0
        %673 = vmatpush1.bf16.msra.mxu0 0
        %674 = vmatprep.subr.bf16.mxu0 0
        %675 = vmatpush1.bf16.msra.mxu0 0
        %676 = vmatprep.subr.bf16.mxu0 0
        %677 = vmatpush1.bf16.msra.mxu0 0
        %678 = vmatprep.subr.bf16.mxu0 0
        %679 = vmatpush1.bf16.msra.mxu0 0
        %680 = vmatprep.subr.bf16.mxu0 0
        %681 = vmatpush1.bf16.msra.mxu0 0
        %682 = vmatprep.subr.bf16.mxu0 0
        %683 = vmatpush1.bf16.msra.mxu0 0
        %684 = vmatprep.subr.bf16.mxu0 0
        %685 = vmatpush1.bf16.msra.mxu0 0
        %686 = vmatprep.mubr.bf16.mxu0 0
        %687 = vmatmul.mubr.bf16.gmra.mrb[0].mxu0 %v589
        %v688 = vpop.f32.mrb[0].mxu0
        %v689 = vadd.f32 %v640, %v688
        %v690 = vpop.f32.mrb[0].mxu0
        %v691 = vpop.f32.mrb[0].mxu0
        %v692 = vpop.f32.mrb[0].mxu0
        %693 = vdwg.mxu0
        %v698 = vunpack.c.l.b16 %v555
        %v699 = vunpack.c.l.b16 %v556
        %v700 = vunpack.c.l.b16 %v557
        %v701 = vunpack.c.l.b16 %v558
        %v702 = vpack.c.b16 %v699, %v698
        %v703 = vpack.c.b16 %v701, %v700
        %v707 = vsel %vm587, 0, 0
        %709 = vmatprep.subr.bf16.mxu0 0
        %710 = vmatpush1.bf16.msra.mxu0 %v702
        %711 = vmatprep.subr.bf16.mxu0 0
        %712 = vmatpush1.bf16.msra.mxu0 %v703
        %713 = vmatprep.subr.bf16.mxu0 0
        %714 = vmatpush1.bf16.msra.mxu0 0
        %715 = vmatprep.subr.bf16.mxu0 0
        %716 = vmatpush1.bf16.msra.mxu0 0
        %717 = vmatprep.subr.bf16.mxu0 0
        %718 = vmatpush1.bf16.msra.mxu0 0
        %719 = vmatprep.subr.bf16.mxu0 0
        %720 = vmatpush1.bf16.msra.mxu0 0
        %721 = vmatprep.subr.bf16.mxu0 0
        %722 = vmatpush1.bf16.msra.mxu0 0
        %723 = vmatprep.subr.bf16.mxu0 0
        %724 = vmatpush1.bf16.msra.mxu0 0
        %725 = vmatprep.subr.bf16.mxu0 0
        %726 = vmatpush1.bf16.msra.mxu0 0
        %727 = vmatprep.subr.bf16.mxu0 0
        %728 = vmatpush1.bf16.msra.mxu0 0
        %729 = vmatprep.subr.bf16.mxu0 0
        %730 = vmatpush1.bf16.msra.mxu0 0
        %731 = vmatprep.subr.bf16.mxu0 0
        %732 = vmatpush1.bf16.msra.mxu0 0
        %733 = vmatprep.subr.bf16.mxu0 0
        %734 = vmatpush1.bf16.msra.mxu0 0
        %735 = vmatprep.subr.bf16.mxu0 0
        %736 = vmatpush1.bf16.msra.mxu0 0
        %737 = vmatprep.subr.bf16.mxu0 0
        %738 = vmatpush1.bf16.msra.mxu0 0
        %739 = vmatprep.subr.bf16.mxu0 0
        %740 = vmatpush1.bf16.msra.mxu0 0
        %741 = vmatprep.mubr.bf16.mxu0 0
        %742 = vmatmul.mubr.bf16.gmra.mrb[0].mxu0 %v707
        %v743 = vpop.f32.mrb[0].mxu0
        %v744 = vadd.f32 0.0, %v743
        %v745 = vpop.f32.mrb[0].mxu0
        %v746 = vpop.f32.mrb[0].mxu0
        %v747 = vpop.f32.mrb[0].mxu0
        %748 = vdwg.mxu0
        %v749 = vadd.f32 %v626, %v744
        %v750 = vxor.u32 %v749, 2147483648
        %v751 = vmul.f32 %v750, 1.442695
        %v752 = vpow.pop %v751
        %v753 = vadd.f32 %v752, 1.0
        %v754 = vrcp.pop %v753
        %v755 = vmul.f32 1.0, %v754
        %v756 = vtanh.pop %v749
        %v757 = vmul.f32 %v755, 0.0
        %759 = vrot.lane.b32.xlu0 %v756, 64
        %v760 = vpop.permute.xlu0 %759
        %v762 = vmul.f32 %v755, %v760
        %764 = vrot.lane.b32.xlu0 %v762, 32
        %v765 = vpop.permute.xlu0 %764
        %v767 = vadd.f32 %v757, %v765
        %v768 = vtanh.pop %v767
        %770 = vrot.lane.b32.xlu0 %v768, 64
        %v771 = vpop.permute.xlu0 %770
        %v773 = vmul.f32 %v755, %v771
        %vm774 = vcmp.gt.s32.totalorder %v554, 0
        %v775 = vsel %vm774, 1, 0
        %776 = vset.pattern.permute.xlu0 0
        %777 = vperm.xlu0 %776, %v775
        %v778 = vpop.permute.xlu0 %777
        %v779 = vlaneseq
        %v780 = vshrl.u32 %v779, 7
        %v781 = vsub.s32 0, %v780
        %v782 = vrot.slane %v778, %v781
        %vm783 = vcmp.eq.s32.totalorder %v782, 1
        %v784 = vsel %vm783, %v773, 0.0
        %v785 = vsel %vm783, %v767, 0.0
        %787 = vrot.lane.b32.xlu0 %v784, 32
        %v788 = vpop.permute.xlu0 %787
        %vm790 = vcmask 253952
        %791 = vst.msk [vmem:[#allocation2] sm:$0x1] %vm790, %v788
        %v796 = vunpack.c.l.b16 %v559
        %v797 = vunpack.c.l.b16 %v560
        %v798 = vunpack.c.l.b16 %v561
        %v799 = vunpack.c.l.b16 %v562
        %v800 = vpack.c.b16 %v797, %v796
        %v801 = vpack.c.b16 %v799, %v798
        %804 = vmatprep.subr.bf16.mxu0 0
        %805 = vmatpush1.bf16.msra.mxu0 %v800
        %806 = vmatprep.subr.bf16.mxu0 0
        %807 = vmatpush1.bf16.msra.mxu0 %v801
        %808 = vmatprep.subr.bf16.mxu0 0
        %809 = vmatpush1.bf16.msra.mxu0 0
        %810 = vmatprep.subr.bf16.mxu0 0
        %811 = vmatpush1.bf16.msra.mxu0 0
        %812 = vmatprep.subr.bf16.mxu0 0
        %813 = vmatpush1.bf16.msra.mxu0 0
        %814 = vmatprep.subr.bf16.mxu0 0
        %815 = vmatpush1.bf16.msra.mxu0 0
        %816 = vmatprep.subr.bf16.mxu0 0
        %817 = vmatpush1.bf16.msra.mxu0 0
        %818 = vmatprep.subr.bf16.mxu0 0
        %819 = vmatpush1.bf16.msra.mxu0 0
        %820 = vmatprep.subr.bf16.mxu0 0
        %821 = vmatpush1.bf16.msra.mxu0 0
        %822 = vmatprep.subr.bf16.mxu0 0
        %823 = vmatpush1.bf16.msra.mxu0 0
        %824 = vmatprep.subr.bf16.mxu0 0
        %825 = vmatpush1.bf16.msra.mxu0 0
        %826 = vmatprep.subr.bf16.mxu0 0
        %827 = vmatpush1.bf16.msra.mxu0 0
        %828 = vmatprep.subr.bf16.mxu0 0
        %829 = vmatpush1.bf16.msra.mxu0 0
        %830 = vmatprep.subr.bf16.mxu0 0
        %831 = vmatpush1.bf16.msra.mxu0 0
        %832 = vmatprep.subr.bf16.mxu0 0
        %833 = vmatpush1.bf16.msra.mxu0 0
        %834 = vmatprep.subr.bf16.mxu0 0
        %835 = vmatpush1.bf16.msra.mxu0 0
        %836 = vmatprep.mubr.bf16.mxu0 0
        %837 = vmatmul.mubr.bf16.gmra.mrb[0].mxu0 %v707
        %v838 = vpop.f32.mrb[0].mxu0
        %v839 = vadd.f32 0.0, %v838
        %v840 = vpop.f32.mrb[0].mxu0
        %v841 = vpop.f32.mrb[0].mxu0
        %v842 = vpop.f32.mrb[0].mxu0
        %843 = vdwg.mxu0
        %v845 = vrot.slane %v839, 1
        %v847 = vadd.f32 %v689, %v845
        %v848 = vxor.u32 %v847, 2147483648
        %v849 = vmul.f32 %v848, 1.442695
        %v850 = vpow.pop %v849
        %v851 = vadd.f32 %v850, 1.0
        %v852 = vrcp.pop %v851
        %v853 = vmul.f32 1.0, %v852
        %v854 = vtanh.pop %v847
        %v855 = vmul.f32 %v853, 0.0
        %857 = vrot.lane.b32.xlu0 %v854, 64
        %v858 = vpop.permute.xlu0 %857
        %v860 = vmul.f32 %v853, %v858
        %862 = vrot.lane.b32.xlu0 %v860, 32
        %v863 = vpop.permute.xlu0 %862
        %v865 = vadd.f32 %v855, %v863
        %v866 = vtanh.pop %v865
        %868 = vrot.lane.b32.xlu0 %v866, 64
        %v869 = vpop.permute.xlu0 %868
        %v871 = vmul.f32 %v853, %v869
        %vm872 = vcmp.gt.s32.totalorder %v554, 7
        %v873 = vsel %vm872, 1, 0
        %874 = vset.pattern.permute.xlu0 0
        %875 = vperm.xlu0 %874, %v873
        %v876 = vpop.permute.xlu0 %875
        %v877 = vlaneseq
        %v878 = vshrl.u32 %v877, 7
        %v879 = vsub.s32 0, %v878
        %v880 = vrot.slane %v876, %v879
        %vm881 = vcmp.eq.s32.totalorder %v880, 1
        %v882 = vsel %vm881, %v871, 0.0
        %v883 = vsel %vm881, %v865, 0.0
        %885 = vrot.lane.b32.xlu0 %v882, 32
        %v886 = vpop.permute.xlu0 %885
        %vm888 = vcmask 261127
        %889 = vst.msk [vmem:[#allocation3] sm:$0x80] %vm888, %v886
        %v890 = vpack.c.bf16 %v784, %v784
        %892 = vrot.lane.b32.xlu0 %v890, 32
        %v893 = vpop.permute.xlu0 %892
        %v895 = vsel %vm587, %v893, 0
        %897 = vmatprep.subr.bf16.mxu0 0
        %898 = vmatpush1.bf16.msra.mxu0 %v702
        %899 = vmatprep.subr.bf16.mxu0 0
        %900 = vmatpush1.bf16.msra.mxu0 %v703
        %901 = vmatprep.subr.bf16.mxu0 0
        %902 = vmatpush1.bf16.msra.mxu0 0
        %903 = vmatprep.subr.bf16.mxu0 0
        %904 = vmatpush1.bf16.msra.mxu0 0
        %905 = vmatprep.subr.bf16.mxu0 0
        %906 = vmatpush1.bf16.msra.mxu0 0
        %907 = vmatprep.subr.bf16.mxu0 0
        %908 = vmatpush1.bf16.msra.mxu0 0
        %909 = vmatprep.subr.bf16.mxu0 0
        %910 = vmatpush1.bf16.msra.mxu0 0
        %911 = vmatprep.subr.bf16.mxu0 0
        %912 = vmatpush1.bf16.msra.mxu0 0
        %913 = vmatprep.subr.bf16.mxu0 0
        %914 = vmatpush1.bf16.msra.mxu0 0
        %915 = vmatprep.subr.bf16.mxu0 0
        %916 = vmatpush1.bf16.msra.mxu0 0
        %917 = vmatprep.subr.bf16.mxu0 0
        %918 = vmatpush1.bf16.msra.mxu0 0
        %919 = vmatprep.subr.bf16.mxu0 0
        %920 = vmatpush1.bf16.msra.mxu0 0
        %921 = vmatprep.subr.bf16.mxu0 0
        %922 = vmatpush1.bf16.msra.mxu0 0
        %923 = vmatprep.subr.bf16.mxu0 0
        %924 = vmatpush1.bf16.msra.mxu0 0
        %925 = vmatprep.subr.bf16.mxu0 0
        %926 = vmatpush1.bf16.msra.mxu0 0
        %927 = vmatprep.subr.bf16.mxu0 0
        %928 = vmatpush1.bf16.msra.mxu0 0
        %929 = vmatprep.mubr.bf16.mxu0 0
        %930 = vmatmul.mubr.bf16.gmra.mrb[0].mxu0 %v895
        %v931 = vpop.f32.mrb[0].mxu0
        %v932 = vadd.f32 0.0, %v931
        %v933 = vpop.f32.mrb[0].mxu0
        %v934 = vpop.f32.mrb[0].mxu0
        %v935 = vpop.f32.mrb[0].mxu0
        %936 = vdwg.mxu0
        %v938 = vrot.slane %v932, 7
        %v940 = vadd.f32 %v626, %v938
        %v941 = vxor.u32 %v940, 2147483648
        %v942 = vmul.f32 %v941, 1.442695
        %v943 = vpow.pop %v942
        %v944 = vadd.f32 %v943, 1.0
        %v945 = vrcp.pop %v944
        %v946 = vmul.f32 1.0, %v945
        %v947 = vtanh.pop %v940
        %v949 = vrot.slane %v785, 7
        %v951 = vmul.f32 %v946, %v949
        %953 = vrot.lane.b32.xlu0 %v947, 64
        %v954 = vpop.permute.xlu0 %953
        %v956 = vmul.f32 %v946, %v954
        %958 = vrot.lane.b32.xlu0 %v956, 32
        %v959 = vpop.permute.xlu0 %958
        %v961 = vadd.f32 %v951, %v959
        %v962 = vtanh.pop %v961
        %964 = vrot.lane.b32.xlu0 %v962, 64
        %v965 = vpop.permute.xlu0 %964
        %v967 = vmul.f32 %v946, %v965
        %vm968 = vcmp.gt.s32.totalorder %v554, 1
        %v969 = vsel %vm968, 1, 0
        %970 = vset.pattern.permute.xlu0 0
        %971 = vperm.xlu0 %970, %v969
        %v972 = vpop.permute.xlu0 %971
        %v973 = vlaneseq
        %v974 = vshrl.u32 %v973, 7
        %v975 = vsub.s32 0, %v974
        %v976 = vrot.slane %v972, %v975
        %vm977 = vcmp.eq.s32.totalorder %v976, 1
        %v978 = vrot.slane %v784, 7
        %v980 = vsel %vm977, %v967, %v978
        %v981 = vsel %vm977, %v961, %v949
        %v982 = vsel %vm977, %v967, 0.0
        %984 = vrot.lane.b32.xlu0 %v982, 32
        %v985 = vpop.permute.xlu0 %984
        %vm987 = vcmask 254977
        %988 = vst.msk [vmem:[#allocation2] sm:$0x2] %vm987, %v985
        %v989 = vpack.c.bf16 %v882, %v882
        %v991 = vshrl.u32 %v989, 16
        %v993 = vrot.slane %v991, 3
        %994 = vrot.lane.b32.xlu0 %v993, 32
        %v995 = vpop.permute.xlu0 %994
        %v997 = vsel %vm587, %v995, 0
        %999 = vmatprep.subr.bf16.mxu0 0
        %1000 = vmatpush1.bf16.msra.mxu0 %v800
        %1001 = vmatprep.subr.bf16.mxu0 0
        %1002 = vmatpush1.bf16.msra.mxu0 %v801
        %1003 = vmatprep.subr.bf16.mxu0 0
        %1004 = vmatpush1.bf16.msra.mxu0 0
        %1005 = vmatprep.subr.bf16.mxu0 0
        %1006 = vmatpush1.bf16.msra.mxu0 0
        %1007 = vmatprep.subr.bf16.mxu0 0
        %1008 = vmatpush1.bf16.msra.mxu0 0
        %1009 = vmatprep.subr.bf16.mxu0 0
        %1010 = vmatpush1.bf16.msra.mxu0 0
        %1011 = vmatprep.subr.bf16.mxu0 0
        %1012 = vmatpush1.bf16.msra.mxu0 0
        %1013 = vmatprep.subr.bf16.mxu0 0
        %1014 = vmatpush1.bf16.msra.mxu0 0
        %1015 = vmatprep.subr.bf16.mxu0 0
        %1016 = vmatpush1.bf16.msra.mxu0 0
        %1017 = vmatprep.subr.bf16.mxu0 0
        %1018 = vmatpush1.bf16.msra.mxu0 0
        %1019 = vmatprep.subr.bf16.mxu0 0
        %1020 = vmatpush1.bf16.msra.mxu0 0
        %1021 = vmatprep.subr.bf16.mxu0 0
        %1022 = vmatpush1.bf16.msra.mxu0 0
        %1023 = vmatprep.subr.bf16.mxu0 0
        %1024 = vmatpush1.bf16.msra.mxu0 0
        %1025 = vmatprep.subr.bf16.mxu0 0
        %1026 = vmatpush1.bf16.msra.mxu0 0
        %1027 = vmatprep.subr.bf16.mxu0 0
        %1028 = vmatpush1.bf16.msra.mxu0 0
        %1029 = vmatprep.subr.bf16.mxu0 0
        %1030 = vmatpush1.bf16.msra.mxu0 0
        %1031 = vmatprep.mubr.bf16.mxu0 0
        %1032 = vmatmul.mubr.bf16.gmra.mrb[0].mxu0 %v997
        %v1033 = vpop.f32.mrb[0].mxu0
        %v1034 = vadd.f32 0.0, %v1033
        %v1035 = vpop.f32.mrb[0].mxu0
        %v1036 = vpop.f32.mrb[0].mxu0
        %v1037 = vpop.f32.mrb[0].mxu0
        %1038 = vdwg.mxu0
        %v1040 = vrot.slane %v1034, 2
        %v1042 = vadd.f32 %v689, %v1040
        %v1043 = vxor.u32 %v1042, 2147483648
        %v1044 = vmul.f32 %v1043, 1.442695
        %v1045 = vpow.pop %v1044
        %v1046 = vadd.f32 %v1045, 1.0
        %v1047 = vrcp.pop %v1046
        %v1048 = vmul.f32 1.0, %v1047
        %v1049 = vtanh.pop %v1042
        %v1051 = vrot.slane %v883, 1
        %v1053 = vmul.f32 %v1048, %v1051
        %1055 = vrot.lane.b32.xlu0 %v1049, 64
        %v1056 = vpop.permute.xlu0 %1055
        %v1058 = vmul.f32 %v1048, %v1056
        %1060 = vrot.lane.b32.xlu0 %v1058, 32
        %v1061 = vpop.permute.xlu0 %1060
        %v1063 = vadd.f32 %v1053, %v1061
        %v1064 = vtanh.pop %v1063
        %1066 = vrot.lane.b32.xlu0 %v1064, 64
        %v1067 = vpop.permute.xlu0 %1066
        %v1069 = vmul.f32 %v1048, %v1067
        %vm1070 = vcmp.gt.s32.totalorder %v554, 6
        %v1071 = vsel %vm1070, 1, 0
        %1072 = vset.pattern.permute.xlu0 0
        %1073 = vperm.xlu0 %1072, %v1071
        %v1074 = vpop.permute.xlu0 %1073
        %v1075 = vlaneseq
        %v1076 = vshrl.u32 %v1075, 7
        %v1077 = vsub.s32 0, %v1076
        %v1078 = vrot.slane %v1074, %v1077
        %vm1079 = vcmp.eq.s32.totalorder %v1078, 1
        %v1080 = vrot.slane %v882, 1
        %v1082 = vsel %vm1079, %v1069, %v1080
        %v1083 = vsel %vm1079, %v1063, %v1051
        %v1084 = vsel %vm1079, %v1069, 0.0
        %1086 = vrot.lane.b32.xlu0 %v1084, 32
        %v1087 = vpop.permute.xlu0 %1086
        %vm1089 = vcmask 260102
        %1090 = vst.msk [vmem:[#allocation3] sm:$0x40] %vm1089, %v1087
        %v1091 = vpack.c.bf16 %v980, %v980
        %v1093 = vshrl.u32 %v1091, 16
        %1095 = vrot.lane.b32.xlu0 %v1093, 32
        %v1096 = vpop.permute.xlu0 %1095
        %v1098 = vsel %vm587, %v1096, 0
        %1100 = vmatprep.subr.bf16.mxu0 0
        %1101 = vmatpush1.bf16.msra.mxu0 %v702
        %1102 = vmatprep.subr.bf16.mxu0 0
        %1103 = vmatpush1.bf16.msra.mxu0 %v703
        %1104 = vmatprep.subr.bf16.mxu0 0
        %1105 = vmatpush1.bf16.msra.mxu0 0
        %1106 = vmatprep.subr.bf16.mxu0 0
        %1107 = vmatpush1.bf16.msra.mxu0 0
        %1108 = vmatprep.subr.bf16.mxu0 0
        %1109 = vmatpush1.bf16.msra.mxu0 0
        %1110 = vmatprep.subr.bf16.mxu0 0
        %1111 = vmatpush1.bf16.msra.mxu0 0
        %1112 = vmatprep.subr.bf16.mxu0 0
        %1113 = vmatpush1.bf16.msra.mxu0 0
        %1114 = vmatprep.subr.bf16.mxu0 0
        %1115 = vmatpush1.bf16.msra.mxu0 0
        %1116 = vmatprep.subr.bf16.mxu0 0
        %1117 = vmatpush1.bf16.msra.mxu0 0
        %1118 = vmatprep.subr.bf16.mxu0 0
        %1119 = vmatpush1.bf16.msra.mxu0 0
        %1120 = vmatprep.subr.bf16.mxu0 0
        %1121 = vmatpush1.bf16.msra.mxu0 0
        %1122 = vmatprep.subr.bf16.mxu0 0
        %1123 = vmatpush1.bf16.msra.mxu0 0
        %1124 = vmatprep.subr.bf16.mxu0 0
        %1125 = vmatpush1.bf16.msra.mxu0 0
        %1126 = vmatprep.subr.bf16.mxu0 0
        %1127 = vmatpush1.bf16.msra.mxu0 0
        %1128 = vmatprep.subr.bf16.mxu0 0
        %1129 = vmatpush1.bf16.msra.mxu0 0
        %1130 = vmatprep.subr.bf16.mxu0 0
        %1131 = vmatpush1.bf16.msra.mxu0 0
        %1132 = vmatprep.mubr.bf16.mxu0 0
        %1133 = vmatmul.mubr.bf16.gmra.mrb[0].mxu0 %v1098
        %v1134 = vpop.f32.mrb[0].mxu0
        %v1135 = vadd.f32 0.0, %v1134
        %v1136 = vpop.f32.mrb[0].mxu0
        %v1137 = vpop.f32.mrb[0].mxu0
        %v1138 = vpop.f32.mrb[0].mxu0
        %1139 = vdwg.mxu0
        %v1141 = vrot.slane %v1135, 6
        %v1143 = vadd.f32 %v626, %v1141
        %v1144 = vxor.u32 %v1143, 2147483648
        %v1145 = vmul.f32 %v1144, 1.442695
        %v1146 = vpow.pop %v1145
        %v1147 = vadd.f32 %v1146, 1.0
        %v1148 = vrcp.pop %v1147
        %v1149 = vmul.f32 1.0, %v1148
        %v1150 = vtanh.pop %v1143
        %v1152 = vrot.slane %v981, 7
        %v1154 = vmul.f32 %v1149, %v1152
        %1156 = vrot.lane.b32.xlu0 %v1150, 64
        %v1157 = vpop.permute.xlu0 %1156
        %v1159 = vmul.f32 %v1149, %v1157
        %1161 = vrot.lane.b32.xlu0 %v1159, 32
        %v1162 = vpop.permute.xlu0 %1161
        %v1164 = vadd.f32 %v1154, %v1162
        %v1165 = vtanh.pop %v1164
        %1167 = vrot.lane.b32.xlu0 %v1165, 64
        %v1168 = vpop.permute.xlu0 %1167
        %v1170 = vmul.f32 %v1149, %v1168
        %vm1171 = vcmp.gt.s32.totalorder %v554, 2
        %v1172 = vsel %vm1171, 1, 0
        %1173 = vset.pattern.permute.xlu0 0
        %1174 = vperm.xlu0 %1173, %v1172
        %v1175 = vpop.permute.xlu0 %1174
        %v1176 = vlaneseq
        %v1177 = vshrl.u32 %v1176, 7
        %v1178 = vsub.s32 0, %v1177
        %v1179 = vrot.slane %v1175, %v1178
        %vm1180 = vcmp.eq.s32.totalorder %v1179, 1
        %v1182 = vrot.slane %v980, 7
        %v1184 = vsel %vm1180, %v1170, %v1182
        %v1185 = vsel %vm1180, %v1164, %v1152
        %v1186 = vsel %vm1180, %v1170, 0.0
        %1188 = vrot.lane.b32.xlu0 %v1186, 32
        %v1189 = vpop.permute.xlu0 %1188
        %vm1191 = vcmask 256002
        %1192 = vst.msk [vmem:[#allocation2] sm:$0x4] %vm1191, %v1189
        %v1193 = vpack.c.bf16 %v1082, %v1082
        %v1195 = vrot.slane %v1193, 3
        %1196 = vrot.lane.b32.xlu0 %v1195, 32
        %v1197 = vpop.permute.xlu0 %1196
        %v1199 = vsel %vm587, %v1197, 0
        %1201 = vmatprep.subr.bf16.mxu0 0
        %1202 = vmatpush1.bf16.msra.mxu0 %v800
        %1203 = vmatprep.subr.bf16.mxu0 0
        %1204 = vmatpush1.bf16.msra.mxu0 %v801
        %1205 = vmatprep.subr.bf16.mxu0 0
        %1206 = vmatpush1.bf16.msra.mxu0 0
        %1207 = vmatprep.subr.bf16.mxu0 0
        %1208 = vmatpush1.bf16.msra.mxu0 0
        %1209 = vmatprep.subr.bf16.mxu0 0
        %1210 = vmatpush1.bf16.msra.mxu0 0
        %1211 = vmatprep.subr.bf16.mxu0 0
        %1212 = vmatpush1.bf16.msra.mxu0 0
        %1213 = vmatprep.subr.bf16.mxu0 0
        %1214 = vmatpush1.bf16.msra.mxu0 0
        %1215 = vmatprep.subr.bf16.mxu0 0
        %1216 = vmatpush1.bf16.msra.mxu0 0
        %1217 = vmatprep.subr.bf16.mxu0 0
        %1218 = vmatpush1.bf16.msra.mxu0 0
        %1219 = vmatprep.subr.bf16.mxu0 0
        %1220 = vmatpush1.bf16.msra.mxu0 0
        %1221 = vmatprep.subr.bf16.mxu0 0
        %1222 = vmatpush1.bf16.msra.mxu0 0
        %1223 = vmatprep.subr.bf16.mxu0 0
        %1224 = vmatpush1.bf16.msra.mxu0 0
        %1225 = vmatprep.subr.bf16.mxu0 0
        %1226 = vmatpush1.bf16.msra.mxu0 0
        %1227 = vmatprep.subr.bf16.mxu0 0
        %1228 = vmatpush1.bf16.msra.mxu0 0
        %1229 = vmatprep.subr.bf16.mxu0 0
        %1230 = vmatpush1.bf16.msra.mxu0 0
        %1231 = vmatprep.subr.bf16.mxu0 0
        %1232 = vmatpush1.bf16.msra.mxu0 0
        %1233 = vmatprep.mubr.bf16.mxu0 0
        %1234 = vmatmul.mubr.bf16.gmra.mrb[0].mxu0 %v1199
        %v1235 = vpop.f32.mrb[0].mxu0
        %v1236 = vadd.f32 0.0, %v1235
        %v1237 = vpop.f32.mrb[0].mxu0
        %v1238 = vpop.f32.mrb[0].mxu0
        %v1239 = vpop.f32.mrb[0].mxu0
        %1240 = vdwg.mxu0
        %v1242 = vrot.slane %v1236, 3
        %v1244 = vadd.f32 %v689, %v1242
        %v1245 = vxor.u32 %v1244, 2147483648
        %v1246 = vmul.f32 %v1245, 1.442695
        %v1247 = vpow.pop %v1246
        %v1248 = vadd.f32 %v1247, 1.0
        %v1249 = vrcp.pop %v1248
        %v1250 = vmul.f32 1.0, %v1249
        %v1251 = vtanh.pop %v1244
        %v1253 = vrot.slane %v1083, 1
        %v1255 = vmul.f32 %v1250, %v1253
        %1257 = vrot.lane.b32.xlu0 %v1251, 64
        %v1258 = vpop.permute.xlu0 %1257
        %v1260 = vmul.f32 %v1250, %v1258
        %1262 = vrot.lane.b32.xlu0 %v1260, 32
        %v1263 = vpop.permute.xlu0 %1262
        %v1265 = vadd.f32 %v1255, %v1263
        %v1266 = vtanh.pop %v1265
        %1268 = vrot.lane.b32.xlu0 %v1266, 64
        %v1269 = vpop.permute.xlu0 %1268
        %v1271 = vmul.f32 %v1250, %v1269
        %vm1272 = vcmp.gt.s32.totalorder %v554, 5
        %v1273 = vsel %vm1272, 1, 0
        %1274 = vset.pattern.permute.xlu0 0
        %1275 = vperm.xlu0 %1274, %v1273
        %v1276 = vpop.permute.xlu0 %1275
        %v1277 = vlaneseq
        %v1278 = vshrl.u32 %v1277, 7
        %v1279 = vsub.s32 0, %v1278
        %v1280 = vrot.slane %v1276, %v1279
        %vm1281 = vcmp.eq.s32.totalorder %v1280, 1
        %v1283 = vrot.slane %v1082, 1
        %v1285 = vsel %vm1281, %v1271, %v1283
        %v1286 = vsel %vm1281, %v1265, %v1253
        %v1287 = vsel %vm1281, %v1271, 0.0
        %1289 = vrot.lane.b32.xlu0 %v1287, 32
        %v1290 = vpop.permute.xlu0 %1289
        %vm1292 = vcmask 259077
        %1293 = vst.msk [vmem:[#allocation3] sm:$0x20] %vm1292, %v1290
        %v1294 = vpack.c.bf16 %v1184, %v1184
        %v1296 = vrot.slane %v1294, 1
        %1297 = vrot.lane.b32.xlu0 %v1296, 32
        %v1298 = vpop.permute.xlu0 %1297
        %v1300 = vsel %vm587, %v1298, 0
        %1302 = vmatprep.subr.bf16.mxu0 0
        %1303 = vmatpush1.bf16.msra.mxu0 %v702
        %1304 = vmatprep.subr.bf16.mxu0 0
        %1305 = vmatpush1.bf16.msra.mxu0 %v703
        %1306 = vmatprep.subr.bf16.mxu0 0
        %1307 = vmatpush1.bf16.msra.mxu0 0
        %1308 = vmatprep.subr.bf16.mxu0 0
        %1309 = vmatpush1.bf16.msra.mxu0 0
        %1310 = vmatprep.subr.bf16.mxu0 0
        %1311 = vmatpush1.bf16.msra.mxu0 0
        %1312 = vmatprep.subr.bf16.mxu0 0
        %1313 = vmatpush1.bf16.msra.mxu0 0
        %1314 = vmatprep.subr.bf16.mxu0 0
        %1315 = vmatpush1.bf16.msra.mxu0 0
        %1316 = vmatprep.subr.bf16.mxu0 0
        %1317 = vmatpush1.bf16.msra.mxu0 0
        %1318 = vmatprep.subr.bf16.mxu0 0
        %1319 = vmatpush1.bf16.msra.mxu0 0
        %1320 = vmatprep.subr.bf16.mxu0 0
        %1321 = vmatpush1.bf16.msra.mxu0 0
        %1322 = vmatprep.subr.bf16.mxu0 0
        %1323 = vmatpush1.bf16.msra.mxu0 0
        %1324 = vmatprep.subr.bf16.mxu0 0
        %1325 = vmatpush1.bf16.msra.mxu0 0
        %1326 = vmatprep.subr.bf16.mxu0 0
        %1327 = vmatpush1.bf16.msra.mxu0 0
        %1328 = vmatprep.subr.bf16.mxu0 0
        %1329 = vmatpush1.bf16.msra.mxu0 0
        %1330 = vmatprep.subr.bf16.mxu0 0
        %1331 = vmatpush1.bf16.msra.mxu0 0
        %1332 = vmatprep.subr.bf16.mxu0 0
        %1333 = vmatpush1.bf16.msra.mxu0 0
        %1334 = vmatprep.mubr.bf16.mxu0 0
        %1335 = vmatmul.mubr.bf16.gmra.mrb[0].mxu0 %v1300
        %v1336 = vpop.f32.mrb[0].mxu0
        %v1337 = vadd.f32 0.0, %v1336
        %v1338 = vpop.f32.mrb[0].mxu0
        %v1339 = vpop.f32.mrb[0].mxu0
        %v1340 = vpop.f32.mrb[0].mxu0
        %1341 = vdwg.mxu0
        %v1343 = vrot.slane %v1337, 5
        %v1345 = vadd.f32 %v626, %v1343
        %v1346 = vxor.u32 %v1345, 2147483648
        %v1347 = vmul.f32 %v1346, 1.442695
        %v1348 = vpow.pop %v1347
        %v1349 = vadd.f32 %v1348, 1.0
        %v1350 = vrcp.pop %v1349
        %v1351 = vmul.f32 1.0, %v1350
        %v1352 = vtanh.pop %v1345
        %v1354 = vrot.slane %v1185, 7
        %v1356 = vmul.f32 %v1351, %v1354
        %1358 = vrot.lane.b32.xlu0 %v1352, 64
        %v1359 = vpop.permute.xlu0 %1358
        %v1361 = vmul.f32 %v1351, %v1359
        %1363 = vrot.lane.b32.xlu0 %v1361, 32
        %v1364 = vpop.permute.xlu0 %1363
        %v1366 = vadd.f32 %v1356, %v1364
        %v1367 = vtanh.pop %v1366
        %1369 = vrot.lane.b32.xlu0 %v1367, 64
        %v1370 = vpop.permute.xlu0 %1369
        %v1372 = vmul.f32 %v1351, %v1370
        %vm1373 = vcmp.gt.s32.totalorder %v554, 3
        %v1374 = vsel %vm1373, 1, 0
        %1375 = vset.pattern.permute.xlu0 0
        %1376 = vperm.xlu0 %1375, %v1374
        %v1377 = vpop.permute.xlu0 %1376
        %v1378 = vlaneseq
        %v1379 = vshrl.u32 %v1378, 7
        %v1380 = vsub.s32 0, %v1379
        %v1381 = vrot.slane %v1377, %v1380
        %vm1382 = vcmp.eq.s32.totalorder %v1381, 1
        %v1384 = vrot.slane %v1184, 7
        %v1386 = vsel %vm1382, %v1372, %v1384
        %v1387 = vsel %vm1382, %v1366, %v1354
        %v1388 = vsel %vm1382, %v1372, 0.0
        %1390 = vrot.lane.b32.xlu0 %v1388, 32
        %v1391 = vpop.permute.xlu0 %1390
        %vm1393 = vcmask 257027
        %1394 = vst.msk [vmem:[#allocation2] sm:$0x8] %vm1393, %v1391
        %v1395 = vpack.c.bf16 %v1285, %v1285
        %v1397 = vshrl.u32 %v1395, 16
        %v1399 = vrot.slane %v1397, 2
        %1400 = vrot.lane.b32.xlu0 %v1399, 32
        %v1401 = vpop.permute.xlu0 %1400
        %v1403 = vsel %vm587, %v1401, 0
        %1405 = vmatprep.subr.bf16.mxu0 0
        %1406 = vmatpush1.bf16.msra.mxu0 %v800
        %1407 = vmatprep.subr.bf16.mxu0 0
        %1408 = vmatpush1.bf16.msra.mxu0 %v801
        %1409 = vmatprep.subr.bf16.mxu0 0
        %1410 = vmatpush1.bf16.msra.mxu0 0
        %1411 = vmatprep.subr.bf16.mxu0 0
        %1412 = vmatpush1.bf16.msra.mxu0 0
        %1413 = vmatprep.subr.bf16.mxu0 0
        %1414 = vmatpush1.bf16.msra.mxu0 0
        %1415 = vmatprep.subr.bf16.mxu0 0
        %1416 = vmatpush1.bf16.msra.mxu0 0
        %1417 = vmatprep.subr.bf16.mxu0 0
        %1418 = vmatpush1.bf16.msra.mxu0 0
        %1419 = vmatprep.subr.bf16.mxu0 0
        %1420 = vmatpush1.bf16.msra.mxu0 0
        %1421 = vmatprep.subr.bf16.mxu0 0
        %1422 = vmatpush1.bf16.msra.mxu0 0
        %1423 = vmatprep.subr.bf16.mxu0 0
        %1424 = vmatpush1.bf16.msra.mxu0 0
        %1425 = vmatprep.subr.bf16.mxu0 0
        %1426 = vmatpush1.bf16.msra.mxu0 0
        %1427 = vmatprep.subr.bf16.mxu0 0
        %1428 = vmatpush1.bf16.msra.mxu0 0
        %1429 = vmatprep.subr.bf16.mxu0 0
        %1430 = vmatpush1.bf16.msra.mxu0 0
        %1431 = vmatprep.subr.bf16.mxu0 0
        %1432 = vmatpush1.bf16.msra.mxu0 0
        %1433 = vmatprep.subr.bf16.mxu0 0
        %1434 = vmatpush1.bf16.msra.mxu0 0
        %1435 = vmatprep.subr.bf16.mxu0 0
        %1436 = vmatpush1.bf16.msra.mxu0 0
        %1437 = vmatprep.mubr.bf16.mxu0 0
        %1438 = vmatmul.mubr.bf16.gmra.mrb[0].mxu0 %v1403
        %v1439 = vpop.f32.mrb[0].mxu0
        %v1440 = vadd.f32 0.0, %v1439
        %v1441 = vpop.f32.mrb[0].mxu0
        %v1442 = vpop.f32.mrb[0].mxu0
        %v1443 = vpop.f32.mrb[0].mxu0
        %1444 = vdwg.mxu0
        %v1446 = vrot.slane %v1440, 4
        %v1448 = vadd.f32 %v689, %v1446
        %v1449 = vxor.u32 %v1448, 2147483648
        %v1450 = vmul.f32 %v1449, 1.442695
        %v1451 = vpow.pop %v1450
        %v1452 = vadd.f32 %v1451, 1.0
        %v1453 = vrcp.pop %v1452
        %v1454 = vmul.f32 1.0, %v1453
        %v1455 = vtanh.pop %v1448
        %v1457 = vrot.slane %v1286, 1
        %v1459 = vmul.f32 %v1454, %v1457
        %1461 = vrot.lane.b32.xlu0 %v1455, 64
        %v1462 = vpop.permute.xlu0 %1461
        %v1464 = vmul.f32 %v1454, %v1462
        %1466 = vrot.lane.b32.xlu0 %v1464, 32
        %v1467 = vpop.permute.xlu0 %1466
        %v1469 = vadd.f32 %v1459, %v1467
        %v1470 = vtanh.pop %v1469
        %1472 = vrot.lane.b32.xlu0 %v1470, 64
        %v1473 = vpop.permute.xlu0 %1472
        %v1475 = vmul.f32 %v1454, %v1473
        %vm1476 = vcmp.gt.s32.totalorder %v554, 4
        %v1477 = vsel %vm1476, 1, 0
        %1478 = vset.pattern.permute.xlu0 0
        %1479 = vperm.xlu0 %1478, %v1477
        %v1480 = vpop.permute.xlu0 %1479
        %v1481 = vlaneseq
        %v1482 = vshrl.u32 %v1481, 7
        %v1483 = vsub.s32 0, %v1482
        %v1484 = vrot.slane %v1480, %v1483
        %vm1485 = vcmp.eq.s32.totalorder %v1484, 1
        %v1487 = vrot.slane %v1285, 1
        %v1489 = vsel %vm1485, %v1475, %v1487
        %v1490 = vsel %vm1485, %v1469, %v1457
        %v1491 = vsel %vm1485, %v1475, 0.0
        %1493 = vrot.lane.b32.xlu0 %v1491, 32
        %v1494 = vpop.permute.xlu0 %1493
        %vm1496 = vcmask 258052
        %1497 = vst.msk [vmem:[#allocation3] sm:$0x10] %vm1496, %v1494
        %v1498 = vpack.c.bf16 %v1386, %v1386
        %v1500 = vshrl.u32 %v1498, 16
        %v1502 = vrot.slane %v1500, 1
        %1503 = vrot.lane.b32.xlu0 %v1502, 32
        %v1504 = vpop.permute.xlu0 %1503
        %v1506 = vsel %vm587, %v1504, 0
        %1508 = vmatprep.subr.bf16.mxu0 0
        %1509 = vmatpush1.bf16.msra.mxu0 %v702
        %1510 = vmatprep.subr.bf16.mxu0 0
        %1511 = vmatpush1.bf16.msra.mxu0 %v703
        %1512 = vmatprep.subr.bf16.mxu0 0
        %1513 = vmatpush1.bf16.msra.mxu0 0
        %1514 = vmatprep.subr.bf16.mxu0 0
        %1515 = vmatpush1.bf16.msra.mxu0 0
        %1516 = vmatprep.subr.bf16.mxu0 0
        %1517 = vmatpush1.bf16.msra.mxu0 0
        %1518 = vmatprep.subr.bf16.mxu0 0
        %1519 = vmatpush1.bf16.msra.mxu0 0
        %1520 = vmatprep.subr.bf16.mxu0 0
        %1521 = vmatpush1.bf16.msra.mxu0 0
        %1522 = vmatprep.subr.bf16.mxu0 0
        %1523 = vmatpush1.bf16.msra.mxu0 0
        %1524 = vmatprep.subr.bf16.mxu0 0
        %1525 = vmatpush1.bf16.msra.mxu0 0
        %1526 = vmatprep.subr.bf16.mxu0 0
        %1527 = vmatpush1.bf16.msra.mxu0 0
        %1528 = vmatprep.subr.bf16.mxu0 0
        %1529 = vmatpush1.bf16.msra.mxu0 0
        %1530 = vmatprep.subr.bf16.mxu0 0
        %1531 = vmatpush1.bf16.msra.mxu0 0
        %1532 = vmatprep.subr.bf16.mxu0 0
        %1533 = vmatpush1.bf16.msra.mxu0 0
        %1534 = vmatprep.subr.bf16.mxu0 0
        %1535 = vmatpush1.bf16.msra.mxu0 0
        %1536 = vmatprep.subr.bf16.mxu0 0
        %1537 = vmatpush1.bf16.msra.mxu0 0
        %1538 = vmatprep.subr.bf16.mxu0 0
        %1539 = vmatpush1.bf16.msra.mxu0 0
        %1540 = vmatprep.mubr.bf16.mxu0 0
        %1541 = vmatmul.mubr.bf16.gmra.mrb[0].mxu0 %v1506
        %v1542 = vpop.f32.mrb[0].mxu0
        %v1543 = vadd.f32 0.0, %v1542
        %v1544 = vpop.f32.mrb[0].mxu0
        %v1545 = vpop.f32.mrb[0].mxu0
        %v1546 = vpop.f32.mrb[0].mxu0
        %1547 = vdwg.mxu0
        %v1549 = vrot.slane %v1543, 4
        %v1551 = vadd.f32 %v626, %v1549
        %v1552 = vxor.u32 %v1551, 2147483648
        %v1553 = vmul.f32 %v1552, 1.442695
        %v1554 = vpow.pop %v1553
        %v1555 = vadd.f32 %v1554, 1.0
        %v1556 = vrcp.pop %v1555
        %v1557 = vmul.f32 1.0, %v1556
        %v1558 = vtanh.pop %v1551
        %v1560 = vrot.slane %v1387, 7
        %v1562 = vmul.f32 %v1557, %v1560
        %1564 = vrot.lane.b32.xlu0 %v1558, 64
        %v1565 = vpop.permute.xlu0 %1564
        %v1567 = vmul.f32 %v1557, %v1565
        %1569 = vrot.lane.b32.xlu0 %v1567, 32
        %v1570 = vpop.permute.xlu0 %1569
        %v1572 = vadd.f32 %v1562, %v1570
        %v1573 = vtanh.pop %v1572
        %1575 = vrot.lane.b32.xlu0 %v1573, 64
        %v1576 = vpop.permute.xlu0 %1575
        %v1578 = vmul.f32 %v1557, %v1576
        %v1580 = vrot.slane %v1386, 7
        %v1582 = vsel %vm1485, %v1578, %v1580
        %v1583 = vsel %vm1485, %v1572, %v1560
        %v1584 = vsel %vm1485, %v1578, 0.0
        %1586 = vrot.lane.b32.xlu0 %v1584, 32
        %v1587 = vpop.permute.xlu0 %1586
        %1589 = vst.msk [vmem:[#allocation2] sm:$0x10] %vm1496, %v1587
        %v1590 = vpack.c.bf16 %v1489, %v1489
        %v1592 = vrot.slane %v1590, 2
        %1593 = vrot.lane.b32.xlu0 %v1592, 32
        %v1594 = vpop.permute.xlu0 %1593
        %v1596 = vsel %vm587, %v1594, 0
        %1598 = vmatprep.subr.bf16.mxu0 0
        %1599 = vmatpush1.bf16.msra.mxu0 %v800
        %1600 = vmatprep.subr.bf16.mxu0 0
        %1601 = vmatpush1.bf16.msra.mxu0 %v801
        %1602 = vmatprep.subr.bf16.mxu0 0
        %1603 = vmatpush1.bf16.msra.mxu0 0
        %1604 = vmatprep.subr.bf16.mxu0 0
        %1605 = vmatpush1.bf16.msra.mxu0 0
        %1606 = vmatprep.subr.bf16.mxu0 0
        %1607 = vmatpush1.bf16.msra.mxu0 0
        %1608 = vmatprep.subr.bf16.mxu0 0
        %1609 = vmatpush1.bf16.msra.mxu0 0
        %1610 = vmatprep.subr.bf16.mxu0 0
        %1611 = vmatpush1.bf16.msra.mxu0 0
        %1612 = vmatprep.subr.bf16.mxu0 0
        %1613 = vmatpush1.bf16.msra.mxu0 0
        %1614 = vmatprep.subr.bf16.mxu0 0
        %1615 = vmatpush1.bf16.msra.mxu0 0
        %1616 = vmatprep.subr.bf16.mxu0 0
        %1617 = vmatpush1.bf16.msra.mxu0 0
        %1618 = vmatprep.subr.bf16.mxu0 0
        %1619 = vmatpush1.bf16.msra.mxu0 0
        %1620 = vmatprep.subr.bf16.mxu0 0
        %1621 = vmatpush1.bf16.msra.mxu0 0
        %1622 = vmatprep.subr.bf16.mxu0 0
        %1623 = vmatpush1.bf16.msra.mxu0 0
        %1624 = vmatprep.subr.bf16.mxu0 0
        %1625 = vmatpush1.bf16.msra.mxu0 0
        %1626 = vmatprep.subr.bf16.mxu0 0
        %1627 = vmatpush1.bf16.msra.mxu0 0
        %1628 = vmatprep.subr.bf16.mxu0 0
        %1629 = vmatpush1.bf16.msra.mxu0 0
        %1630 = vmatprep.mubr.bf16.mxu0 0
        %1631 = vmatmul.mubr.bf16.gmra.mrb[0].mxu0 %v1596
        %v1632 = vpop.f32.mrb[0].mxu0
        %v1633 = vadd.f32 0.0, %v1632
        %v1634 = vpop.f32.mrb[0].mxu0
        %v1635 = vpop.f32.mrb[0].mxu0
        %v1636 = vpop.f32.mrb[0].mxu0
        %1637 = vdwg.mxu0
        %v1639 = vrot.slane %v1633, 5
        %v1641 = vadd.f32 %v689, %v1639
        %v1642 = vxor.u32 %v1641, 2147483648
        %v1643 = vmul.f32 %v1642, 1.442695
        %v1644 = vpow.pop %v1643
        %v1645 = vadd.f32 %v1644, 1.0
        %v1646 = vrcp.pop %v1645
        %v1647 = vmul.f32 1.0, %v1646
        %v1648 = vtanh.pop %v1641
        %v1650 = vrot.slane %v1490, 1
        %v1652 = vmul.f32 %v1647, %v1650
        %1654 = vrot.lane.b32.xlu0 %v1648, 64
        %v1655 = vpop.permute.xlu0 %1654
        %v1657 = vmul.f32 %v1647, %v1655
        %1659 = vrot.lane.b32.xlu0 %v1657, 32
        %v1660 = vpop.permute.xlu0 %1659
        %v1662 = vadd.f32 %v1652, %v1660
        %v1663 = vtanh.pop %v1662
        %1665 = vrot.lane.b32.xlu0 %v1663, 64
        %v1666 = vpop.permute.xlu0 %1665
        %v1668 = vmul.f32 %v1647, %v1666
        %v1670 = vrot.slane %v1489, 1
        %v1672 = vsel %vm1382, %v1668, %v1670
        %v1673 = vsel %vm1382, %v1662, %v1650
        %v1674 = vsel %vm1382, %v1668, 0.0
        %1676 = vrot.lane.b32.xlu0 %v1674, 32
        %v1677 = vpop.permute.xlu0 %1676
        %1679 = vst.msk [vmem:[#allocation3] sm:$0x8] %vm1393, %v1677
        %v1680 = vpack.c.bf16 %v1582, %v1582
        %v1682 = vrot.slane %v1680, 2
        %1683 = vrot.lane.b32.xlu0 %v1682, 32
        %v1684 = vpop.permute.xlu0 %1683
        %v1686 = vsel %vm587, %v1684, 0
        %1688 = vmatprep.subr.bf16.mxu0 0
        %1689 = vmatpush1.bf16.msra.mxu0 %v702
        %1690 = vmatprep.subr.bf16.mxu0 0
        %1691 = vmatpush1.bf16.msra.mxu0 %v703
        %1692 = vmatprep.subr.bf16.mxu0 0
        %1693 = vmatpush1.bf16.msra.mxu0 0
        %1694 = vmatprep.subr.bf16.mxu0 0
        %1695 = vmatpush1.bf16.msra.mxu0 0
        %1696 = vmatprep.subr.bf16.mxu0 0
        %1697 = vmatpush1.bf16.msra.mxu0 0
        %1698 = vmatprep.subr.bf16.mxu0 0
        %1699 = vmatpush1.bf16.msra.mxu0 0
        %1700 = vmatprep.subr.bf16.mxu0 0
        %1701 = vmatpush1.bf16.msra.mxu0 0
        %1702 = vmatprep.subr.bf16.mxu0 0
        %1703 = vmatpush1.bf16.msra.mxu0 0
        %1704 = vmatprep.subr.bf16.mxu0 0
        %1705 = vmatpush1.bf16.msra.mxu0 0
        %1706 = vmatprep.subr.bf16.mxu0 0
        %1707 = vmatpush1.bf16.msra.mxu0 0
        %1708 = vmatprep.subr.bf16.mxu0 0
        %1709 = vmatpush1.bf16.msra.mxu0 0
        %1710 = vmatprep.subr.bf16.mxu0 0
        %1711 = vmatpush1.bf16.msra.mxu0 0
        %1712 = vmatprep.subr.bf16.mxu0 0
        %1713 = vmatpush1.bf16.msra.mxu0 0
        %1714 = vmatprep.subr.bf16.mxu0 0
        %1715 = vmatpush1.bf16.msra.mxu0 0
        %1716 = vmatprep.subr.bf16.mxu0 0
        %1717 = vmatpush1.bf16.msra.mxu0 0
        %1718 = vmatprep.subr.bf16.mxu0 0
        %1719 = vmatpush1.bf16.msra.mxu0 0
        %1720 = vmatprep.mubr.bf16.mxu0 0
        %1721 = vmatmul.mubr.bf16.gmra.mrb[0].mxu0 %v1686
        %v1722 = vpop.f32.mrb[0].mxu0
        %v1723 = vadd.f32 0.0, %v1722
        %v1724 = vpop.f32.mrb[0].mxu0
        %v1725 = vpop.f32.mrb[0].mxu0
        %v1726 = vpop.f32.mrb[0].mxu0
        %1727 = vdwg.mxu0
        %v1729 = vrot.slane %v1723, 3
        %v1731 = vadd.f32 %v626, %v1729
        %v1732 = vxor.u32 %v1731, 2147483648
        %v1733 = vmul.f32 %v1732, 1.442695
        %v1734 = vpow.pop %v1733
        %v1735 = vadd.f32 %v1734, 1.0
        %v1736 = vrcp.pop %v1735
        %v1737 = vmul.f32 1.0, %v1736
        %v1738 = vtanh.pop %v1731
        %v1740 = vrot.slane %v1583, 7
        %v1742 = vmul.f32 %v1737, %v1740
        %1744 = vrot.lane.b32.xlu0 %v1738, 64
        %v1745 = vpop.permute.xlu0 %1744
        %v1747 = vmul.f32 %v1737, %v1745
        %1749 = vrot.lane.b32.xlu0 %v1747, 32
        %v1750 = vpop.permute.xlu0 %1749
        %v1752 = vadd.f32 %v1742, %v1750
        %v1753 = vtanh.pop %v1752
        %1755 = vrot.lane.b32.xlu0 %v1753, 64
        %v1756 = vpop.permute.xlu0 %1755
        %v1758 = vmul.f32 %v1737, %v1756
        %v1760 = vrot.slane %v1582, 7
        %v1762 = vsel %vm1281, %v1758, %v1760
        %v1763 = vsel %vm1281, %v1752, %v1740
        %v1764 = vsel %vm1281, %v1758, 0.0
        %1766 = vrot.lane.b32.xlu0 %v1764, 32
        %v1767 = vpop.permute.xlu0 %1766
        %1769 = vst.msk [vmem:[#allocation2] sm:$0x20] %vm1292, %v1767
        %v1770 = vpack.c.bf16 %v1672, %v1672
        %v1772 = vshrl.u32 %v1770, 16
        %v1774 = vrot.slane %v1772, 1
        %1775 = vrot.lane.b32.xlu0 %v1774, 32
        %v1776 = vpop.permute.xlu0 %1775
        %v1778 = vsel %vm587, %v1776, 0
        %1780 = vmatprep.subr.bf16.mxu0 0
        %1781 = vmatpush1.bf16.msra.mxu0 %v800
        %1782 = vmatprep.subr.bf16.mxu0 0
        %1783 = vmatpush1.bf16.msra.mxu0 %v801
        %1784 = vmatprep.subr.bf16.mxu0 0
        %1785 = vmatpush1.bf16.msra.mxu0 0
        %1786 = vmatprep.subr.bf16.mxu0 0
        %1787 = vmatpush1.bf16.msra.mxu0 0
        %1788 = vmatprep.subr.bf16.mxu0 0
        %1789 = vmatpush1.bf16.msra.mxu0 0
        %1790 = vmatprep.subr.bf16.mxu0 0
        %1791 = vmatpush1.bf16.msra.mxu0 0
        %1792 = vmatprep.subr.bf16.mxu0 0
        %1793 = vmatpush1.bf16.msra.mxu0 0
        %1794 = vmatprep.subr.bf16.mxu0 0
        %1795 = vmatpush1.bf16.msra.mxu0 0
        %1796 = vmatprep.subr.bf16.mxu0 0
        %1797 = vmatpush1.bf16.msra.mxu0 0
        %1798 = vmatprep.subr.bf16.mxu0 0
        %1799 = vmatpush1.bf16.msra.mxu0 0
        %1800 = vmatprep.subr.bf16.mxu0 0
        %1801 = vmatpush1.bf16.msra.mxu0 0
        %1802 = vmatprep.subr.bf16.mxu0 0
        %1803 = vmatpush1.bf16.msra.mxu0 0
        %1804 = vmatprep.subr.bf16.mxu0 0
        %1805 = vmatpush1.bf16.msra.mxu0 0
        %1806 = vmatprep.subr.bf16.mxu0 0
        %1807 = vmatpush1.bf16.msra.mxu0 0
        %1808 = vmatprep.subr.bf16.mxu0 0
        %1809 = vmatpush1.bf16.msra.mxu0 0
        %1810 = vmatprep.subr.bf16.mxu0 0
        %1811 = vmatpush1.bf16.msra.mxu0 0
        %1812 = vmatprep.mubr.bf16.mxu0 0
        %1813 = vmatmul.mubr.bf16.gmra.mrb[0].mxu0 %v1778
        %v1814 = vpop.f32.mrb[0].mxu0
        %v1815 = vadd.f32 0.0, %v1814
        %v1816 = vpop.f32.mrb[0].mxu0
        %v1817 = vpop.f32.mrb[0].mxu0
        %v1818 = vpop.f32.mrb[0].mxu0
        %1819 = vdwg.mxu0
        %v1821 = vrot.slane %v1815, 6
        %v1823 = vadd.f32 %v689, %v1821
        %v1824 = vxor.u32 %v1823, 2147483648
        %v1825 = vmul.f32 %v1824, 1.442695
        %v1826 = vpow.pop %v1825
        %v1827 = vadd.f32 %v1826, 1.0
        %v1828 = vrcp.pop %v1827
        %v1829 = vmul.f32 1.0, %v1828
        %v1830 = vtanh.pop %v1823
        %v1832 = vrot.slane %v1673, 1
        %v1834 = vmul.f32 %v1829, %v1832
        %1836 = vrot.lane.b32.xlu0 %v1830, 64
        %v1837 = vpop.permute.xlu0 %1836
        %v1839 = vmul.f32 %v1829, %v1837
        %1841 = vrot.lane.b32.xlu0 %v1839, 32
        %v1842 = vpop.permute.xlu0 %1841
        %v1844 = vadd.f32 %v1834, %v1842
        %v1845 = vtanh.pop %v1844
        %1847 = vrot.lane.b32.xlu0 %v1845, 64
        %v1848 = vpop.permute.xlu0 %1847
        %v1850 = vmul.f32 %v1829, %v1848
        %v1852 = vrot.slane %v1672, 1
        %v1854 = vsel %vm1180, %v1850, %v1852
        %v1855 = vsel %vm1180, %v1844, %v1832
        %v1856 = vsel %vm1180, %v1850, 0.0
        %1858 = vrot.lane.b32.xlu0 %v1856, 32
        %v1859 = vpop.permute.xlu0 %1858
        %1861 = vst.msk [vmem:[#allocation3] sm:$0x4] %vm1191, %v1859
        %v1862 = vpack.c.bf16 %v1762, %v1762
        %v1864 = vshrl.u32 %v1862, 16
        %v1866 = vrot.slane %v1864, 2
        %1867 = vrot.lane.b32.xlu0 %v1866, 32
        %v1868 = vpop.permute.xlu0 %1867
        %v1870 = vsel %vm587, %v1868, 0
        %1872 = vmatprep.subr.bf16.mxu0 0
        %1873 = vmatpush1.bf16.msra.mxu0 %v702
        %1874 = vmatprep.subr.bf16.mxu0 0
        %1875 = vmatpush1.bf16.msra.mxu0 %v703
        %1876 = vmatprep.subr.bf16.mxu0 0
        %1877 = vmatpush1.bf16.msra.mxu0 0
        %1878 = vmatprep.subr.bf16.mxu0 0
        %1879 = vmatpush1.bf16.msra.mxu0 0
        %1880 = vmatprep.subr.bf16.mxu0 0
        %1881 = vmatpush1.bf16.msra.mxu0 0
        %1882 = vmatprep.subr.bf16.mxu0 0
        %1883 = vmatpush1.bf16.msra.mxu0 0
        %1884 = vmatprep.subr.bf16.mxu0 0
        %1885 = vmatpush1.bf16.msra.mxu0 0
        %1886 = vmatprep.subr.bf16.mxu0 0
        %1887 = vmatpush1.bf16.msra.mxu0 0
        %1888 = vmatprep.subr.bf16.mxu0 0
        %1889 = vmatpush1.bf16.msra.mxu0 0
        %1890 = vmatprep.subr.bf16.mxu0 0
        %1891 = vmatpush1.bf16.msra.mxu0 0
        %1892 = vmatprep.subr.bf16.mxu0 0
        %1893 = vmatpush1.bf16.msra.mxu0 0
        %1894 = vmatprep.subr.bf16.mxu0 0
        %1895 = vmatpush1.bf16.msra.mxu0 0
        %1896 = vmatprep.subr.bf16.mxu0 0
        %1897 = vmatpush1.bf16.msra.mxu0 0
        %1898 = vmatprep.subr.bf16.mxu0 0
        %1899 = vmatpush1.bf16.msra.mxu0 0
        %1900 = vmatprep.subr.bf16.mxu0 0
        %1901 = vmatpush1.bf16.msra.mxu0 0
        %1902 = vmatprep.subr.bf16.mxu0 0
        %1903 = vmatpush1.bf16.msra.mxu0 0
        %1904 = vmatprep.mubr.bf16.mxu0 0
        %1905 = vmatmul.mubr.bf16.gmra.mrb[0].mxu0 %v1870
        %v1906 = vpop.f32.mrb[0].mxu0
        %v1907 = vadd.f32 0.0, %v1906
        %v1908 = vpop.f32.mrb[0].mxu0
        %v1909 = vpop.f32.mrb[0].mxu0
        %v1910 = vpop.f32.mrb[0].mxu0
        %1911 = vdwg.mxu0
        %v1913 = vrot.slane %v1907, 2
        %v1915 = vadd.f32 %v626, %v1913
        %v1916 = vxor.u32 %v1915, 2147483648
        %v1917 = vmul.f32 %v1916, 1.442695
        %v1918 = vpow.pop %v1917
        %v1919 = vadd.f32 %v1918, 1.0
        %v1920 = vrcp.pop %v1919
        %v1921 = vmul.f32 1.0, %v1920
        %v1922 = vtanh.pop %v1915
        %v1924 = vrot.slane %v1763, 7
        %v1926 = vmul.f32 %v1921, %v1924
        %1928 = vrot.lane.b32.xlu0 %v1922, 64
        %v1929 = vpop.permute.xlu0 %1928
        %v1931 = vmul.f32 %v1921, %v1929
        %1933 = vrot.lane.b32.xlu0 %v1931, 32
        %v1934 = vpop.permute.xlu0 %1933
        %v1936 = vadd.f32 %v1926, %v1934
        %v1937 = vtanh.pop %v1936
        %1939 = vrot.lane.b32.xlu0 %v1937, 64
        %v1940 = vpop.permute.xlu0 %1939
        %v1942 = vmul.f32 %v1921, %v1940
        %v1944 = vrot.slane %v1762, 7
        %v1946 = vsel %vm1079, %v1942, %v1944
        %v1947 = vsel %vm1079, %v1936, %v1924
        %v1948 = vsel %vm1079, %v1942, 0.0
        %1950 = vrot.lane.b32.xlu0 %v1948, 32
        %v1951 = vpop.permute.xlu0 %1950
        %1953 = vst.msk [vmem:[#allocation2] sm:$0x40] %vm1089, %v1951
        %v1954 = vpack.c.bf16 %v1854, %v1854
        %v1956 = vrot.slane %v1954, 1
        %1957 = vrot.lane.b32.xlu0 %v1956, 32
        %v1958 = vpop.permute.xlu0 %1957
        %v1960 = vsel %vm587, %v1958, 0
        %1962 = vmatprep.subr.bf16.mxu0 0
        %1963 = vmatpush1.bf16.msra.mxu0 %v800
        %1964 = vmatprep.subr.bf16.mxu0 0
        %1965 = vmatpush1.bf16.msra.mxu0 %v801
        %1966 = vmatprep.subr.bf16.mxu0 0
        %1967 = vmatpush1.bf16.msra.mxu0 0
        %1968 = vmatprep.subr.bf16.mxu0 0
        %1969 = vmatpush1.bf16.msra.mxu0 0
        %1970 = vmatprep.subr.bf16.mxu0 0
        %1971 = vmatpush1.bf16.msra.mxu0 0
        %1972 = vmatprep.subr.bf16.mxu0 0
        %1973 = vmatpush1.bf16.msra.mxu0 0
        %1974 = vmatprep.subr.bf16.mxu0 0
        %1975 = vmatpush1.bf16.msra.mxu0 0
        %1976 = vmatprep.subr.bf16.mxu0 0
        %1977 = vmatpush1.bf16.msra.mxu0 0
        %1978 = vmatprep.subr.bf16.mxu0 0
        %1979 = vmatpush1.bf16.msra.mxu0 0
        %1980 = vmatprep.subr.bf16.mxu0 0
        %1981 = vmatpush1.bf16.msra.mxu0 0
        %1982 = vmatprep.subr.bf16.mxu0 0
        %1983 = vmatpush1.bf16.msra.mxu0 0
        %1984 = vmatprep.subr.bf16.mxu0 0
        %1985 = vmatpush1.bf16.msra.mxu0 0
        %1986 = vmatprep.subr.bf16.mxu0 0
        %1987 = vmatpush1.bf16.msra.mxu0 0
        %1988 = vmatprep.subr.bf16.mxu0 0
        %1989 = vmatpush1.bf16.msra.mxu0 0
        %1990 = vmatprep.subr.bf16.mxu0 0
        %1991 = vmatpush1.bf16.msra.mxu0 0
        %1992 = vmatprep.subr.bf16.mxu0 0
        %1993 = vmatpush1.bf16.msra.mxu0 0
        %1994 = vmatprep.mubr.bf16.mxu0 0
        %1995 = vmatmul.mubr.bf16.gmra.mrb[0].mxu0 %v1960
        %v1996 = vpop.f32.mrb[0].mxu0
        %v1997 = vadd.f32 0.0, %v1996
        %v1998 = vpop.f32.mrb[0].mxu0
        %v1999 = vpop.f32.mrb[0].mxu0
        %v2000 = vpop.f32.mrb[0].mxu0
        %2001 = vdwg.mxu0
        %v2003 = vrot.slane %v1997, 7
        %v2005 = vadd.f32 %v689, %v2003
        %v2006 = vxor.u32 %v2005, 2147483648
        %v2007 = vmul.f32 %v2006, 1.442695
        %v2008 = vpow.pop %v2007
        %v2009 = vadd.f32 %v2008, 1.0
        %v2010 = vrcp.pop %v2009
        %v2011 = vmul.f32 1.0, %v2010
        %v2012 = vtanh.pop %v2005
        %v2014 = vrot.slane %v1855, 1
        %v2016 = vmul.f32 %v2011, %v2014
        %2018 = vrot.lane.b32.xlu0 %v2012, 64
        %v2019 = vpop.permute.xlu0 %2018
        %v2021 = vmul.f32 %v2011, %v2019
        %2023 = vrot.lane.b32.xlu0 %v2021, 32
        %v2024 = vpop.permute.xlu0 %2023
        %v2026 = vadd.f32 %v2016, %v2024
        %v2027 = vtanh.pop %v2026
        %2029 = vrot.lane.b32.xlu0 %v2027, 64
        %v2030 = vpop.permute.xlu0 %2029
        %v2032 = vmul.f32 %v2011, %v2030
        %v2034 = vrot.slane %v1854, 1
        %v2036 = vsel %vm977, %v2032, %v2034
        %v2037 = vsel %vm977, %v2026, %v2014
        %v2038 = vsel %vm977, %v2032, 0.0
        %2040 = vrot.lane.b32.xlu0 %v2038, 32
        %v2041 = vpop.permute.xlu0 %2040
        %2043 = vst.msk [vmem:[#allocation3] sm:$0x2] %vm987, %v2041
        %v2044 = vpack.c.bf16 %v1946, %v1946
        %v2046 = vrot.slane %v2044, 3
        %2047 = vrot.lane.b32.xlu0 %v2046, 32
        %v2048 = vpop.permute.xlu0 %2047
        %v2050 = vsel %vm587, %v2048, 0
        %2052 = vmatprep.subr.bf16.mxu0 0
        %2053 = vmatpush1.bf16.msra.mxu0 %v702
        %2054 = vmatprep.subr.bf16.mxu0 0
        %2055 = vmatpush1.bf16.msra.mxu0 %v703
        %2056 = vmatprep.subr.bf16.mxu0 0
        %2057 = vmatpush1.bf16.msra.mxu0 0
        %2058 = vmatprep.subr.bf16.mxu0 0
        %2059 = vmatpush1.bf16.msra.mxu0 0
        %2060 = vmatprep.subr.bf16.mxu0 0
        %2061 = vmatpush1.bf16.msra.mxu0 0
        %2062 = vmatprep.subr.bf16.mxu0 0
        %2063 = vmatpush1.bf16.msra.mxu0 0
        %2064 = vmatprep.subr.bf16.mxu0 0
        %2065 = vmatpush1.bf16.msra.mxu0 0
        %2066 = vmatprep.subr.bf16.mxu0 0
        %2067 = vmatpush1.bf16.msra.mxu0 0
        %2068 = vmatprep.subr.bf16.mxu0 0
        %2069 = vmatpush1.bf16.msra.mxu0 0
        %2070 = vmatprep.subr.bf16.mxu0 0
        %2071 = vmatpush1.bf16.msra.mxu0 0
        %2072 = vmatprep.subr.bf16.mxu0 0
        %2073 = vmatpush1.bf16.msra.mxu0 0
        %2074 = vmatprep.subr.bf16.mxu0 0
        %2075 = vmatpush1.bf16.msra.mxu0 0
        %2076 = vmatprep.subr.bf16.mxu0 0
        %2077 = vmatpush1.bf16.msra.mxu0 0
        %2078 = vmatprep.subr.bf16.mxu0 0
        %2079 = vmatpush1.bf16.msra.mxu0 0
        %2080 = vmatprep.subr.bf16.mxu0 0
        %2081 = vmatpush1.bf16.msra.mxu0 0
        %2082 = vmatprep.subr.bf16.mxu0 0
        %2083 = vmatpush1.bf16.msra.mxu0 0
        %2084 = vmatprep.mubr.bf16.mxu0 0
        %2085 = vmatmul.mubr.bf16.gmra.mrb[0].mxu0 %v2050
        %v2086 = vpop.f32.mrb[0].mxu0
        %v2087 = vadd.f32 0.0, %v2086
        %v2088 = vpop.f32.mrb[0].mxu0
        %v2089 = vpop.f32.mrb[0].mxu0
        %v2090 = vpop.f32.mrb[0].mxu0
        %2091 = vdwg.mxu0
        %v2093 = vrot.slane %v2087, 1
        %v2095 = vadd.f32 %v626, %v2093
        %v2096 = vxor.u32 %v2095, 2147483648
        %v2097 = vmul.f32 %v2096, 1.442695
        %v2098 = vpow.pop %v2097
        %v2099 = vadd.f32 %v2098, 1.0
        %v2100 = vrcp.pop %v2099
        %v2101 = vmul.f32 1.0, %v2100
        %v2102 = vtanh.pop %v2095
        %v2104 = vrot.slane %v1947, 7
        %v2106 = vmul.f32 %v2101, %v2104
        %2108 = vrot.lane.b32.xlu0 %v2102, 64
        %v2109 = vpop.permute.xlu0 %2108
        %v2111 = vmul.f32 %v2101, %v2109
        %2113 = vrot.lane.b32.xlu0 %v2111, 32
        %v2114 = vpop.permute.xlu0 %2113
        %v2116 = vadd.f32 %v2106, %v2114
        %v2117 = vtanh.pop %v2116
        %2119 = vrot.lane.b32.xlu0 %v2117, 64
        %v2120 = vpop.permute.xlu0 %2119
        %v2122 = vmul.f32 %v2101, %v2120
        %v2124 = vrot.slane %v1946, 7
        %v2126 = vsel %vm881, %v2122, %v2124
        %v2127 = vsel %vm881, %v2122, 0.0
        %2129 = vrot.lane.b32.xlu0 %v2127, 32
        %v2130 = vpop.permute.xlu0 %2129
        %2132 = vst.msk [vmem:[#allocation2] sm:$0x80] %vm888, %v2130
        %v2133 = vpack.c.bf16 %v2036, %v2036
        %v2135 = vshrl.u32 %v2133, 16
        %2137 = vrot.lane.b32.xlu0 %v2135, 32
        %v2138 = vpop.permute.xlu0 %2137
        %v2140 = vsel %vm587, %v2138, 0
        %2142 = vmatprep.subr.bf16.mxu0 0
        %2143 = vmatpush1.bf16.msra.mxu0 %v800
        %2144 = vmatprep.subr.bf16.mxu0 0
        %2145 = vmatpush1.bf16.msra.mxu0 %v801
        %2146 = vmatprep.subr.bf16.mxu0 0
        %2147 = vmatpush1.bf16.msra.mxu0 0
        %2148 = vmatprep.subr.bf16.mxu0 0
        %2149 = vmatpush1.bf16.msra.mxu0 0
        %2150 = vmatprep.subr.bf16.mxu0 0
        %2151 = vmatpush1.bf16.msra.mxu0 0
        %2152 = vmatprep.subr.bf16.mxu0 0
        %2153 = vmatpush1.bf16.msra.mxu0 0
        %2154 = vmatprep.subr.bf16.mxu0 0
        %2155 = vmatpush1.bf16.msra.mxu0 0
        %2156 = vmatprep.subr.bf16.mxu0 0
        %2157 = vmatpush1.bf16.msra.mxu0 0
        %2158 = vmatprep.subr.bf16.mxu0 0
        %2159 = vmatpush1.bf16.msra.mxu0 0
        %2160 = vmatprep.subr.bf16.mxu0 0
        %2161 = vmatpush1.bf16.msra.mxu0 0
        %2162 = vmatprep.subr.bf16.mxu0 0
        %2163 = vmatpush1.bf16.msra.mxu0 0
        %2164 = vmatprep.subr.bf16.mxu0 0
        %2165 = vmatpush1.bf16.msra.mxu0 0
        %2166 = vmatprep.subr.bf16.mxu0 0
        %2167 = vmatpush1.bf16.msra.mxu0 0
        %2168 = vmatprep.subr.bf16.mxu0 0
        %2169 = vmatpush1.bf16.msra.mxu0 0
        %2170 = vmatprep.subr.bf16.mxu0 0
        %2171 = vmatpush1.bf16.msra.mxu0 0
        %2172 = vmatprep.subr.bf16.mxu0 0
        %2173 = vmatpush1.bf16.msra.mxu0 0
        %2174 = vmatprep.mubr.bf16.mxu0 0
        %2175 = vmatmul.mubr.bf16.gmra.mrb[0].mxu0 %v2140
        %v2176 = vpop.f32.mrb[0].mxu0
        %v2177 = vadd.f32 0.0, %v2176
        %v2178 = vpop.f32.mrb[0].mxu0
        %v2179 = vpop.f32.mrb[0].mxu0
        %v2180 = vpop.f32.mrb[0].mxu0
        %2181 = vdwg.mxu0
        %v2182 = vadd.f32 %v689, %v2177
        %v2183 = vxor.u32 %v2182, 2147483648
        %v2184 = vmul.f32 %v2183, 1.442695
        %v2185 = vpow.pop %v2184
        %v2186 = vadd.f32 %v2185, 1.0
        %v2187 = vrcp.pop %v2186
        %v2188 = vmul.f32 1.0, %v2187
        %v2189 = vtanh.pop %v2182
        %v2191 = vrot.slane %v2037, 1
        %v2193 = vmul.f32 %v2188, %v2191
        %2195 = vrot.lane.b32.xlu0 %v2189, 64
        %v2196 = vpop.permute.xlu0 %2195
        %v2198 = vmul.f32 %v2188, %v2196
        %2200 = vrot.lane.b32.xlu0 %v2198, 32
        %v2201 = vpop.permute.xlu0 %2200
        %v2203 = vadd.f32 %v2193, %v2201
        %v2204 = vtanh.pop %v2203
        %2206 = vrot.lane.b32.xlu0 %v2204, 64
        %v2207 = vpop.permute.xlu0 %2206
        %v2209 = vmul.f32 %v2188, %v2207
        %v2211 = vrot.slane %v2036, 1
        %v2213 = vsel %vm783, %v2209, %v2211
        %v2214 = vsel %vm783, %v2209, 0.0
        %2216 = vrot.lane.b32.xlu0 %v2214, 32
        %v2217 = vpop.permute.xlu0 %2216
        %2219 = vst.msk [vmem:[#allocation3] sm:$0x1] %vm790, %v2217
        %v2220 = vld [vmem:[#allocation2] sm:$0xff]
        %v2221 = vld [vmem:[#allocation3] sm:$0xff]
        %2223 = vrot.lane.b32.xlu0 %v2221, 32
        %v2224 = vpop.permute.xlu0 %2223
        %v2226 = vsel %vm587, %v2220, %v2224
        %v2227 = vpack.c.bf16 %v2226, %v2226
        %v2228 = vld [vmem:[%s8] sm:$0xf]
        %v2229 = vld [vmem:[%s8 + $0x4] sm:$0xf]
        %v2230 = vld [vmem:[%s8 + $0x8] sm:$0xf]
        %v2231 = vld [vmem:[%s8 + $0xc] sm:$0xf]
        %v2232 = vld [vmem:[%s8 + $0x10] sm:$0xf]
        %v2233 = vld [vmem:[%s8 + $0x14] sm:$0xf]
        %v2234 = vld [vmem:[%s8 + $0x18] sm:$0xf]
        %v2235 = vld [vmem:[%s8 + $0x1c] sm:$0xf]
        %v2236 = vld [vmem:[%s9] sm:$0x1]
        %v2238 = vlaneseq
        %v2239 = vshrl.u32 %v2238, 7
        %v2240 = vsub.s32 0, %v2239
        %v2241 = vrot.slane %v2236, %v2240
        %v2251 = vunpack.c.l.b16 %v2228
        %v2252 = vunpack.c.l.b16 %v2229
        %v2253 = vunpack.c.l.b16 %v2230
        %v2254 = vunpack.c.l.b16 %v2231
        %v2255 = vunpack.c.l.b16 %v2232
        %v2256 = vunpack.c.l.b16 %v2233
        %v2257 = vunpack.c.l.b16 %v2234
        %v2258 = vunpack.c.l.b16 %v2235
        %v2259 = vpack.c.b16 %v2252, %v2251
        %v2260 = vpack.c.b16 %v2254, %v2253
        %v2261 = vpack.c.b16 %v2256, %v2255
        %v2262 = vpack.c.b16 %v2258, %v2257
        %vm2267 = vcmask 523264
        %v2269 = vsel %vm2267, %v2227, 0
        %2271 = vmatprep.subr.bf16.mxu0 0
        %2272 = vmatpush1.bf16.msra.mxu0 %v2259
        %2273 = vmatprep.subr.bf16.mxu0 0
        %2274 = vmatpush1.bf16.msra.mxu0 %v2260
        %2275 = vmatprep.subr.bf16.mxu0 0
        %2276 = vmatpush1.bf16.msra.mxu0 %v2261
        %2277 = vmatprep.subr.bf16.mxu0 0
        %2278 = vmatpush1.bf16.msra.mxu0 %v2262
        %2279 = vmatprep.subr.bf16.mxu0 0
        %2280 = vmatpush1.bf16.msra.mxu0 0
        %2281 = vmatprep.subr.bf16.mxu0 0
        %2282 = vmatpush1.bf16.msra.mxu0 0
        %2283 = vmatprep.subr.bf16.mxu0 0
        %2284 = vmatpush1.bf16.msra.mxu0 0
        %2285 = vmatprep.subr.bf16.mxu0 0
        %2286 = vmatpush1.bf16.msra.mxu0 0
        %2287 = vmatprep.subr.bf16.mxu0 0
        %2288 = vmatpush1.bf16.msra.mxu0 0
        %2289 = vmatprep.subr.bf16.mxu0 0
        %2290 = vmatpush1.bf16.msra.mxu0 0
        %2291 = vmatprep.subr.bf16.mxu0 0
        %2292 = vmatpush1.bf16.msra.mxu0 0
        %2293 = vmatprep.subr.bf16.mxu0 0
        %2294 = vmatpush1.bf16.msra.mxu0 0
        %2295 = vmatprep.subr.bf16.mxu0 0
        %2296 = vmatpush1.bf16.msra.mxu0 0
        %2297 = vmatprep.subr.bf16.mxu0 0
        %2298 = vmatpush1.bf16.msra.mxu0 0
        %2299 = vmatprep.subr.bf16.mxu0 0
        %2300 = vmatpush1.bf16.msra.mxu0 0
        %2301 = vmatprep.subr.bf16.mxu0 0
        %2302 = vmatpush1.bf16.msra.mxu0 0
        %2303 = vmatprep.mubr.bf16.mxu0 0
        %2304 = vmatmul.mubr.bf16.gmra.mrb[0].mxu0 %v2269
        %v2305 = vpop.f32.mrb[0].mxu0
        %v2306 = vadd.f32 %v2241, %v2305
        %v2307 = vpop.f32.mrb[0].mxu0
        %v2308 = vpop.f32.mrb[0].mxu0
        %v2309 = vpop.f32.mrb[0].mxu0
        %2310 = vdwg.mxu0
        %2311 = vst [vmem:[%s543] sm:$0xff] %v2306
        %2313 = vrot.lane.b32.xlu0 %v2126, 32
        %v2314 = vpop.permute.xlu0 %2313
        %v2317 = vrot.slane %v2213, 1
        %2318 = vrot.lane.b32.xlu0 %v2317, 64
        %v2319 = vpop.permute.xlu0 %2318
        %v2321 = vsel %vm587, %v2314, %v2319
        %v2322 = vpack.c.bf16 %v2321, %v2321
        %v2323 = vld [vmem:[#allocation13] sm:$0xf]
        %v2324 = vld [vmem:[#allocation13 + $0x4] sm:$0xf]
        %v2325 = vld [vmem:[#allocation13 + $0x8] sm:$0xf]
        %v2326 = vld [vmem:[#allocation13 + $0xc] sm:$0xf]
        %v2327 = vld [vmem:[#allocation13 + $0x10] sm:$0xf]
        %v2328 = vld [vmem:[#allocation13 + $0x14] sm:$0xf]
        %v2329 = vld [vmem:[#allocation13 + $0x18] sm:$0xf]
        %v2330 = vld [vmem:[#allocation13 + $0x1c] sm:$0xf]
        %v2331 = vld [vmem:[%s11] sm:$0x1]
        %v2333 = vshrl.u32 %v2322, 16
        %v2335 = vrot.slane %v2333, 3
        %v2344 = vunpack.c.l.b16 %v2323
        %v2345 = vunpack.c.l.b16 %v2324
        %v2346 = vunpack.c.l.b16 %v2325
        %v2347 = vunpack.c.l.b16 %v2326
        %v2348 = vunpack.c.l.b16 %v2327
        %v2349 = vunpack.c.l.b16 %v2328
        %v2350 = vunpack.c.l.b16 %v2329
        %v2351 = vunpack.c.l.b16 %v2330
        %v2352 = vpack.c.b16 %v2345, %v2344
        %v2353 = vpack.c.b16 %v2347, %v2346
        %v2354 = vpack.c.b16 %v2349, %v2348
        %v2355 = vpack.c.b16 %v2351, %v2350
        %v2361 = vsel %vm2267, %v2335, 0
        %2363 = vmatprep.subr.bf16.mxu0 0
        %2364 = vmatpush1.bf16.msra.mxu0 %v2352
        %2365 = vmatprep.subr.bf16.mxu0 0
        %2366 = vmatpush1.bf16.msra.mxu0 %v2353
        %2367 = vmatprep.subr.bf16.mxu0 0
        %2368 = vmatpush1.bf16.msra.mxu0 %v2354
        %2369 = vmatprep.subr.bf16.mxu0 0
        %2370 = vmatpush1.bf16.msra.mxu0 %v2355
        %2371 = vmatprep.subr.bf16.mxu0 0
        %2372 = vmatpush1.bf16.msra.mxu0 0
        %2373 = vmatprep.subr.bf16.mxu0 0
        %2374 = vmatpush1.bf16.msra.mxu0 0
        %2375 = vmatprep.subr.bf16.mxu0 0
        %2376 = vmatpush1.bf16.msra.mxu0 0
        %2377 = vmatprep.subr.bf16.mxu0 0
        %2378 = vmatpush1.bf16.msra.mxu0 0
        %2379 = vmatprep.subr.bf16.mxu0 0
        %2380 = vmatpush1.bf16.msra.mxu0 0
        %2381 = vmatprep.subr.bf16.mxu0 0
        %2382 = vmatpush1.bf16.msra.mxu0 0
        %2383 = vmatprep.subr.bf16.mxu0 0
        %2384 = vmatpush1.bf16.msra.mxu0 0
        %2385 = vmatprep.subr.bf16.mxu0 0
        %2386 = vmatpush1.bf16.msra.mxu0 0
        %2387 = vmatprep.subr.bf16.mxu0 0
        %2388 = vmatpush1.bf16.msra.mxu0 0
        %2389 = vmatprep.subr.bf16.mxu0 0
        %2390 = vmatpush1.bf16.msra.mxu0 0
        %2391 = vmatprep.subr.bf16.mxu0 0
        %2392 = vmatpush1.bf16.msra.mxu0 0
        %2393 = vmatprep.subr.bf16.mxu0 0
        %2394 = vmatpush1.bf16.msra.mxu0 0
        %2395 = vmatprep.mubr.bf16.mxu0 0
        %2396 = vmatmul.mubr.bf16.gmra.mrb[0].mxu0 %v2361
        %v2397 = vpop.f32.mrb[0].mxu0
        %v2398 = vadd.f32 %v2331, %v2397
        %v2399 = vpop.f32.mrb[0].mxu0
        %v2400 = vpop.f32.mrb[0].mxu0
        %v2401 = vpop.f32.mrb[0].mxu0
        %2402 = vdwg.mxu0
        %2403 = vst [vmem:[%s549] sm:$0x1] %v2398
        %s2404 = sand.u32 %s307, 1
        %s2405 = scalar_lea.sflag [#allocation6], %s2404
        %s2406 = sand.u32 %s307, 1
        %s2407 = smul.addr %s2406, 8
        %s2408 = scalar_lea.vmem [#allocation15], %s2407
        %s2409 = sand.u32 %s333, 1
        %s2410 = scalar_lea.sflag [#allocation17], %s2409
        %s2411 = sand.u32 %s333, 1
        %s2412 = scalar_lea.vmem [#allocation16], %s2411
        // Predicated region
        $region93: #{tpu_custom_call.1} parent=67 // pred_check
          %p2413 = pneg %p317
        $region94: #{tpu_custom_call.1} parent=67 // pred_check_branch
          %2415 = sbr.rel (%p2413) target = $region96
        $region95: #{tpu_custom_call.1} parent=67 // pred_region
          %s2417 = ssub.s32 128, 128
          %2418 = vsyncadd %s2405, %s2417
          %s2419 = smul.addr %s37, 128
          %s2420 = scalar_lea.hbm %s12, %s2419
          %s2422 = sshll.u32 %s2408, 4
          %s2423 = int_to_ptr.vmem [resolvable:$true] %s2422
          %2425 = dma.vmem_to_hbm [thread:$0]  %s2423, 128, %s2420, %s2405
        $region96: #{tpu_custom_call.1} parent=67 // pred_fallthru
          _
        // Predicated region
        $region97: #{tpu_custom_call.1} parent=67 // pred_check
          %p2426 = pneg %p343
        $region98: #{tpu_custom_call.1} parent=67 // pred_check_branch
          %2428 = sbr.rel (%p2426) target = $region100
        $region99: #{tpu_custom_call.1} parent=67 // pred_region
          %s2430 = ssub.s32 16, 16
          %2431 = vsyncadd %s2410, %s2430
          %s2432 = smul.addr %s37, 16
          %s2433 = scalar_lea.hbm %s13, %s2432
          %s2435 = sshll.u32 %s2412, 4
          %s2436 = int_to_ptr.vmem [resolvable:$true] %s2435
          %2438 = dma.vmem_to_hbm [thread:$0]  %s2436, 16, %s2433, %s2410
        $region100: #{tpu_custom_call.1} parent=67 // pred_fallthru
          _
      $region68: #{tpu_custom_call.1} parent=5 // pred_fallthru
        _
      %p2439 = scmp.le.s32.totalorder 2, %s32
      // Predicated region
      $region101: #{tpu_custom_call.1} parent=5 // pred_check
        %p2440 = pneg %p2439
      $region102: #{tpu_custom_call.1} parent=5 // pred_check_branch
        %2442 = sbr.rel (%p2440) target = $region104
      $region103: #{tpu_custom_call.1} parent=5 // pred_region
        %s2443 = ssub.s32 %s32, 2
        // Predicated region
        $region105: #{tpu_custom_call.1} parent=103 // pred_check
          %p2444 = pneg %p323
        $region106: #{tpu_custom_call.1} parent=103 // pred_check_branch
          %2446 = sbr.rel (%p2444) target = $region108
        $region107: #{tpu_custom_call.1} parent=103 // pred_region
          %s2447 = sand.u32 %s308, 1
          %s2448 = scalar_lea.sflag [#allocation6], %s2447
          %s2449 = sand.u32 %s308, 1
          %s2450 = smul.addr %s2449, 8
          %s2451 = scalar_lea.vmem [#allocation15], %s2450
          %2452 = dma.done %s2448, 128
        $region108: #{tpu_custom_call.1} parent=103 // pred_fallthru
          _
        // Predicated region
        $region109: #{tpu_custom_call.1} parent=103 // pred_check
          %p2453 = pneg %p349
        $region110: #{tpu_custom_call.1} parent=103 // pred_check_branch
          %2455 = sbr.rel (%p2453) target = $region112
        $region111: #{tpu_custom_call.1} parent=103 // pred_region
          %s2456 = sand.u32 %s334, 1
          %s2457 = scalar_lea.sflag [#allocation17], %s2456
          %s2458 = sand.u32 %s334, 1
          %s2459 = scalar_lea.vmem [#allocation16], %s2458
          %2460 = dma.done %s2457, 16
        $region112: #{tpu_custom_call.1} parent=103 // pred_fallthru
          _
      $region104: #{tpu_custom_call.1} parent=5 // pred_fallthru
        _
    $region6: #{tpu_custom_call.1} parent=1 // loop_footer
      %s36 = sadd.s32 1, %s32
    $region7: #{tpu_custom_call.1} parent=1 // loop_footer_branch
      %31 = sbr.rel target = $region3
    $region8: #{tpu_custom_call.1} parent=1 // loop_exit
      _
    %2461 = vsyncpa [#allocation5], 1
    %s2462 = scalar_lea.sflag [#allocation5], 1
    %2463 = vsyncpa %s2462, 1
    %2464 = vsyncpa [#allocation8], 1
    %2465 = vsyncpa [#allocation11], 1
    %2466 = vsyncpa [#allocation14], 1
    %2467 = vsyncpa [#allocation6], 1
    %s2468 = scalar_lea.sflag [#allocation6], 1
    %2469 = vsyncpa %s2468, 1
    %2470 = vsyncpa [#allocation17], 1
    %s2471 = scalar_lea.sflag [#allocation17], 1
    %2472 = vsyncpa %s2471, 1

</llo_original>
